<compile_context>
chip_gen: v6e
topology: v6e:2x2x1
jax: 0.10.0
libtpu: 0.0.40
codegen_flags: <defaults>
</compile_context>

<pallas_src>
import functools

import jax
import jax.numpy as jnp
from jax.experimental import pallas as pl
from jax.experimental.pallas import tpu as pltpu

EPS = 1e-5          # nn.BatchNorm2d default eps
LEAKY_ALPHA = 0.2   # F.leaky_relu(..., 0.2)


# ----------------------------- helpers ------------------------------------ #
def _round_up(x, m):
    return (x + m - 1) // m * m


def _pick_tile(m, cap=512):
    """Largest row-tile <= cap that divides m (multiples of 8 preferred)."""
    if m <= cap:
        return m
    for t in range(cap, 0, -8):
        if m % t == 0:
            return t
    return m


# --------------------------- Pallas kernels -------------------------------- #
def _conv_acc_kernel(x_ref, w_ref, b_ref, o_ref, *rest, bn, act, alpha):
    """One (m, oh, kh) grid step: accumulate a partial matmul into the f32
    VMEM scratch accumulator; finalize (bias + activation, or raw store +
    BN-stats accumulation) at kh == last."""
    if bn:
        stats_ref, acc_ref = rest
    else:
        (acc_ref,) = rest

    kh = pl.program_id(2)
    k_last = pl.num_programs(2) - 1

    @pl.when(kh == 0)
    def _():
        acc_ref[...] = jnp.zeros_like(acc_ref)

    # (TILE_M, CKp) @ (CKp, OCp) -> f32 accumulate (MXU, bf16 operands)
    acc_ref[...] += jnp.dot(x_ref[...], w_ref[...],
                            preferred_element_type=jnp.float32)

    if bn:
        @pl.when((pl.program_id(0) == 0) & (pl.program_id(1) == 0) & (kh == 0))
        def _():
            stats_ref[...] = jnp.zeros_like(stats_ref)

        @pl.when(kh == k_last)
        def _():
            acc = acc_ref[...]                                 # raw conv (bias skipped: BN cancels it)
            o_ref[...] = acc.astype(o_ref.dtype)
            s = jnp.sum(acc, axis=0, keepdims=True)            # (1, OCp)
            ss = jnp.sum(acc * acc, axis=0, keepdims=True)     # (1, OCp)
            stats_ref[...] += jnp.concatenate([s, ss], axis=0)
    else:
        @pl.when(kh == k_last)
        def _():
            acc = acc_ref[...] + b_ref[...]
            if act == "leaky_relu":
                acc = jnp.where(acc > 0, acc, alpha * acc)
            elif act == "sigmoid":
                acc = 1.0 / (1.0 + jnp.exp(-acc))
            o_ref[...] = acc.astype(o_ref.dtype)


def _bn_act_kernel(y_ref, stats_ref, g_ref, bta_ref, o_ref, *, count, alpha):
    """Apply training-mode BatchNorm (from accumulated sum/sumsq) + leaky relu."""
    inv_n = 1.0 / count
    mean = stats_ref[0:1, :] * inv_n
    var = jnp.maximum(stats_ref[1:2, :] * inv_n - mean * mean, 0.0)
    scale = g_ref[...] * jax.lax.rsqrt(var + EPS)
    shift = bta_ref[...] - mean * scale
    y = y_ref[...] * scale + shift
    o_ref[...] = jnp.where(y > 0, y, alpha * y).astype(o_ref.dtype)


# --------------------------- layer wrapper --------------------------------- #
def conv_block(x_nhwc, w_pt, b, *, stride, padding, act,
               gamma=None, beta=None, out_dtype=jnp.bfloat16):
    """Conv2d (PyTorch weight layout (OC, IC, KH, KW)) [+ BN] [+ activation]."""
    N, H, W, IC = x_nhwc.shape
    OC, IC_w, K, _ = w_pt.shape
    assert IC_w == IC
    OH = (H + 2 * padding - K) // stride + 1
    OW = (W + 2 * padding - K) // stride + 1
    Hp = H + 2 * padding
    bn = gamma is not None

    # --- build kw-unrolled, W-strided LHS:  xkw[h, n*OW+ow, kw*IC+ic]
    #     = x_pad[n, h, stride*ow + kw, ic]   (only K/stride x duplication) ---
    xp = jnp.pad(x_nhwc, ((0, 0), (padding, padding), (padding, padding), (0, 0)))
    cols = [xp[:, :, kw: kw + stride * (OW - 1) + 1: stride, :] for kw in range(K)]
    xkw = jnp.stack(cols, axis=3)                          # (N, Hp, OW, K, IC)
    xkw = jnp.transpose(xkw, (1, 0, 2, 3, 4)).reshape(Hp, N * OW, K * IC)

    CK = K * IC
    CKp = _round_up(CK, 128)                               # lane-aligned contraction
    OCp = _round_up(OC, 128)                               # lane-dense output store
    M = N * OW
    TILE_M = _pick_tile(M, 512)
    num_m = M // TILE_M
    assert M % TILE_M == 0

    xkw = jnp.pad(xkw, ((0, 0), (0, 0), (0, CKp - CK))).astype(jnp.bfloat16)

    # weight (OC, IC, KH, KW) -> (KH, KW*IC, OC), zero-padded, bf16
    wr = jnp.transpose(w_pt, (2, 3, 1, 0)).reshape(K, K * IC, OC)
    wr = jnp.pad(wr, ((0, 0), (0, CKp - CK), (0, OCp - OC))).astype(jnp.bfloat16)
    bp = jnp.pad(b, (0, OCp - OC)).reshape(1, OCp).astype(jnp.float32)

    grid = (num_m, OH, K)
    kernel = functools.partial(_conv_acc_kernel, bn=bn, act=act, alpha=LEAKY_ALPHA)

    in_specs = [
        pl.BlockSpec((None, TILE_M, CKp), lambda m, oh, kh: (stride * oh + kh, m, 0)),
        pl.BlockSpec((None, CKp, OCp), lambda m, oh, kh: (kh, 0, 0)),
        pl.BlockSpec((1, OCp), lambda m, oh, kh: (0, 0)),
    ]
    conv_spec = pl.BlockSpec((None, TILE_M, OCp), lambda m, oh, kh: (oh, m, 0))
    # Raw pre-BN conv output stays f32 (needed at full precision by the BN
    # apply pass); non-BN layer outputs go straight to `out_dtype`.
    conv_dtype = jnp.float32 if bn else out_dtype
    conv_shape = jax.ShapeDtypeStruct((OH, M, OCp), conv_dtype)

    if bn:
        out_shape = (conv_shape, jax.ShapeDtypeStruct((2, OCp), jnp.float32))
        out_specs = (conv_spec, pl.BlockSpec((2, OCp), lambda m, oh, kh: (0, 0)))
        dim_sem = ("arbitrary", "arbitrary", "arbitrary")   # stats resident across grid
    else:
        out_shape = conv_shape
        out_specs = conv_spec
        dim_sem = ("parallel", "parallel", "arbitrary")

    res = pl.pallas_call(
        kernel,
        grid=grid,
        in_specs=in_specs,
        out_specs=out_specs,
        out_shape=out_shape,
        scratch_shapes=[pltpu.VMEM((TILE_M, OCp), jnp.float32)],
        compiler_params=pltpu.CompilerParams(dimension_semantics=dim_sem),
    )(xkw, wr, bp)

    if bn:
        y, stats = res
        gp = jnp.pad(gamma, (0, OCp - OC)).reshape(1, OCp).astype(jnp.float32)
        btp = jnp.pad(beta, (0, OCp - OC)).reshape(1, OCp).astype(jnp.float32)
        y = pl.pallas_call(
            functools.partial(_bn_act_kernel, count=float(OH * M), alpha=LEAKY_ALPHA),
            grid=(OH, num_m),
            in_specs=[
                pl.BlockSpec((None, TILE_M, OCp), lambda oh, m: (oh, m, 0)),
                pl.BlockSpec((2, OCp), lambda oh, m: (0, 0)),
                pl.BlockSpec((1, OCp), lambda oh, m: (0, 0)),
                pl.BlockSpec((1, OCp), lambda oh, m: (0, 0)),
            ],
            out_specs=pl.BlockSpec((None, TILE_M, OCp), lambda oh, m: (oh, m, 0)),
            out_shape=jax.ShapeDtypeStruct((OH, M, OCp), out_dtype),
            compiler_params=pltpu.CompilerParams(
                dimension_semantics=("parallel", "parallel")),
        )(y, stats, gp, btp)
    else:
        y = res

    # (OH, N*OW, OCp) -> (N, OH, OW, OC)
    y = y.reshape(OH, N, OW, OCp)[:, :, :, :OC]
    return jnp.transpose(y, (1, 0, 2, 3))


# ------------------------------ parameters --------------------------------- #
def init_discriminator_params(key, d=32):
    """Weights ~ N(0, 0.02) a la weight_init; small random biases/affines."""
    def normal(k, shape, std=0.02):
        return std * jax.random.normal(k, shape, jnp.float32)

    ks = jax.random.split(key, 14)
    d2 = d // 2
    P = {}
    P["conv1_1_w"] = normal(ks[0], (d2, 1, 4, 4))
    P["conv1_1_b"] = normal(ks[1], (d2,), 0.01)
    P["conv1_2_w"] = normal(ks[2], (d2, 10, 4, 4))
    P["conv1_2_b"] = normal(ks[3], (d2,), 0.01)
    P["conv2_w"] = normal(ks[4], (2 * d, d, 4, 4))
    P["conv2_b"] = normal(ks[5], (2 * d,), 0.01)
    P["conv3_w"] = normal(ks[6], (4 * d, 2 * d, 4, 4))
    P["conv3_b"] = normal(ks[7], (4 * d,), 0.01)
    P["conv4_w"] = normal(ks[8], (1, 4 * d, 4, 4))
    P["conv4_b"] = normal(ks[9], (1,), 0.01)
    P["bn2_g"] = 1.0 + normal(ks[10], (2 * d,), 0.1)
    P["bn2_b"] = normal(ks[11], (2 * d,), 0.1)
    P["bn3_g"] = 1.0 + normal(ks[12], (4 * d,), 0.1)
    P["bn3_b"] = normal(ks[13], (4 * d,), 0.1)
    return P


def _fuse_conv1(w1, b1, w2, b2):
    """Block-diagonal weight so one conv == cat([conv1_1(x), conv1_2(y)], C)."""
    d2, c1 = w1.shape[0], w1.shape[1]
    c2 = w2.shape[1]
    top = jnp.concatenate([w1, jnp.zeros((d2, c2, 4, 4), w1.dtype)], axis=1)
    bot = jnp.concatenate([jnp.zeros((d2, c1, 4, 4), w2.dtype), w2], axis=1)
    return jnp.concatenate([top, bot], axis=0), jnp.concatenate([b1, b2], axis=0)


# ------------------------------ forward pass -------------------------------- #
def discriminator_forward(P, input_nchw, label_nchw):
    x = jnp.transpose(input_nchw, (0, 2, 3, 1)).astype(jnp.float32)   # NHWC
    y = jnp.transpose(label_nchw, (0, 2, 3, 1)).astype(jnp.float32)
    xy = jnp.concatenate([x, y], axis=-1)                             # (N, 32, 32, 11)

    # fused conv1_1 + conv1_2 + leaky_relu (replaces two convs + torch.cat)
    w1, b1 = _fuse_conv1(P["conv1_1_w"], P["conv1_1_b"],
                         P["conv1_2_w"], P["conv1_2_b"])
    h = conv_block(xy, w1, b1, stride=2, padding=1, act="leaky_relu")

    h = conv_block(h, P["conv2_w"], P["conv2_b"], stride=2, padding=1,
                   act="leaky_relu", gamma=P["bn2_g"], beta=P["bn2_b"])
    h = conv_block(h, P["conv3_w"], P["conv3_b"], stride=2, padding=1,
                   act="leaky_relu", gamma=P["bn3_g"], beta=P["bn3_b"])
    h = conv_block(h, P["conv4_w"], P["conv4_b"], stride=1, padding=0,
                   act="sigmoid", out_dtype=jnp.float32)
    return jnp.transpose(h, (0, 3, 1, 2))                             # NCHW (N,1,1,1)


# ------------------------- pure-JAX reference check ------------------------- #
def _ref_conv(x, w, b, stride, padding):
    y = jax.lax.conv_general_dilated(
        x, w, window_strides=(stride, stride),
        padding=[(padding, padding)] * 2,
        dimension_numbers=("NCHW", "OIHW", "NCHW"),
        precision=jax.lax.Precision.HIGHEST)
    return y + b.reshape(1, -1, 1, 1)


def _ref_bn(x, g, bta):
    mean = jnp.mean(x, axis=(0, 2, 3), keepdims=True)
    var = jnp.mean(jnp.square(x - mean), axis=(0, 2, 3), keepdims=True)
    return (x - mean) * jax.lax.rsqrt(var + EPS) * g.reshape(1, -1, 1, 1) \
        + bta.reshape(1, -1, 1, 1)


def _lrelu(x):
    return jnp.where(x > 0, x, LEAKY_ALPHA * x)


def _ref_forward(P, inp, lab):
    x = _lrelu(_ref_conv(inp, P["conv1_1_w"], P["conv1_1_b"], 2, 1))
    y = _lrelu(_ref_conv(lab, P["conv1_2_w"], P["conv1_2_b"], 2, 1))
    x = jnp.concatenate([x, y], axis=1)
    x = _lrelu(_ref_bn(_ref_conv(x, P["conv2_w"], P["conv2_b"], 2, 1),
                       P["bn2_g"], P["bn2_b"]))
    x = _lrelu(_ref_bn(_ref_conv(x, P["conv3_w"], P["conv3_b"], 2, 1),
                       P["bn3_g"], P["bn3_b"]))
    return jax.nn.sigmoid(_ref_conv(x, P["conv4_w"], P["conv4_b"], 1, 0))


# ---------------------------------- main ------------------------------------ #
if __name__ == "__main__":
    key = jax.random.PRNGKey(0)
    k_p, k_in, k_lab = jax.random.split(key, 3)

    d = 32          # small d (module default is 128) to keep the test tiny
    N = 2
    inp = jax.random.normal(k_in, (N, 1, 32, 32), jnp.float32)    # image
    lab = jax.random.normal(k_lab, (N, 10, 32, 32), jnp.float32)  # condition maps

    params = init_discriminator_params(k_p, d=d)

    out = jax.jit(discriminator_forward)(params, inp, lab)
    out = jax.block_until_ready(out)
    assert out.shape == (N, 1, 1, 1), out.shape

    ref = jax.block_until_ready(_ref_forward(params, inp, lab))
    max_diff = float(jnp.max(jnp.abs(out - ref)))
    assert max_diff < 2e-2, f"mismatch vs reference: max|diff|={max_diff}"

    print("KERNEL_OK")
</pallas_src>

<mosaic_0001>
module attributes {stable_mosaic.version = 11 : i64} {
  func.func @_conv_acc_kernel(%arg0: i32, %arg1: i32, %arg2: i32, %arg3: memref<1x32x128xbf16, #tpu.memory_space<vmem>>, %arg4: memref<1x128x128xbf16, #tpu.memory_space<vmem>>, %arg5: memref<1x128xf32, #tpu.memory_space<vmem>>, %arg6: memref<1x32x128xbf16, #tpu.memory_space<vmem>>, %arg7: memref<32x128xf32, #tpu.memory_space<vmem>>) attributes {dimension_semantics = [#tpu.dimension_semantics<parallel>, #tpu.dimension_semantics<parallel>, #tpu.dimension_semantics<arbitrary>], iteration_bounds = array<i64: 1, 16, 4>, scalar_prefetch = 0 : i64, scratch_operands = 1 : i64, tpu.core_type = #tpu.core_type<tc>, window_params = [{transform_indices = @transform_0, window_bounds = array<i64: 1, 32, 128>}, {transform_indices = @transform_1, window_bounds = array<i64: 1, 128, 128>}, {pipeline_mode = #tpu.pipeline_mode<synchronous>, transform_indices = @transform_2, window_bounds = array<i64: 1, 128>}, {transform_indices = @transform_3, window_bounds = array<i64: 1, 32, 128>}]} {
    %c0_i32 = arith.constant 0 : i32
    %0 = arith.cmpi eq, %arg2, %c0_i32 : i32
    %1 = arith.extui %0 : i1 to i32
    %c0_i32_0 = arith.constant 0 : i32
    %2 = arith.cmpi ne, %1, %c0_i32_0 : i32
    scf.if %2 {
      %cst_11 = arith.constant 0.000000e+00 : f32
      %14 = vector.broadcast %cst_11 : f32 to vector<32x128xf32>
      %c0_12 = arith.constant 0 : index
      %c0_13 = arith.constant 0 : index
      %15 = vector.load %arg7[%c0_12, %c0_13] : memref<32x128xf32, #tpu.memory_space<vmem>>, vector<32x128xf32>
      tpu.vector_store %arg7[%c0_12, %c0_13], %14 {strides = array<i32>} : memref<32x128xf32, #tpu.memory_space<vmem>>, vector<32x128xf32>,
    } else {
    }
    %c0 = arith.constant 0 : index
    %c0_1 = arith.constant 0 : index
    %3 = vector.load %arg7[%c0, %c0_1] : memref<32x128xf32, #tpu.memory_space<vmem>>, vector<32x128xf32>
    %c0_2 = arith.constant 0 : index
    %c0_3 = arith.constant 0 : index
    %c0_4 = arith.constant 0 : index
    %4 = vector.load %arg3[%c0_2, %c0_3, %c0_4] : memref<1x32x128xbf16, #tpu.memory_space<vmem>>, vector<1x32x128xbf16>
    %5 = vector.shape_cast %4 : vector<1x32x128xbf16> to vector<32x128xbf16>
    %c0_5 = arith.constant 0 : index
    %c0_6 = arith.constant 0 : index
    %c0_7 = arith.constant 0 : index
    %6 = vector.load %arg4[%c0_5, %c0_6, %c0_7] : memref<1x128x128xbf16, #tpu.memory_space<vmem>>, vector<1x128x128xbf16>
    %7 = vector.shape_cast %6 : vector<1x128x128xbf16> to vector<128x128xbf16>
    %cst = arith.constant dense<0.000000e+00> : vector<32x128xf32>
    %8 = tpu.matmul %5, %7, %cst {dimension_numbers = #tpu.dot_dimension_numbers<[1], [0], [0], [1], [0, 0, 1, 1], [], []>} : vector<32x128xbf16>, vector<128x128xbf16>, vector<32x128xf32> -> vector<32x128xf32>
    %9 = arith.addf %3, %8 : vector<32x128xf32>
    %c0_8 = arith.constant 0 : index
    %c0_9 = arith.constant 0 : index
    %10 = vector.load %arg7[%c0_8, %c0_9] : memref<32x128xf32, #tpu.memory_space<vmem>>, vector<32x128xf32>
    tpu.vector_store %arg7[%c0_8, %c0_9], %9 {strides = array<i32>} : memref<32x128xf32, #tpu.memory_space<vmem>>, vector<32x128xf32>,
    %c3_i32 = arith.constant 3 : i32
    %11 = arith.cmpi eq, %arg2, %c3_i32 : i32
    %12 = arith.extui %11 : i1 to i32
    %c0_i32_10 = arith.constant 0 : i32
    %13 = arith.cmpi ne, %12, %c0_i32_10 : i32
    scf.if %13 {
      %c0_11 = arith.constant 0 : index
      %c0_12 = arith.constant 0 : index
      %14 = vector.load %arg7[%c0_11, %c0_12] : memref<32x128xf32, #tpu.memory_space<vmem>>, vector<32x128xf32>
      %c0_13 = arith.constant 0 : index
      %c0_14 = arith.constant 0 : index
      %15 = vector.load %arg5[%c0_13, %c0_14] : memref<1x128xf32, #tpu.memory_space<vmem>>, vector<1x128xf32>
      %16 = vector.broadcast %15 : vector<1x128xf32> to vector<32x128xf32>
      %17 = arith.addf %14, %16 : vector<32x128xf32>
      %cst_15 = arith.constant 0.000000e+00 : f32
      %18 = vector.broadcast %cst_15 : f32 to vector<32x128xf32>
      %19 = arith.cmpf ogt, %17, %18 : vector<32x128xf32>
      %cst_16 = arith.constant 2.000000e-01 : f32
      %20 = vector.broadcast %cst_16 : f32 to vector<32x128xf32>
      %21 = arith.mulf %20, %17 : vector<32x128xf32>
      %22 = arith.select %19, %17, %21 : vector<32x128xi1>, vector<32x128xf32>
      %23 = arith.truncf %22 : vector<32x128xf32> to vector<32x128xbf16>
      %c0_17 = arith.constant 0 : index
      %c0_18 = arith.constant 0 : index
      %c0_19 = arith.constant 0 : index
      %24 = vector.load %arg6[%c0_17, %c0_18, %c0_19] : memref<1x32x128xbf16, #tpu.memory_space<vmem>>, vector<1x32x128xbf16>
      %25 = vector.shape_cast %24 : vector<1x32x128xbf16> to vector<32x128xbf16>
      %26 = vector.shape_cast %23 : vector<32x128xbf16> to vector<1x32x128xbf16>
      tpu.vector_store %arg6[%c0_17, %c0_18, %c0_19], %26 {strides = array<i32>} : memref<1x32x128xbf16, #tpu.memory_space<vmem>>, vector<1x32x128xbf16>,
    } else {
    }
    return
  }
  func.func @transform_0(%arg0: i32, %arg1: i32, %arg2: i32) -> (i32, i32, i32) {
    %c2_i32 = arith.constant 2 : i32
    %0 = arith.muli %c2_i32, %arg1 : i32
    %1 = arith.addi %0, %arg2 : i32
    %c0_i32 = arith.constant 0 : i32
    %c0_i32_0 = arith.constant 0 : i32
    return %1, %arg0, %c0_i32 : i32, i32, i32
  }
  func.func @transform_1(%arg0: i32, %arg1: i32, %arg2: i32) -> (i32, i32, i32) {
    %c0_i32 = arith.constant 0 : i32
    %c0_i32_0 = arith.constant 0 : i32
    %c0_i32_1 = arith.constant 0 : i32
    return %arg2, %c0_i32, %c0_i32_0 : i32, i32, i32
  }
  func.func @transform_2(%arg0: i32, %arg1: i32, %arg2: i32) -> (i32, i32) {
    %c0_i32 = arith.constant 0 : i32
    %c0_i32_0 = arith.constant 0 : i32
    %c0_i32_1 = arith.constant 0 : i32
    return %c0_i32, %c0_i32_0 : i32, i32
  }
  func.func @transform_3(%arg0: i32, %arg1: i32, %arg2: i32) -> (i32, i32, i32) {
    %c0_i32 = arith.constant 0 : i32
    %c0_i32_0 = arith.constant 0 : i32
    return %arg1, %arg0, %c0_i32 : i32, i32, i32
  }
}

module attributes {stable_mosaic.version = 11 : i64} {
  func.func @_conv_acc_kernel(%arg0: i32, %arg1: i32, %arg2: i32, %arg3: memref<1x16x128xbf16, #tpu.memory_space<vmem>>, %arg4: memref<1x128x128xbf16, #tpu.memory_space<vmem>>, %arg5: memref<1x128xf32, #tpu.memory_space<vmem>>, %arg6: memref<1x16x128xf32, #tpu.memory_space<vmem>>, %arg7: memref<2x128xf32, #tpu.memory_space<vmem>>, %arg8: memref<16x128xf32, #tpu.memory_space<vmem>>) attributes {dimension_semantics = [#tpu.dimension_semantics<arbitrary>, #tpu.dimension_semantics<arbitrary>, #tpu.dimension_semantics<arbitrary>], iteration_bounds = array<i64: 1, 8, 4>, scalar_prefetch = 0 : i64, scratch_operands = 1 : i64, tpu.core_type = #tpu.core_type<tc>, window_params = [{transform_indices = @transform_0, window_bounds = array<i64: 1, 16, 128>}, {transform_indices = @transform_1, window_bounds = array<i64: 1, 128, 128>}, {pipeline_mode = #tpu.pipeline_mode<synchronous>, transform_indices = @transform_2, window_bounds = array<i64: 1, 128>}, {transform_indices = @transform_3, window_bounds = array<i64: 1, 16, 128>}, {pipeline_mode = #tpu.pipeline_mode<synchronous>, transform_indices = @transform_4, window_bounds = array<i64: 2, 128>}]} {
    %c0_i32 = arith.constant 0 : i32
    %0 = arith.cmpi eq, %arg2, %c0_i32 : i32
    %1 = arith.extui %0 : i1 to i32
    %c0_i32_0 = arith.constant 0 : i32
    %2 = arith.cmpi ne, %1, %c0_i32_0 : i32
    scf.if %2 {
      %cst_15 = arith.constant 0.000000e+00 : f32
      %21 = vector.broadcast %cst_15 : f32 to vector<16x128xf32>
      %c0_16 = arith.constant 0 : index
      %c0_17 = arith.constant 0 : index
      %22 = vector.load %arg8[%c0_16, %c0_17] : memref<16x128xf32, #tpu.memory_space<vmem>>, vector<16x128xf32>
      tpu.vector_store %arg8[%c0_16, %c0_17], %21 {strides = array<i32>} : memref<16x128xf32, #tpu.memory_space<vmem>>, vector<16x128xf32>,
    } else {
    }
    %c0 = arith.constant 0 : index
    %c0_1 = arith.constant 0 : index
    %3 = vector.load %arg8[%c0, %c0_1] : memref<16x128xf32, #tpu.memory_space<vmem>>, vector<16x128xf32>
    %c0_2 = arith.constant 0 : index
    %c0_3 = arith.constant 0 : index
    %c0_4 = arith.constant 0 : index
    %4 = vector.load %arg3[%c0_2, %c0_3, %c0_4] : memref<1x16x128xbf16, #tpu.memory_space<vmem>>, vector<1x16x128xbf16>
    %5 = vector.shape_cast %4 : vector<1x16x128xbf16> to vector<16x128xbf16>
    %c0_5 = arith.constant 0 : index
    %c0_6 = arith.constant 0 : index
    %c0_7 = arith.constant 0 : index
    %6 = vector.load %arg4[%c0_5, %c0_6, %c0_7] : memref<1x128x128xbf16, #tpu.memory_space<vmem>>, vector<1x128x128xbf16>
    %7 = vector.shape_cast %6 : vector<1x128x128xbf16> to vector<128x128xbf16>
    %cst = arith.constant dense<0.000000e+00> : vector<16x128xf32>
    %8 = tpu.matmul %5, %7, %cst {dimension_numbers = #tpu.dot_dimension_numbers<[1], [0], [0], [1], [0, 0, 1, 1], [], []>} : vector<16x128xbf16>, vector<128x128xbf16>, vector<16x128xf32> -> vector<16x128xf32>
    %9 = arith.addf %3, %8 : vector<16x128xf32>
    %c0_8 = arith.constant 0 : index
    %c0_9 = arith.constant 0 : index
    %10 = vector.load %arg8[%c0_8, %c0_9] : memref<16x128xf32, #tpu.memory_space<vmem>>, vector<16x128xf32>
    tpu.vector_store %arg8[%c0_8, %c0_9], %9 {strides = array<i32>} : memref<16x128xf32, #tpu.memory_space<vmem>>, vector<16x128xf32>,
    %c0_i32_10 = arith.constant 0 : i32
    %11 = arith.cmpi eq, %arg0, %c0_i32_10 : i32
    %c0_i32_11 = arith.constant 0 : i32
    %12 = arith.cmpi eq, %arg1, %c0_i32_11 : i32
    %13 = arith.andi %11, %12 : i1
    %c0_i32_12 = arith.constant 0 : i32
    %14 = arith.cmpi eq, %arg2, %c0_i32_12 : i32
    %15 = arith.andi %13, %14 : i1
    %16 = arith.extui %15 : i1 to i32
    %c0_i32_13 = arith.constant 0 : i32
    %17 = arith.cmpi ne, %16, %c0_i32_13 : i32
    scf.if %17 {
      %cst_15 = arith.constant 0.000000e+00 : f32
      %21 = vector.broadcast %cst_15 : f32 to vector<2x128xf32>
      %c0_16 = arith.constant 0 : index
      %c0_17 = arith.constant 0 : index
      %22 = vector.load %arg7[%c0_16, %c0_17] : memref<2x128xf32, #tpu.memory_space<vmem>>, vector<2x128xf32>
      tpu.vector_store %arg7[%c0_16, %c0_17], %21 {strides = array<i32>} : memref<2x128xf32, #tpu.memory_space<vmem>>, vector<2x128xf32>,
    } else {
    }
    %c3_i32 = arith.constant 3 : i32
    %18 = arith.cmpi eq, %arg2, %c3_i32 : i32
    %19 = arith.extui %18 : i1 to i32
    %c0_i32_14 = arith.constant 0 : i32
    %20 = arith.cmpi ne, %19, %c0_i32_14 : i32
    scf.if %20 {
      %c0_15 = arith.constant 0 : index
      %c0_16 = arith.constant 0 : index
      %21 = vector.load %arg8[%c0_15, %c0_16] : memref<16x128xf32, #tpu.memory_space<vmem>>, vector<16x128xf32>
      %c0_17 = arith.constant 0 : index
      %c0_18 = arith.constant 0 : index
      %c0_19 = arith.constant 0 : index
      %22 = vector.load %arg6[%c0_17, %c0_18, %c0_19] : memref<1x16x128xf32, #tpu.memory_space<vmem>>, vector<1x16x128xf32>
      %23 = vector.shape_cast %22 : vector<1x16x128xf32> to vector<16x128xf32>
      %24 = vector.shape_cast %21 : vector<16x128xf32> to vector<1x16x128xf32>
      tpu.vector_store %arg6[%c0_17, %c0_18, %c0_19], %24 {strides = array<i32>} : memref<1x16x128xf32, #tpu.memory_space<vmem>>, vector<1x16x128xf32>,
      %cst_20 = arith.constant dense<0.000000e+00> : vector<128xf32>
      %25 = vector.multi_reduction <add>, %21, %cst_20 [0] : vector<16x128xf32> to vector<128xf32>
      %26 = vector.shape_cast %25 : vector<128xf32> to vector<1x128xf32>
      %27 = arith.mulf %21, %21 : vector<16x128xf32>
      %cst_21 = arith.constant dense<0.000000e+00> : vector<128xf32>
      %28 = vector.multi_reduction <add>, %27, %cst_21 [0] : vector<16x128xf32> to vector<128xf32>
      %29 = vector.shape_cast %28 : vector<128xf32> to vector<1x128xf32>
      %c0_22 = arith.constant 0 : index
      %c0_23 = arith.constant 0 : index
      %30 = vector.load %arg7[%c0_22, %c0_23] : memref<2x128xf32, #tpu.memory_space<vmem>>, vector<2x128xf32>
      %31 = tpu.concatenate %26, %29 in 0 : vector<1x128xf32>, vector<1x128xf32> -> vector<2x128xf32>
      %32 = arith.addf %30, %31 : vector<2x128xf32>
      %c0_24 = arith.constant 0 : index
      %c0_25 = arith.constant 0 : index
      %33 = vector.load %arg7[%c0_24, %c0_25] : memref<2x128xf32, #tpu.memory_space<vmem>>, vector<2x128xf32>
      tpu.vector_store %arg7[%c0_24, %c0_25], %32 {strides = array<i32>} : memref<2x128xf32, #tpu.memory_space<vmem>>, vector<2x128xf32>,
    } else {
    }
    return
  }
  func.func @transform_0(%arg0: i32, %arg1: i32, %arg2: i32) -> (i32, i32, i32) {
    %c2_i32 = arith.constant 2 : i32
    %0 = arith.muli %c2_i32, %arg1 : i32
    %1 = arith.addi %0, %arg2 : i32
    %c0_i32 = arith.constant 0 : i32
    %c0_i32_0 = arith.constant 0 : i32
    return %1, %arg0, %c0_i32 : i32, i32, i32
  }
  func.func @transform_1(%arg0: i32, %arg1: i32, %arg2: i32) -> (i32, i32, i32) {
    %c0_i32 = arith.constant 0 : i32
    %c0_i32_0 = arith.constant 0 : i32
    %c0_i32_1 = arith.constant 0 : i32
    return %arg2, %c0_i32, %c0_i32_0 : i32, i32, i32
  }
  func.func @transform_2(%arg0: i32, %arg1: i32, %arg2: i32) -> (i32, i32) {
    %c0_i32 = arith.constant 0 : i32
    %c0_i32_0 = arith.constant 0 : i32
    %c0_i32_1 = arith.constant 0 : i32
    return %c0_i32, %c0_i32_0 : i32, i32
  }
  func.func @transform_3(%arg0: i32, %arg1: i32, %arg2: i32) -> (i32, i32, i32) {
    %c0_i32 = arith.constant 0 : i32
    %c0_i32_0 = arith.constant 0 : i32
    return %arg1, %arg0, %c0_i32 : i32, i32, i32
  }
  func.func @transform_4(%arg0: i32, %arg1: i32, %arg2: i32) -> (i32, i32) {
    %c0_i32 = arith.constant 0 : i32
    %c0_i32_0 = arith.constant 0 : i32
    %c0_i32_1 = arith.constant 0 : i32
    return %c0_i32, %c0_i32_0 : i32, i32
  }
}

module attributes {stable_mosaic.version = 11 : i64} {
  func.func @_bn_act_kernel(%arg0: i32, %arg1: i32, %arg2: memref<1x16x128xf32, #tpu.memory_space<vmem>>, %arg3: memref<2x128xf32, #tpu.memory_space<vmem>>, %arg4: memref<1x128xf32, #tpu.memory_space<vmem>>, %arg5: memref<1x128xf32, #tpu.memory_space<vmem>>, %arg6: memref<1x16x128xbf16, #tpu.memory_space<vmem>>) attributes {dimension_semantics = [#tpu.dimension_semantics<parallel>, #tpu.dimension_semantics<parallel>], iteration_bounds = array<i64: 8, 1>, scalar_prefetch = 0 : i64, scratch_operands = 0 : i64, tpu.core_type = #tpu.core_type<tc>, window_params = [{transform_indices = @transform_0, window_bounds = array<i64: 1, 16, 128>}, {pipeline_mode = #tpu.pipeline_mode<synchronous>, transform_indices = @transform_1, window_bounds = array<i64: 2, 128>}, {pipeline_mode = #tpu.pipeline_mode<synchronous>, transform_indices = @transform_2, window_bounds = array<i64: 1, 128>}, {pipeline_mode = #tpu.pipeline_mode<synchronous>, transform_indices = @transform_3, window_bounds = array<i64: 1, 128>}, {transform_indices = @transform_4, window_bounds = array<i64: 1, 16, 128>}]} {
    %c0 = arith.constant 0 : index
    %c0_0 = arith.constant 0 : index
    %0 = vector.load %arg3[%c0, %c0_0] : memref<2x128xf32, #tpu.memory_space<vmem>>, vector<1x128xf32>
    %cst = arith.constant 7.812500e-03 : f32
    %1 = vector.broadcast %cst : f32 to vector<1x128xf32>
    %2 = arith.mulf %0, %1 : vector<1x128xf32>
    %c1 = arith.constant 1 : index
    %c0_1 = arith.constant 0 : index
    %3 = vector.load %arg3[%c1, %c0_1] : memref<2x128xf32, #tpu.memory_space<vmem>>, vector<1x128xf32>
    %cst_2 = arith.constant 7.812500e-03 : f32
    %4 = vector.broadcast %cst_2 : f32 to vector<1x128xf32>
    %5 = arith.mulf %3, %4 : vector<1x128xf32>
    %6 = arith.mulf %2, %2 : vector<1x128xf32>
    %7 = arith.subf %5, %6 : vector<1x128xf32>
    %cst_3 = arith.constant 0.000000e+00 : f32
    %8 = vector.broadcast %cst_3 : f32 to vector<1x128xf32>
    %9 = arith.maximumf %7, %8 : vector<1x128xf32>
    %c0_4 = arith.constant 0 : index
    %c0_5 = arith.constant 0 : index
    %10 = vector.load %arg4[%c0_4, %c0_5] : memref<1x128xf32, #tpu.memory_space<vmem>>, vector<1x128xf32>
    %cst_6 = arith.constant 9.99999974E-6 : f32
    %11 = vector.broadcast %cst_6 : f32 to vector<1x128xf32>
    %12 = arith.addf %9, %11 : vector<1x128xf32>
    %13 = math.rsqrt %12 : vector<1x128xf32>
    %14 = arith.mulf %10, %13 : vector<1x128xf32>
    %c0_7 = arith.constant 0 : index
    %c0_8 = arith.constant 0 : index
    %15 = vector.load %arg5[%c0_7, %c0_8] : memref<1x128xf32, #tpu.memory_space<vmem>>, vector<1x128xf32>
    %16 = arith.mulf %2, %14 : vector<1x128xf32>
    %17 = arith.subf %15, %16 : vector<1x128xf32>
    %c0_9 = arith.constant 0 : index
    %c0_10 = arith.constant 0 : index
    %c0_11 = arith.constant 0 : index
    %18 = vector.load %arg2[%c0_9, %c0_10, %c0_11] : memref<1x16x128xf32, #tpu.memory_space<vmem>>, vector<1x16x128xf32>
    %19 = vector.shape_cast %18 : vector<1x16x128xf32> to vector<16x128xf32>
    %20 = vector.broadcast %14 : vector<1x128xf32> to vector<16x128xf32>
    %21 = arith.mulf %19, %20 : vector<16x128xf32>
    %22 = vector.broadcast %17 : vector<1x128xf32> to vector<16x128xf32>
    %23 = arith.addf %21, %22 : vector<16x128xf32>
    %cst_12 = arith.constant 0.000000e+00 : f32
    %24 = vector.broadcast %cst_12 : f32 to vector<16x128xf32>
    %25 = arith.cmpf ogt, %23, %24 : vector<16x128xf32>
    %cst_13 = arith.constant 2.000000e-01 : f32
    %26 = vector.broadcast %cst_13 : f32 to vector<16x128xf32>
    %27 = arith.mulf %26, %23 : vector<16x128xf32>
    %28 = arith.select %25, %23, %27 : vector<16x128xi1>, vector<16x128xf32>
    %29 = arith.truncf %28 : vector<16x128xf32> to vector<16x128xbf16>
    %c0_14 = arith.constant 0 : index
    %c0_15 = arith.constant 0 : index
    %c0_16 = arith.constant 0 : index
    %30 = vector.load %arg6[%c0_14, %c0_15, %c0_16] : memref<1x16x128xbf16, #tpu.memory_space<vmem>>, vector<1x16x128xbf16>
    %31 = vector.shape_cast %30 : vector<1x16x128xbf16> to vector<16x128xbf16>
    %32 = vector.shape_cast %29 : vector<16x128xbf16> to vector<1x16x128xbf16>
    tpu.vector_store %arg6[%c0_14, %c0_15, %c0_16], %32 {strides = array<i32>} : memref<1x16x128xbf16, #tpu.memory_space<vmem>>, vector<1x16x128xbf16>,
    return
  }
  func.func @transform_0(%arg0: i32, %arg1: i32) -> (i32, i32, i32) {
    %c0_i32 = arith.constant 0 : i32
    %c0_i32_0 = arith.constant 0 : i32
    return %arg0, %arg1, %c0_i32 : i32, i32, i32
  }
  func.func @transform_1(%arg0: i32, %arg1: i32) -> (i32, i32) {
    %c0_i32 = arith.constant 0 : i32
    %c0_i32_0 = arith.constant 0 : i32
    %c0_i32_1 = arith.constant 0 : i32
    return %c0_i32, %c0_i32_0 : i32, i32
  }
  func.func @transform_2(%arg0: i32, %arg1: i32) -> (i32, i32) {
    %c0_i32 = arith.constant 0 : i32
    %c0_i32_0 = arith.constant 0 : i32
    %c0_i32_1 = arith.constant 0 : i32
    return %c0_i32, %c0_i32_0 : i32, i32
  }
  func.func @transform_3(%arg0: i32, %arg1: i32) -> (i32, i32) {
    %c0_i32 = arith.constant 0 : i32
    %c0_i32_0 = arith.constant 0 : i32
    %c0_i32_1 = arith.constant 0 : i32
    return %c0_i32, %c0_i32_0 : i32, i32
  }
  func.func @transform_4(%arg0: i32, %arg1: i32) -> (i32, i32, i32) {
    %c0_i32 = arith.constant 0 : i32
    %c0_i32_0 = arith.constant 0 : i32
    return %arg0, %arg1, %c0_i32 : i32, i32, i32
  }
}

module attributes {stable_mosaic.version = 11 : i64} {
  func.func @_conv_acc_kernel(%arg0: i32, %arg1: i32, %arg2: i32, %arg3: memref<1x8x256xbf16, #tpu.memory_space<vmem>>, %arg4: memref<1x256x128xbf16, #tpu.memory_space<vmem>>, %arg5: memref<1x128xf32, #tpu.memory_space<vmem>>, %arg6: memref<1x8x128xf32, #tpu.memory_space<vmem>>, %arg7: memref<2x128xf32, #tpu.memory_space<vmem>>, %arg8: memref<8x128xf32, #tpu.memory_space<vmem>>) attributes {dimension_semantics = [#tpu.dimension_semantics<arbitrary>, #tpu.dimension_semantics<arbitrary>, #tpu.dimension_semantics<arbitrary>], iteration_bounds = array<i64: 1, 4, 4>, scalar_prefetch = 0 : i64, scratch_operands = 1 : i64, tpu.core_type = #tpu.core_type<tc>, window_params = [{transform_indices = @transform_0, window_bounds = array<i64: 1, 8, 256>}, {transform_indices = @transform_1, window_bounds = array<i64: 1, 256, 128>}, {pipeline_mode = #tpu.pipeline_mode<synchronous>, transform_indices = @transform_2, window_bounds = array<i64: 1, 128>}, {transform_indices = @transform_3, window_bounds = array<i64: 1, 8, 128>}, {pipeline_mode = #tpu.pipeline_mode<synchronous>, transform_indices = @transform_4, window_bounds = array<i64: 2, 128>}]} {
    %c0_i32 = arith.constant 0 : i32
    %0 = arith.cmpi eq, %arg2, %c0_i32 : i32
    %1 = arith.extui %0 : i1 to i32
    %c0_i32_0 = arith.constant 0 : i32
    %2 = arith.cmpi ne, %1, %c0_i32_0 : i32
    scf.if %2 {
      %cst_15 = arith.constant 0.000000e+00 : f32
      %21 = vector.broadcast %cst_15 : f32 to vector<8x128xf32>
      %c0_16 = arith.constant 0 : index
      %c0_17 = arith.constant 0 : index
      %22 = vector.load %arg8[%c0_16, %c0_17] : memref<8x128xf32, #tpu.memory_space<vmem>>, vector<8x128xf32>
      tpu.vector_store %arg8[%c0_16, %c0_17], %21 {strides = array<i32>} : memref<8x128xf32, #tpu.memory_space<vmem>>, vector<8x128xf32>,
    } else {
    }
    %c0 = arith.constant 0 : index
    %c0_1 = arith.constant 0 : index
    %3 = vector.load %arg8[%c0, %c0_1] : memref<8x128xf32, #tpu.memory_space<vmem>>, vector<8x128xf32>
    %c0_2 = arith.constant 0 : index
    %c0_3 = arith.constant 0 : index
    %c0_4 = arith.constant 0 : index
    %4 = vector.load %arg3[%c0_2, %c0_3, %c0_4] : memref<1x8x256xbf16, #tpu.memory_space<vmem>>, vector<1x8x256xbf16>
    %5 = vector.shape_cast %4 : vector<1x8x256xbf16> to vector<8x256xbf16>
    %c0_5 = arith.constant 0 : index
    %c0_6 = arith.constant 0 : index
    %c0_7 = arith.constant 0 : index
    %6 = vector.load %arg4[%c0_5, %c0_6, %c0_7] : memref<1x256x128xbf16, #tpu.memory_space<vmem>>, vector<1x256x128xbf16>
    %7 = vector.shape_cast %6 : vector<1x256x128xbf16> to vector<256x128xbf16>
    %cst = arith.constant dense<0.000000e+00> : vector<8x128xf32>
    %8 = tpu.matmul %5, %7, %cst {dimension_numbers = #tpu.dot_dimension_numbers<[1], [0], [0], [1], [0, 0, 1, 1], [], []>} : vector<8x256xbf16>, vector<256x128xbf16>, vector<8x128xf32> -> vector<8x128xf32>
    %9 = arith.addf %3, %8 : vector<8x128xf32>
    %c0_8 = arith.constant 0 : index
    %c0_9 = arith.constant 0 : index
    %10 = vector.load %arg8[%c0_8, %c0_9] : memref<8x128xf32, #tpu.memory_space<vmem>>, vector<8x128xf32>
    tpu.vector_store %arg8[%c0_8, %c0_9], %9 {strides = array<i32>} : memref<8x128xf32, #tpu.memory_space<vmem>>, vector<8x128xf32>,
    %c0_i32_10 = arith.constant 0 : i32
    %11 = arith.cmpi eq, %arg0, %c0_i32_10 : i32
    %c0_i32_11 = arith.constant 0 : i32
    %12 = arith.cmpi eq, %arg1, %c0_i32_11 : i32
    %13 = arith.andi %11, %12 : i1
    %c0_i32_12 = arith.constant 0 : i32
    %14 = arith.cmpi eq, %arg2, %c0_i32_12 : i32
    %15 = arith.andi %13, %14 : i1
    %16 = arith.extui %15 : i1 to i32
    %c0_i32_13 = arith.constant 0 : i32
    %17 = arith.cmpi ne, %16, %c0_i32_13 : i32
    scf.if %17 {
      %cst_15 = arith.constant 0.000000e+00 : f32
      %21 = vector.broadcast %cst_15 : f32 to vector<2x128xf32>
      %c0_16 = arith.constant 0 : index
      %c0_17 = arith.constant 0 : index
      %22 = vector.load %arg7[%c0_16, %c0_17] : memref<2x128xf32, #tpu.memory_space<vmem>>, vector<2x128xf32>
      tpu.vector_store %arg7[%c0_16, %c0_17], %21 {strides = array<i32>} : memref<2x128xf32, #tpu.memory_space<vmem>>, vector<2x128xf32>,
    } else {
    }
    %c3_i32 = arith.constant 3 : i32
    %18 = arith.cmpi eq, %arg2, %c3_i32 : i32
    %19 = arith.extui %18 : i1 to i32
    %c0_i32_14 = arith.constant 0 : i32
    %20 = arith.cmpi ne, %19, %c0_i32_14 : i32
    scf.if %20 {
      %c0_15 = arith.constant 0 : index
      %c0_16 = arith.constant 0 : index
      %21 = vector.load %arg8[%c0_15, %c0_16] : memref<8x128xf32, #tpu.memory_space<vmem>>, vector<8x128xf32>
      %c0_17 = arith.constant 0 : index
      %c0_18 = arith.constant 0 : index
      %c0_19 = arith.constant 0 : index
      %22 = vector.load %arg6[%c0_17, %c0_18, %c0_19] : memref<1x8x128xf32, #tpu.memory_space<vmem>>, vector<1x8x128xf32>
      %23 = vector.shape_cast %22 : vector<1x8x128xf32> to vector<8x128xf32>
      %24 = vector.shape_cast %21 : vector<8x128xf32> to vector<1x8x128xf32>
      tpu.vector_store %arg6[%c0_17, %c0_18, %c0_19], %24 {strides = array<i32>} : memref<1x8x128xf32, #tpu.memory_space<vmem>>, vector<1x8x128xf32>,
      %cst_20 = arith.constant dense<0.000000e+00> : vector<128xf32>
      %25 = vector.multi_reduction <add>, %21, %cst_20 [0] : vector<8x128xf32> to vector<128xf32>
      %26 = vector.shape_cast %25 : vector<128xf32> to vector<1x128xf32>
      %27 = arith.mulf %21, %21 : vector<8x128xf32>
      %cst_21 = arith.constant dense<0.000000e+00> : vector<128xf32>
      %28 = vector.multi_reduction <add>, %27, %cst_21 [0] : vector<8x128xf32> to vector<128xf32>
      %29 = vector.shape_cast %28 : vector<128xf32> to vector<1x128xf32>
      %c0_22 = arith.constant 0 : index
      %c0_23 = arith.constant 0 : index
      %30 = vector.load %arg7[%c0_22, %c0_23] : memref<2x128xf32, #tpu.memory_space<vmem>>, vector<2x128xf32>
      %31 = tpu.concatenate %26, %29 in 0 : vector<1x128xf32>, vector<1x128xf32> -> vector<2x128xf32>
      %32 = arith.addf %30, %31 : vector<2x128xf32>
      %c0_24 = arith.constant 0 : index
      %c0_25 = arith.constant 0 : index
      %33 = vector.load %arg7[%c0_24, %c0_25] : memref<2x128xf32, #tpu.memory_space<vmem>>, vector<2x128xf32>
      tpu.vector_store %arg7[%c0_24, %c0_25], %32 {strides = array<i32>} : memref<2x128xf32, #tpu.memory_space<vmem>>, vector<2x128xf32>,
    } else {
    }
    return
  }
  func.func @transform_0(%arg0: i32, %arg1: i32, %arg2: i32) -> (i32, i32, i32) {
    %c2_i32 = arith.constant 2 : i32
    %0 = arith.muli %c2_i32, %arg1 : i32
    %1 = arith.addi %0, %arg2 : i32
    %c0_i32 = arith.constant 0 : i32
    %c0_i32_0 = arith.constant 0 : i32
    return %1, %arg0, %c0_i32 : i32, i32, i32
  }
  func.func @transform_1(%arg0: i32, %arg1: i32, %arg2: i32) -> (i32, i32, i32) {
    %c0_i32 = arith.constant 0 : i32
    %c0_i32_0 = arith.constant 0 : i32
    %c0_i32_1 = arith.constant 0 : i32
    return %arg2, %c0_i32, %c0_i32_0 : i32, i32, i32
  }
  func.func @transform_2(%arg0: i32, %arg1: i32, %arg2: i32) -> (i32, i32) {
    %c0_i32 = arith.constant 0 : i32
    %c0_i32_0 = arith.constant 0 : i32
    %c0_i32_1 = arith.constant 0 : i32
    return %c0_i32, %c0_i32_0 : i32, i32
  }
  func.func @transform_3(%arg0: i32, %arg1: i32, %arg2: i32) -> (i32, i32, i32) {
    %c0_i32 = arith.constant 0 : i32
    %c0_i32_0 = arith.constant 0 : i32
    return %arg1, %arg0, %c0_i32 : i32, i32, i32
  }
  func.func @transform_4(%arg0: i32, %arg1: i32, %arg2: i32) -> (i32, i32) {
    %c0_i32 = arith.constant 0 : i32
    %c0_i32_0 = arith.constant 0 : i32
    %c0_i32_1 = arith.constant 0 : i32
    return %c0_i32, %c0_i32_0 : i32, i32
  }
}

module attributes {stable_mosaic.version = 11 : i64} {
  func.func @_bn_act_kernel(%arg0: i32, %arg1: i32, %arg2: memref<1x8x128xf32, #tpu.memory_space<vmem>>, %arg3: memref<2x128xf32, #tpu.memory_space<vmem>>, %arg4: memref<1x128xf32, #tpu.memory_space<vmem>>, %arg5: memref<1x128xf32, #tpu.memory_space<vmem>>, %arg6: memref<1x8x128xbf16, #tpu.memory_space<vmem>>) attributes {dimension_semantics = [#tpu.dimension_semantics<parallel>, #tpu.dimension_semantics<parallel>], iteration_bounds = array<i64: 4, 1>, scalar_prefetch = 0 : i64, scratch_operands = 0 : i64, tpu.core_type = #tpu.core_type<tc>, window_params = [{transform_indices = @transform_0, window_bounds = array<i64: 1, 8, 128>}, {pipeline_mode = #tpu.pipeline_mode<synchronous>, transform_indices = @transform_1, window_bounds = array<i64: 2, 128>}, {pipeline_mode = #tpu.pipeline_mode<synchronous>, transform_indices = @transform_2, window_bounds = array<i64: 1, 128>}, {pipeline_mode = #tpu.pipeline_mode<synchronous>, transform_indices = @transform_3, window_bounds = array<i64: 1, 128>}, {transform_indices = @transform_4, window_bounds = array<i64: 1, 8, 128>}]} {
    %c0 = arith.constant 0 : index
    %c0_0 = arith.constant 0 : index
    %0 = vector.load %arg3[%c0, %c0_0] : memref<2x128xf32, #tpu.memory_space<vmem>>, vector<1x128xf32>
    %cst = arith.constant 3.125000e-02 : f32
    %1 = vector.broadcast %cst : f32 to vector<1x128xf32>
    %2 = arith.mulf %0, %1 : vector<1x128xf32>
    %c1 = arith.constant 1 : index
    %c0_1 = arith.constant 0 : index
    %3 = vector.load %arg3[%c1, %c0_1] : memref<2x128xf32, #tpu.memory_space<vmem>>, vector<1x128xf32>
    %cst_2 = arith.constant 3.125000e-02 : f32
    %4 = vector.broadcast %cst_2 : f32 to vector<1x128xf32>
    %5 = arith.mulf %3, %4 : vector<1x128xf32>
    %6 = arith.mulf %2, %2 : vector<1x128xf32>
    %7 = arith.subf %5, %6 : vector<1x128xf32>
    %cst_3 = arith.constant 0.000000e+00 : f32
    %8 = vector.broadcast %cst_3 : f32 to vector<1x128xf32>
    %9 = arith.maximumf %7, %8 : vector<1x128xf32>
    %c0_4 = arith.constant 0 : index
    %c0_5 = arith.constant 0 : index
    %10 = vector.load %arg4[%c0_4, %c0_5] : memref<1x128xf32, #tpu.memory_space<vmem>>, vector<1x128xf32>
    %cst_6 = arith.constant 9.99999974E-6 : f32
    %11 = vector.broadcast %cst_6 : f32 to vector<1x128xf32>
    %12 = arith.addf %9, %11 : vector<1x128xf32>
    %13 = math.rsqrt %12 : vector<1x128xf32>
    %14 = arith.mulf %10, %13 : vector<1x128xf32>
    %c0_7 = arith.constant 0 : index
    %c0_8 = arith.constant 0 : index
    %15 = vector.load %arg5[%c0_7, %c0_8] : memref<1x128xf32, #tpu.memory_space<vmem>>, vector<1x128xf32>
    %16 = arith.mulf %2, %14 : vector<1x128xf32>
    %17 = arith.subf %15, %16 : vector<1x128xf32>
    %c0_9 = arith.constant 0 : index
    %c0_10 = arith.constant 0 : index
    %c0_11 = arith.constant 0 : index
    %18 = vector.load %arg2[%c0_9, %c0_10, %c0_11] : memref<1x8x128xf32, #tpu.memory_space<vmem>>, vector<1x8x128xf32>
    %19 = vector.shape_cast %18 : vector<1x8x128xf32> to vector<8x128xf32>
    %20 = vector.broadcast %14 : vector<1x128xf32> to vector<8x128xf32>
    %21 = arith.mulf %19, %20 : vector<8x128xf32>
    %22 = vector.broadcast %17 : vector<1x128xf32> to vector<8x128xf32>
    %23 = arith.addf %21, %22 : vector<8x128xf32>
    %cst_12 = arith.constant 0.000000e+00 : f32
    %24 = vector.broadcast %cst_12 : f32 to vector<8x128xf32>
    %25 = arith.cmpf ogt, %23, %24 : vector<8x128xf32>
    %cst_13 = arith.constant 2.000000e-01 : f32
    %26 = vector.broadcast %cst_13 : f32 to vector<8x128xf32>
    %27 = arith.mulf %26, %23 : vector<8x128xf32>
    %28 = arith.select %25, %23, %27 : vector<8x128xi1>, vector<8x128xf32>
    %29 = arith.truncf %28 : vector<8x128xf32> to vector<8x128xbf16>
    %c0_14 = arith.constant 0 : index
    %c0_15 = arith.constant 0 : index
    %c0_16 = arith.constant 0 : index
    %30 = vector.load %arg6[%c0_14, %c0_15, %c0_16] : memref<1x8x128xbf16, #tpu.memory_space<vmem>>, vector<1x8x128xbf16>
    %31 = vector.shape_cast %30 : vector<1x8x128xbf16> to vector<8x128xbf16>
    %32 = vector.shape_cast %29 : vector<8x128xbf16> to vector<1x8x128xbf16>
    tpu.vector_store %arg6[%c0_14, %c0_15, %c0_16], %32 {strides = array<i32>} : memref<1x8x128xbf16, #tpu.memory_space<vmem>>, vector<1x8x128xbf16>,
    return
  }
  func.func @transform_0(%arg0: i32, %arg1: i32) -> (i32, i32, i32) {
    %c0_i32 = arith.constant 0 : i32
    %c0_i32_0 = arith.constant 0 : i32
    return %arg0, %arg1, %c0_i32 : i32, i32, i32
  }
  func.func @transform_1(%arg0: i32, %arg1: i32) -> (i32, i32) {
    %c0_i32 = arith.constant 0 : i32
    %c0_i32_0 = arith.constant 0 : i32
    %c0_i32_1 = arith.constant 0 : i32
    return %c0_i32, %c0_i32_0 : i32, i32
  }
  func.func @transform_2(%arg0: i32, %arg1: i32) -> (i32, i32) {
    %c0_i32 = arith.constant 0 : i32
    %c0_i32_0 = arith.constant 0 : i32
    %c0_i32_1 = arith.constant 0 : i32
    return %c0_i32, %c0_i32_0 : i32, i32
  }
  func.func @transform_3(%arg0: i32, %arg1: i32) -> (i32, i32) {
    %c0_i32 = arith.constant 0 : i32
    %c0_i32_0 = arith.constant 0 : i32
    %c0_i32_1 = arith.constant 0 : i32
    return %c0_i32, %c0_i32_0 : i32, i32
  }
  func.func @transform_4(%arg0: i32, %arg1: i32) -> (i32, i32, i32) {
    %c0_i32 = arith.constant 0 : i32
    %c0_i32_0 = arith.constant 0 : i32
    return %arg0, %arg1, %c0_i32 : i32, i32, i32
  }
}

module attributes {stable_mosaic.version = 11 : i64} {
  func.func @_conv_acc_kernel(%arg0: i32, %arg1: i32, %arg2: i32, %arg3: memref<1x2x512xbf16, #tpu.memory_space<vmem>>, %arg4: memref<1x512x128xbf16, #tpu.memory_space<vmem>>, %arg5: memref<1x128xf32, #tpu.memory_space<vmem>>, %arg6: memref<1x2x128xf32, #tpu.memory_space<vmem>>, %arg7: memref<2x128xf32, #tpu.memory_space<vmem>>) attributes {dimension_semantics = [#tpu.dimension_semantics<parallel>, #tpu.dimension_semantics<parallel>, #tpu.dimension_semantics<arbitrary>], iteration_bounds = array<i64: 1, 1, 4>, scalar_prefetch = 0 : i64, scratch_operands = 1 : i64, tpu.core_type = #tpu.core_type<tc>, window_params = [{transform_indices = @transform_0, window_bounds = array<i64: 1, 2, 512>}, {transform_indices = @transform_1, window_bounds = array<i64: 1, 512, 128>}, {pipeline_mode = #tpu.pipeline_mode<synchronous>, transform_indices = @transform_2, window_bounds = array<i64: 1, 128>}, {transform_indices = @transform_3, window_bounds = array<i64: 1, 2, 128>}]} {
    %c0_i32 = arith.constant 0 : i32
    %0 = arith.cmpi eq, %arg2, %c0_i32 : i32
    %1 = arith.extui %0 : i1 to i32
    %c0_i32_0 = arith.constant 0 : i32
    %2 = arith.cmpi ne, %1, %c0_i32_0 : i32
    scf.if %2 {
      %cst_11 = arith.constant 0.000000e+00 : f32
      %14 = vector.broadcast %cst_11 : f32 to vector<2x128xf32>
      %c0_12 = arith.constant 0 : index
      %c0_13 = arith.constant 0 : index
      %15 = vector.load %arg7[%c0_12, %c0_13] : memref<2x128xf32, #tpu.memory_space<vmem>>, vector<2x128xf32>
      tpu.vector_store %arg7[%c0_12, %c0_13], %14 {strides = array<i32>} : memref<2x128xf32, #tpu.memory_space<vmem>>, vector<2x128xf32>,
    } else {
    }
    %c0 = arith.constant 0 : index
    %c0_1 = arith.constant 0 : index
    %3 = vector.load %arg7[%c0, %c0_1] : memref<2x128xf32, #tpu.memory_space<vmem>>, vector<2x128xf32>
    %c0_2 = arith.constant 0 : index
    %c0_3 = arith.constant 0 : index
    %c0_4 = arith.constant 0 : index
    %4 = vector.load %arg3[%c0_2, %c0_3, %c0_4] : memref<1x2x512xbf16, #tpu.memory_space<vmem>>, vector<1x2x512xbf16>
    %5 = vector.shape_cast %4 : vector<1x2x512xbf16> to vector<2x512xbf16>
    %c0_5 = arith.constant 0 : index
    %c0_6 = arith.constant 0 : index
    %c0_7 = arith.constant 0 : index
    %6 = vector.load %arg4[%c0_5, %c0_6, %c0_7] : memref<1x512x128xbf16, #tpu.memory_space<vmem>>, vector<1x512x128xbf16>
    %7 = vector.shape_cast %6 : vector<1x512x128xbf16> to vector<512x128xbf16>
    %cst = arith.constant dense<0.000000e+00> : vector<2x128xf32>
    %8 = tpu.matmul %5, %7, %cst {dimension_numbers = #tpu.dot_dimension_numbers<[1], [0], [0], [1], [0, 0, 1, 1], [], []>} : vector<2x512xbf16>, vector<512x128xbf16>, vector<2x128xf32> -> vector<2x128xf32>
    %9 = arith.addf %3, %8 : vector<2x128xf32>
    %c0_8 = arith.constant 0 : index
    %c0_9 = arith.constant 0 : index
    %10 = vector.load %arg7[%c0_8, %c0_9] : memref<2x128xf32, #tpu.memory_space<vmem>>, vector<2x128xf32>
    tpu.vector_store %arg7[%c0_8, %c0_9], %9 {strides = array<i32>} : memref<2x128xf32, #tpu.memory_space<vmem>>, vector<2x128xf32>,
    %c3_i32 = arith.constant 3 : i32
    %11 = arith.cmpi eq, %arg2, %c3_i32 : i32
    %12 = arith.extui %11 : i1 to i32
    %c0_i32_10 = arith.constant 0 : i32
    %13 = arith.cmpi ne, %12, %c0_i32_10 : i32
    scf.if %13 {
      %c0_11 = arith.constant 0 : index
      %c0_12 = arith.constant 0 : index
      %14 = vector.load %arg7[%c0_11, %c0_12] : memref<2x128xf32, #tpu.memory_space<vmem>>, vector<2x128xf32>
      %c0_13 = arith.constant 0 : index
      %c0_14 = arith.constant 0 : index
      %15 = vector.load %arg5[%c0_13, %c0_14] : memref<1x128xf32, #tpu.memory_space<vmem>>, vector<1x128xf32>
      %16 = vector.broadcast %15 : vector<1x128xf32> to vector<2x128xf32>
      %17 = arith.addf %14, %16 : vector<2x128xf32>
      %cst_15 = arith.constant 0.000000e+00 : f32
      %18 = vector.broadcast %cst_15 : f32 to vector<2x128xf32>
      %19 = arith.subf %18, %17 : vector<2x128xf32>
      %20 = math.exp %19 : vector<2x128xf32>
      %cst_16 = arith.constant 1.000000e+00 : f32
      %21 = vector.broadcast %cst_16 : f32 to vector<2x128xf32>
      %22 = arith.addf %21, %20 : vector<2x128xf32>
      %cst_17 = arith.constant 1.000000e+00 : f32
      %23 = vector.broadcast %cst_17 : f32 to vector<2x128xf32>
      %24 = arith.divf %23, %22 : vector<2x128xf32>
      %c0_18 = arith.constant 0 : index
      %c0_19 = arith.constant 0 : index
      %c0_20 = arith.constant 0 : index
      %25 = vector.load %arg6[%c0_18, %c0_19, %c0_20] : memref<1x2x128xf32, #tpu.memory_space<vmem>>, vector<1x2x128xf32>
      %26 = vector.shape_cast %25 : vector<1x2x128xf32> to vector<2x128xf32>
      %27 = vector.shape_cast %24 : vector<2x128xf32> to vector<1x2x128xf32>
      tpu.vector_store %arg6[%c0_18, %c0_19, %c0_20], %27 {strides = array<i32>} : memref<1x2x128xf32, #tpu.memory_space<vmem>>, vector<1x2x128xf32>,
    } else {
    }
    return
  }
  func.func @transform_0(%arg0: i32, %arg1: i32, %arg2: i32) -> (i32, i32, i32) {
    %c1_i32 = arith.constant 1 : i32
    %0 = arith.muli %c1_i32, %arg1 : i32
    %1 = arith.addi %0, %arg2 : i32
    %c0_i32 = arith.constant 0 : i32
    %c0_i32_0 = arith.constant 0 : i32
    return %1, %arg0, %c0_i32 : i32, i32, i32
  }
  func.func @transform_1(%arg0: i32, %arg1: i32, %arg2: i32) -> (i32, i32, i32) {
    %c0_i32 = arith.constant 0 : i32
    %c0_i32_0 = arith.constant 0 : i32
    %c0_i32_1 = arith.constant 0 : i32
    return %arg2, %c0_i32, %c0_i32_0 : i32, i32, i32
  }
  func.func @transform_2(%arg0: i32, %arg1: i32, %arg2: i32) -> (i32, i32) {
    %c0_i32 = arith.constant 0 : i32
    %c0_i32_0 = arith.constant 0 : i32
    %c0_i32_1 = arith.constant 0 : i32
    return %c0_i32, %c0_i32_0 : i32, i32
  }
  func.func @transform_3(%arg0: i32, %arg1: i32, %arg2: i32) -> (i32, i32, i32) {
    %c0_i32 = arith.constant 0 : i32
    %c0_i32_0 = arith.constant 0 : i32
    return %arg1, %arg0, %c0_i32 : i32, i32, i32
  }
}

</mosaic_0001>

<llo_original>
// kernel: discriminator_forward.6
$region0: #{discriminator_forward.6}
  #allocation0 [shape = 'u32[]', space=smem, size = 0x4, offset = 0x4, fixed_abs, tag = 'smem constant byte address 0x4 - core index']
  #allocation1 [shape = 'u32[144,128]{1,0:T(1,128)}', space=vmem, size = 0x12000, scoped, tag = 'internal scratch']
  #allocation2 [shape = 'f32[32,128]{1,0:T(8,128)}', space=vmem, size = 0x4000, scoped, tag = 'scratch operand']
  %s0 = inlined_call_operand.vmem [shape: bf16[34,32,128], index: 0, kind: input, shape index: {}]
  %s1 = inlined_call_operand.vmem [shape: bf16[4,128,128], index: 1, kind: input, shape index: {}]
  %s2 = inlined_call_operand.vmem [shape: f32[1,128], index: 2, kind: input, shape index: {}]
  %s3 = inlined_call_operand.vmem [shape: bf16[16,32,128], index: 3, kind: output, shape index: {}]
  %s4 = sld [smem:[#allocation0]]
  $region53: #{discriminator_forward.6} parent=0
    _
  %s6 = ssub.s32 1, %s4
  %s7 = scalar_select 0, %s6, %s4
  loop: start=0, step=1, limit=66
  $region2: #{discriminator_forward.6} parent=0 // loop_pre_header
    _
  $region3: #{discriminator_forward.6} parent=0 // loop_header
    %s9 = sphi 0, %s13
    %p10 = scmp.ge.s32.totalorder %s9, 66
    %s16 = sphi 0, %s35
    %s17 = sphi 0, %s31
    %s18 = sphi 0, %s27
    %s19 = sphi 0, %s16
    %s20 = sphi 0, %s17
    %s21 = sphi 0, %s18
    %s22 = sphi 0, %s19
    %s23 = sphi 0, %s20
    %s24 = sphi 0, %s21
    %s44 = sphi 0, %s46
    %s47 = sphi 0, %s44
    %s48 = sphi 0, %s47
    %s64 = sphi 0, %s48
    %s70 = sphi 0, %s72
    %s73 = sphi 0, %s70
    %s74 = sphi 0, %s73
    %s90 = sphi 0, %s74
    %s94 = sphi 0, %s94
    %s96 = sphi 0, %s94
    %s97 = sphi 0, %s96
    %s111 = sphi 0, %s97
    %s119 = sphi 0, %s121
    %s122 = sphi 0, %s119
    %s123 = sphi 0, %s122
    %s139 = sphi 0, %s123
  $region4: #{discriminator_forward.6} parent=0 // loop_header_branch
    %12 = sbr.rel (%p10) target = $region8
  $region5: #{discriminator_forward.6} parent=0 // loop_body
    %s14 = ssub.s32 %s9, 1
    %s15 = ssub.s32 %s9, 2
    %s25 = sadd.s32 1, %s18
    %p26 = scmp.ge.s32.totalorder %s25, 4
    %s27 = scalar_select %p26, 0, %s25
    %s28 = sadd.s32 1, %s17
    %s29 = scalar_select %p26, %s28, %s17
    %p30 = scmp.ge.s32.totalorder %s29, 16
    %s31 = scalar_select %p30, 0, %s29
    %s32 = sadd.s32 1, %s16
    %s33 = scalar_select %p30, %s32, %s16
    %p34 = scmp.ge.s32.totalorder %s33, 1
    %s35 = scalar_select %p34, 0, %s33
    %s36 = smul.u32 %s17, 2
    %s37 = sadd.s32 %s36, %s18
    %s38 = smul.u32 %s31, 2
    %s39 = sadd.s32 %s38, %s27
    %s40 = ssub.s32 %s37, %s39
    %s41 = ssub.s32 %s16, %s35
    %s42 = sor.u32 %s40, %s41
    %p43 = scmp.eq.s32.totalorder %s42, 0
    %s45 = sadd.s32 %s44, 1
    %s46 = scalar_select %p43, %s44, %s45
    %p49 = pneg %p43
    %p50 = scmp.eq.s32.totalorder %s9, 63
    %p51 = por %p49, %p50
    %p52 = scmp.ne.s32.totalorder %s44, %s47
    %p53 = scmp.eq.s32.totalorder %s9, 0
    %p54 = por %p52, %p53
    %p55 = scmp.ne.s32.totalorder %s44, %s47
    %p56 = scmp.eq.s32.totalorder %s14, 63
    %p57 = por %p55, %p56
    %p58 = scmp.ne.s32.totalorder %s47, %s48
    %p59 = scmp.eq.s32.totalorder %s14, 0
    %p60 = por %p58, %p59
    %p61 = scmp.ne.s32.totalorder %s47, %s48
    %p62 = scmp.eq.s32.totalorder %s15, 63
    %p63 = por %p61, %p62
    %p65 = scmp.ne.s32.totalorder %s48, %s64
    %p66 = scmp.eq.s32.totalorder %s15, 0
    %p67 = por %p65, %p66
    %s68 = ssub.s32 %s18, %s27
    %p69 = scmp.eq.s32.totalorder %s68, 0
    %s71 = sadd.s32 %s70, 1
    %s72 = scalar_select %p69, %s70, %s71
    %p75 = pneg %p69
    %p76 = scmp.eq.s32.totalorder %s9, 63
    %p77 = por %p75, %p76
    %p78 = scmp.ne.s32.totalorder %s70, %s73
    %p79 = scmp.eq.s32.totalorder %s9, 0
    %p80 = por %p78, %p79
    %p81 = scmp.ne.s32.totalorder %s70, %s73
    %p82 = scmp.eq.s32.totalorder %s14, 63
    %p83 = por %p81, %p82
    %p84 = scmp.ne.s32.totalorder %s73, %s74
    %p85 = scmp.eq.s32.totalorder %s14, 0
    %p86 = por %p84, %p85
    %p87 = scmp.ne.s32.totalorder %s73, %s74
    %p88 = scmp.eq.s32.totalorder %s15, 63
    %p89 = por %p87, %p88
    %p91 = scmp.ne.s32.totalorder %s74, %s90
    %p92 = scmp.eq.s32.totalorder %s15, 0
    %p93 = por %p91, %p92
    %s95 = sadd.s32 %s94, 1
    %p98 = scmp.eq.s32.totalorder %s9, 63
    %p99 = scmp.ne.s32.totalorder %s94, %s96
    %p100 = scmp.eq.s32.totalorder %s9, 0
    %p101 = por %p99, %p100
    %p102 = scmp.ne.s32.totalorder %s94, %s96
    %p103 = scmp.eq.s32.totalorder %s14, 63
    %p104 = por %p102, %p103
    %p105 = scmp.ne.s32.totalorder %s96, %s97
    %p106 = scmp.eq.s32.totalorder %s14, 0
    %p107 = por %p105, %p106
    %p108 = scmp.ne.s32.totalorder %s96, %s97
    %p109 = scmp.eq.s32.totalorder %s15, 63
    %p110 = por %p108, %p109
    %p112 = scmp.ne.s32.totalorder %s97, %s111
    %p113 = scmp.eq.s32.totalorder %s15, 0
    %p114 = por %p112, %p113
    %s115 = ssub.s32 %s17, %s31
    %s116 = ssub.s32 %s16, %s35
    %s117 = sor.u32 %s115, %s116
    %p118 = scmp.eq.s32.totalorder %s117, 0
    %s120 = sadd.s32 %s119, 1
    %s121 = scalar_select %p118, %s119, %s120
    %p124 = pneg %p118
    %p125 = scmp.eq.s32.totalorder %s9, 63
    %p126 = por %p124, %p125
    %p127 = scmp.ne.s32.totalorder %s119, %s122
    %p128 = scmp.eq.s32.totalorder %s9, 0
    %p129 = por %p127, %p128
    %p130 = scmp.ne.s32.totalorder %s119, %s122
    %p131 = scmp.eq.s32.totalorder %s14, 63
    %p132 = por %p130, %p131
    %p133 = scmp.ne.s32.totalorder %s122, %s123
    %p134 = scmp.eq.s32.totalorder %s14, 0
    %p135 = por %p133, %p134
    %p136 = scmp.ne.s32.totalorder %s122, %s123
    %p137 = scmp.eq.s32.totalorder %s15, 63
    %p138 = por %p136, %p137
    %p140 = scmp.ne.s32.totalorder %s123, %s139
    %p141 = scmp.eq.s32.totalorder %s15, 0
    %p142 = por %p140, %p141
    %p143 = scmp.le.s32.totalorder 1, %s9
    %p144 = scmp.lt.s32.totalorder %s9, 65
    %p145 = pnand %p143, %p144
    %p146 = pneg %p145
    // Predicated region
    $region9: #{discriminator_forward.6} parent=5 // pred_check
      _
    $region10: #{discriminator_forward.6} parent=5 // pred_check_branch
      %148 = sbr.rel (%p145) target = $region12
    $region11: #{discriminator_forward.6} parent=5 // pred_region
      %s149 = ssub.s32 %s9, 1
      // Predicated region
      $region13: #{discriminator_forward.6} parent=11 // pred_check
        %p150 = pneg %p107
      $region14: #{discriminator_forward.6} parent=11 // pred_check_branch
        %152 = sbr.rel (%p150) target = $region16
      $region15: #{discriminator_forward.6} parent=11 // pred_region
        _
      $region16: #{discriminator_forward.6} parent=11 // pred_fallthru
        _
    $region12: #{discriminator_forward.6} parent=5 // pred_fallthru
      _
    %p153 = scmp.lt.s32.totalorder %s9, 64
    // Predicated region
    $region17: #{discriminator_forward.6} parent=5 // pred_check
      %p154 = pneg %p153
    $region18: #{discriminator_forward.6} parent=5 // pred_check_branch
      %156 = sbr.rel (%p154) target = $region20
    $region19: #{discriminator_forward.6} parent=5 // pred_region
      // Predicated region
      $region21: #{discriminator_forward.6} parent=19 // pred_check
        %p157 = pneg %p54
      $region22: #{discriminator_forward.6} parent=19 // pred_check_branch
        %159 = sbr.rel (%p157) target = $region24
      $region23: #{discriminator_forward.6} parent=19 // pred_region
        %s160 = smul.u32 %s17, 2
        %s161 = sadd.s32 %s160, %s18
        %s162 = smul.u32 4, %s16
        %p163 = scmp.lt.s32.totalorder %s161, 33
        %s164 = scalar_select %p163, %s161, 33
        %p165 = scmp.lt.s32.totalorder %s162, 3
        %s166 = scalar_select %p165, %s162, 3
        %s167 = smul.addr %s164, 4
        %s168 = sadd.s32 %s166, %s167
        %s169 = smul.addr %s168, 4
        %s170 = scalar_lea.vmem %s0, %s169
        %s171 = smul.u32 %s17, 2
        %s172 = sadd.s32 %s171, %s18
        %s173 = smul.u32 4, %s16
      $region24: #{discriminator_forward.6} parent=19 // pred_fallthru
        _
      // Predicated region
      $region25: #{discriminator_forward.6} parent=19 // pred_check
        %p174 = pneg %p80
      $region26: #{discriminator_forward.6} parent=19 // pred_check_branch
        %176 = sbr.rel (%p174) target = $region28
      $region27: #{discriminator_forward.6} parent=19 // pred_region
        %p177 = scmp.lt.s32.totalorder %s18, 3
        %s178 = scalar_select %p177, %s18, 3
        %s179 = smul.addr %s178, 16
        %s180 = smul.addr %s179, 4
        %s181 = scalar_lea.vmem %s1, %s180
      $region28: #{discriminator_forward.6} parent=19 // pred_fallthru
        _
    $region20: #{discriminator_forward.6} parent=5 // pred_fallthru
      _
    %p182 = scmp.le.s32.totalorder 1, %s9
    %p183 = scmp.lt.s32.totalorder %s9, 65
    %p184 = pnand %p182, %p183
    %p185 = pneg %p184
    // Predicated region
    $region29: #{discriminator_forward.6} parent=5 // pred_check
      _
    $region30: #{discriminator_forward.6} parent=5 // pred_check_branch
      %187 = sbr.rel (%p184) target = $region32
    $region31: #{discriminator_forward.6} parent=5 // pred_region
      %s188 = ssub.s32 %s9, 1
      %s189 = smul.u32 %s20, 2
      %s190 = sadd.s32 %s189, %s21
      %s191 = smul.u32 4, %s19
      %p192 = scmp.lt.s32.totalorder %s190, 33
      %s193 = scalar_select %p192, %s190, 33
      %p194 = scmp.lt.s32.totalorder %s191, 3
      %s195 = scalar_select %p194, %s191, 3
      %s196 = smul.addr %s193, 4
      %s197 = sadd.s32 %s195, %s196
      %s198 = smul.addr %s197, 4
      %s199 = scalar_lea.vmem %s0, %s198
      %p200 = pneg %p60
      %p201 = pneg %p57
      %p202 = scmp.lt.s32.totalorder %s21, 3
      %s203 = scalar_select %p202, %s21, 3
      %s204 = smul.addr %s203, 16
      %s205 = smul.addr %s204, 4
      %s206 = scalar_lea.vmem %s1, %s205
      %p207 = pneg %p86
      %p208 = pneg %p83
      %p209 = pneg %p107
      %p210 = pneg %p104
      %p211 = pneg %p135
      %p212 = pneg %p132
      %s213 = smul.u32 4, %s19
      %p214 = scmp.lt.s32.totalorder %s20, 15
      %s215 = scalar_select %p214, %s20, 15
      %p216 = scmp.lt.s32.totalorder %s213, 3
      %s217 = scalar_select %p216, %s213, 3
      %s218 = smul.addr %s215, 4
      %s219 = sadd.s32 %s217, %s218
      %s220 = smul.addr %s219, 4
      %s221 = scalar_lea.vmem %s3, %s220
      %s222 = smul.u32 %s20, 2
      %s223 = sadd.s32 %s222, %s21
      %s224 = smul.u32 4, %s19
      %p225 = scmp.lt.s32.totalorder %s223, 33
      %s226 = scalar_select %p225, %s223, 33
      %p227 = scmp.lt.s32.totalorder %s224, 3
      %s228 = scalar_select %p227, %s224, 3
      %s229 = smul.addr %s226, 4
      %s230 = sadd.s32 %s228, %s229
      %s231 = smul.addr %s230, 4
      %s232 = scalar_lea.vmem %s0, %s231
      %s233 = smul.u32 %s20, 2
      %s234 = sadd.s32 %s233, %s21
      %s235 = smul.u32 4, %s19
      %p236 = scmp.lt.s32.totalorder %s21, 3
      %s237 = scalar_select %p236, %s21, 3
      %s238 = smul.addr %s237, 16
      %s239 = smul.addr %s238, 4
      %s240 = scalar_lea.vmem %s1, %s239
      %s241 = smul.u32 4, %s19
      %p242 = scmp.lt.s32.totalorder %s20, 15
      %s243 = scalar_select %p242, %s20, 15
      %p244 = scmp.lt.s32.totalorder %s241, 3
      %s245 = scalar_select %p244, %s241, 3
      %s246 = smul.addr %s243, 4
      %s247 = sadd.s32 %s245, %s246
      %s248 = smul.addr %s247, 4
      %s249 = scalar_lea.vmem %s3, %s248
      %s250 = smul.u32 4, %s19
      %p252 = scmp.eq.s32.totalorder %s21, 0
      // Predicated region
      $region33: #{discriminator_forward.6} parent=31 // pred_check
        %p253 = pneg %p252
      $region34: #{discriminator_forward.6} parent=31 // pred_check_branch
        %255 = sbr.rel (%p253) target = $region36
      $region35: #{discriminator_forward.6} parent=31 // pred_region
        %256 = vst [vmem:[#allocation2] sm:$0xff] 0.0
        %257 = vst [vmem:[#allocation2 + $0x8] sm:$0xff] 0.0
        %258 = vst [vmem:[#allocation2 + $0x10] sm:$0xff] 0.0
        %259 = vst [vmem:[#allocation2 + $0x18] sm:$0xff] 0.0
      $region36: #{discriminator_forward.6} parent=31 // pred_fallthru
        _
      %v260 = vld [vmem:[#allocation2] sm:$0xff]
      %v261 = vld [vmem:[#allocation2 + $0x8] sm:$0xff]
      %v262 = vld [vmem:[#allocation2 + $0x10] sm:$0xff]
      %v263 = vld [vmem:[#allocation2 + $0x18] sm:$0xff]
      %v264 = vld [vmem:[%s232] sm:$0xf]
      %v265 = vld [vmem:[%s232 + $0x4] sm:$0xf]
      %v266 = vld [vmem:[%s232 + $0x8] sm:$0xf]
      %v267 = vld [vmem:[%s232 + $0xc] sm:$0xf]
      %v268 = vld [vmem:[%s240] sm:$0xf]
      %v269 = vld [vmem:[%s240 + $0x4] sm:$0xf]
      %v270 = vld [vmem:[%s240 + $0x8] sm:$0xf]
      %v271 = vld [vmem:[%s240 + $0xc] sm:$0xf]
      %v272 = vld [vmem:[%s240 + $0x10] sm:$0xf]
      %v273 = vld [vmem:[%s240 + $0x14] sm:$0xf]
      %v274 = vld [vmem:[%s240 + $0x18] sm:$0xf]
      %v275 = vld [vmem:[%s240 + $0x1c] sm:$0xf]
      %v276 = vld [vmem:[%s240 + $0x20] sm:$0xf]
      %v277 = vld [vmem:[%s240 + $0x24] sm:$0xf]
      %v278 = vld [vmem:[%s240 + $0x28] sm:$0xf]
      %v279 = vld [vmem:[%s240 + $0x2c] sm:$0xf]
      %v280 = vld [vmem:[%s240 + $0x30] sm:$0xf]
      %v281 = vld [vmem:[%s240 + $0x34] sm:$0xf]
      %v282 = vld [vmem:[%s240 + $0x38] sm:$0xf]
      %v283 = vld [vmem:[%s240 + $0x3c] sm:$0xf]
      %v288 = vunpack.c.l.b16 %v264
      %v289 = vunpack.c.l.b16 %v265
      %v290 = vunpack.c.l.b16 %v266
      %v291 = vunpack.c.l.b16 %v267
      %v292 = vpack.c.b16 %v289, %v288
      %v293 = vpack.c.b16 %v291, %v290
      %v312 = vunpack.c.l.b16 %v268
      %v313 = vunpack.c.l.b16 %v269
      %v314 = vunpack.c.l.b16 %v270
      %v315 = vunpack.c.l.b16 %v271
      %v316 = vunpack.c.l.b16 %v272
      %v317 = vunpack.c.l.b16 %v273
      %v318 = vunpack.c.l.b16 %v274
      %v319 = vunpack.c.l.b16 %v275
      %v320 = vunpack.c.l.b16 %v276
      %v321 = vunpack.c.l.b16 %v277
      %v322 = vunpack.c.l.b16 %v278
      %v323 = vunpack.c.l.b16 %v279
      %v324 = vunpack.c.l.b16 %v280
      %v325 = vunpack.c.l.b16 %v281
      %v326 = vunpack.c.l.b16 %v282
      %v327 = vunpack.c.l.b16 %v283
      %v328 = vpack.c.b16 %v313, %v312
      %v329 = vpack.c.b16 %v315, %v314
      %v330 = vpack.c.b16 %v317, %v316
      %v331 = vpack.c.b16 %v319, %v318
      %v332 = vpack.c.b16 %v321, %v320
      %v333 = vpack.c.b16 %v323, %v322
      %v334 = vpack.c.b16 %v325, %v324
      %v335 = vpack.c.b16 %v327, %v326
      %344 = vmatprep.subr.bf16.mxu0 0
      %345 = vmatpush1.bf16.msra.mxu0 %v335
      %346 = vmatprep.subr.bf16.mxu0 0
      %347 = vmatpush1.bf16.msra.mxu0 %v334
      %348 = vmatprep.subr.bf16.mxu0 0
      %349 = vmatpush1.bf16.msra.mxu0 %v333
      %350 = vmatprep.subr.bf16.mxu0 0
      %351 = vmatpush1.bf16.msra.mxu0 %v332
      %352 = vmatprep.subr.bf16.mxu0 0
      %353 = vmatpush1.bf16.msra.mxu0 %v331
      %354 = vmatprep.subr.bf16.mxu0 0
      %355 = vmatpush1.bf16.msra.mxu0 %v330
      %356 = vmatprep.subr.bf16.mxu0 0
      %357 = vmatpush1.bf16.msra.mxu0 %v329
      %358 = vmatprep.subr.bf16.mxu0 0
      %359 = vmatpush1.bf16.msra.mxu0 %v328
      %360 = vmatprep.subr.bf16.mxu0 0
      %361 = vmatpush2.bf16.msra.mxu0 0
      %362 = vmatprep.subr.bf16.mxu0 0
      %363 = vmatpush2.bf16.msra.mxu0 0
      %364 = vmatprep.subr.bf16.mxu0 0
      %365 = vmatpush2.bf16.msra.mxu0 0
      %366 = vmatprep.subr.bf16.mxu0 0
      %367 = vmatpush2.bf16.msra.mxu0 0
      %368 = vmatprep.subr.bf16.mxu0 0
      %369 = vmatpush2.bf16.msra.mxu0 0
      %370 = vmatprep.subr.bf16.mxu0 0
      %371 = vmatpush2.bf16.msra.mxu0 0
      %372 = vmatprep.subr.bf16.mxu0 0
      %373 = vmatpush2.bf16.msra.mxu0 0
      %374 = vmatprep.subr.bf16.mxu0 0
      %375 = vmatpush2.bf16.msra.mxu0 0
      %376 = vmatprep.mubr.bf16.mxu0 0
      %377 = vmatmul.mubr.bf16.gmra.mxu0 %v292
      %v378 = vpop.f32.mrf.mxu0
      %v379 = vadd.f32 0.0, %v378
      %v380 = vpop.f32.mrf.mxu0
      %v381 = vpop.f32.mrf.mxu0
      %v382 = vadd.f32 0.0, %v381
      %v383 = vpop.f32.mrf.mxu0
      %384 = vmatprep.mubr.bf16.mxu0 0
      %385 = vmatmul.mubr.bf16.gmra.mxu0 %v293
      %v386 = vpop.f32.mrf.mxu0
      %v387 = vadd.f32 0.0, %v386
      %v388 = vpop.f32.mrf.mxu0
      %v389 = vpop.f32.mrf.mxu0
      %v390 = vadd.f32 0.0, %v389
      %v391 = vpop.f32.mrf.mxu0
      %392 = vdwg.mxu0
      %v393 = vadd.f32 %v260, %v379
      %v394 = vadd.f32 %v261, %v382
      %v395 = vadd.f32 %v262, %v387
      %v396 = vadd.f32 %v263, %v390
      %397 = vst [vmem:[#allocation2] sm:$0xff] %v393
      %398 = vst [vmem:[#allocation2 + $0x8] sm:$0xff] %v394
      %399 = vst [vmem:[#allocation2 + $0x10] sm:$0xff] %v395
      %400 = vst [vmem:[#allocation2 + $0x18] sm:$0xff] %v396
      %p401 = scmp.eq.s32.totalorder %s21, 3
      // Predicated region
      $region37: #{discriminator_forward.6} parent=31 // pred_check
        %p402 = pneg %p401
      $region38: #{discriminator_forward.6} parent=31 // pred_check_branch
        %404 = sbr.rel (%p402) target = $region40
      $region39: #{discriminator_forward.6} parent=31 // pred_region
        %v405 = vld [vmem:[#allocation2] sm:$0xff]
        %v406 = vld [vmem:[#allocation2 + $0x8] sm:$0xff]
        %v407 = vld [vmem:[#allocation2 + $0x10] sm:$0xff]
        %v408 = vld [vmem:[#allocation2 + $0x18] sm:$0xff]
        %v409 = vld [vmem:[%s2] sm:$0x1]
        %v411 = vlaneseq
        %v412 = vshrl.u32 %v411, 7
        %v413 = vsub.s32 0, %v412
        %v414 = vrot.slane %v409, %v413
        %v416 = vadd.f32 %v405, %v414
        %v417 = vadd.f32 %v406, %v414
        %v418 = vadd.f32 %v407, %v414
        %v419 = vadd.f32 %v408, %v414
        %vm420 = vcmp.gt.f32.partialorder %v416, 0.0
        %vm421 = vcmp.gt.f32.partialorder %v417, 0.0
        %vm422 = vcmp.gt.f32.partialorder %v418, 0.0
        %vm423 = vcmp.gt.f32.partialorder %v419, 0.0
        %v424 = vmul.f32 %v416, 0.2
        %v425 = vmul.f32 %v417, 0.2
        %v426 = vmul.f32 %v418, 0.2
        %v427 = vmul.f32 %v419, 0.2
        %v428 = vsel %vm420, %v416, %v424
        %v429 = vsel %vm421, %v417, %v425
        %v430 = vsel %vm422, %v418, %v426
        %v431 = vsel %vm423, %v419, %v427
        %v432 = vpack.c.bf16 %v429, %v428
        %v433 = vpack.c.bf16 %v431, %v430
        %v436 = vunpack.c.l.b16 %v432
        %v437 = vunpack.c.h.b16 %v432
        %v438 = vunpack.c.l.b16 %v433
        %v439 = vunpack.c.h.b16 %v433
        %v440 = vpack.c.b16 %v436, %v436
        %v441 = vpack.c.b16 %v437, %v437
        %v442 = vpack.c.b16 %v438, %v438
        %v443 = vpack.c.b16 %v439, %v439
        %448 = vst [vmem:[%s249] sm:$0xf] %v440
        %449 = vst [vmem:[%s249 + $0x4] sm:$0xf] %v441
        %450 = vst [vmem:[%s249 + $0x8] sm:$0xf] %v442
        %451 = vst [vmem:[%s249 + $0xc] sm:$0xf] %v443
      $region40: #{discriminator_forward.6} parent=31 // pred_fallthru
        _
      %s452 = smul.u32 4, %s19
      %p453 = scmp.lt.s32.totalorder %s20, 15
      %s454 = scalar_select %p453, %s20, 15
      %p455 = scmp.lt.s32.totalorder %s452, 3
      %s456 = scalar_select %p455, %s452, 3
      %s457 = smul.addr %s454, 4
      %s458 = sadd.s32 %s456, %s457
      %s459 = smul.addr %s458, 4
      %s460 = scalar_lea.vmem %s3, %s459
      // Predicated region
      $region41: #{discriminator_forward.6} parent=31 // pred_check
        %p461 = pneg %p132
      $region42: #{discriminator_forward.6} parent=31 // pred_check_branch
        %463 = sbr.rel (%p461) target = $region44
      $region43: #{discriminator_forward.6} parent=31 // pred_region
        %s464 = smul.u32 4, %s19
      $region44: #{discriminator_forward.6} parent=31 // pred_fallthru
        _
    $region32: #{discriminator_forward.6} parent=5 // pred_fallthru
      _
    %p465 = scmp.le.s32.totalorder 2, %s9
    // Predicated region
    $region45: #{discriminator_forward.6} parent=5 // pred_check
      %p466 = pneg %p465
    $region46: #{discriminator_forward.6} parent=5 // pred_check_branch
      %468 = sbr.rel (%p466) target = $region48
    $region47: #{discriminator_forward.6} parent=5 // pred_region
      %s469 = ssub.s32 %s9, 2
      // Predicated region
      $region49: #{discriminator_forward.6} parent=47 // pred_check
        %p470 = pneg %p138
      $region50: #{discriminator_forward.6} parent=47 // pred_check_branch
        %472 = sbr.rel (%p470) target = $region52
      $region51: #{discriminator_forward.6} parent=47 // pred_region
        %s473 = smul.u32 4, %s22
        %p474 = scmp.lt.s32.totalorder %s23, 15
        %s475 = scalar_select %p474, %s23, 15
        %p476 = scmp.lt.s32.totalorder %s473, 3
        %s477 = scalar_select %p476, %s473, 3
        %s478 = smul.addr %s475, 4
        %s479 = sadd.s32 %s477, %s478
        %s480 = smul.addr %s479, 4
        %s481 = scalar_lea.vmem %s3, %s480
      $region52: #{discriminator_forward.6} parent=47 // pred_fallthru
        _
    $region48: #{discriminator_forward.6} parent=5 // pred_fallthru
      _
  $region6: #{discriminator_forward.6} parent=0 // loop_footer
    %s13 = sadd.s32 1, %s9
  $region7: #{discriminator_forward.6} parent=0 // loop_footer_branch
    %8 = sbr.rel target = $region3
  $region8: #{discriminator_forward.6} parent=0 // loop_exit
    _

// kernel: discriminator_forward.7
$region0: #{discriminator_forward.7}
  #allocation0 [shape = 'u32[]', space=smem, size = 0x4, offset = 0x4, fixed_abs, tag = 'smem constant byte address 0x4 - core index']
  #allocation1 [shape = 'u32[144,128]{1,0:T(1,128)}', space=vmem, size = 0x12000, scoped, tag = 'internal scratch']
  #allocation2 [shape = 'f32[16,128]{1,0:T(8,128)}', space=vmem, size = 0x2000, scoped, tag = 'scratch operand']
  %s0 = inlined_call_operand.vmem [shape: bf16[18,16,128], index: 0, kind: input, shape index: {}]
  %s1 = inlined_call_operand.vmem [shape: bf16[4,128,128], index: 1, kind: input, shape index: {}]
  %s2 = inlined_call_operand.vmem [shape: f32[1,128], index: 2, kind: input, shape index: {}]
  %s3 = inlined_call_operand.vmem [shape: f32[8,16,128], index: 3, kind: output, shape index: {0}]
  %s4 = inlined_call_operand.vmem [shape: f32[2,128], index: 4, kind: output, shape index: {1}]
  %5 = xla_tuple %s3, %s4
  %s6 = sld [smem:[#allocation0]]
  $region65: #{discriminator_forward.7} parent=0
    _
  %s8 = ssub.s32 1, %s6
  %s9 = scalar_select 0, %s8, %s6
  loop: start=0, step=1, limit=34
  $region2: #{discriminator_forward.7} parent=0 // loop_pre_header
    _
  $region3: #{discriminator_forward.7} parent=0 // loop_header
    %s11 = sphi 0, %s15
    %p12 = scmp.ge.s32.totalorder %s11, 34
    %s18 = sphi 0, %s37
    %s19 = sphi 0, %s33
    %s20 = sphi 0, %s29
    %s21 = sphi 0, %s18
    %s22 = sphi 0, %s19
    %s23 = sphi 0, %s20
    %s24 = sphi 0, %s21
    %s25 = sphi 0, %s22
    %s26 = sphi 0, %s23
    %s46 = sphi 0, %s48
    %s49 = sphi 0, %s46
    %s50 = sphi 0, %s49
    %s66 = sphi 0, %s50
    %s72 = sphi 0, %s74
    %s75 = sphi 0, %s72
    %s76 = sphi 0, %s75
    %s92 = sphi 0, %s76
    %s96 = sphi 0, %s96
    %s98 = sphi 0, %s96
    %s99 = sphi 0, %s98
    %s113 = sphi 0, %s99
    %s121 = sphi 0, %s123
    %s124 = sphi 0, %s121
    %s125 = sphi 0, %s124
    %s141 = sphi 0, %s125
    %s145 = sphi 0, %s145
    %s147 = sphi 0, %s145
    %s148 = sphi 0, %s147
    %s162 = sphi 0, %s148
  $region4: #{discriminator_forward.7} parent=0 // loop_header_branch
    %14 = sbr.rel (%p12) target = $region8
  $region5: #{discriminator_forward.7} parent=0 // loop_body
    %s16 = ssub.s32 %s11, 1
    %s17 = ssub.s32 %s11, 2
    %s27 = sadd.s32 1, %s20
    %p28 = scmp.ge.s32.totalorder %s27, 4
    %s29 = scalar_select %p28, 0, %s27
    %s30 = sadd.s32 1, %s19
    %s31 = scalar_select %p28, %s30, %s19
    %p32 = scmp.ge.s32.totalorder %s31, 8
    %s33 = scalar_select %p32, 0, %s31
    %s34 = sadd.s32 1, %s18
    %s35 = scalar_select %p32, %s34, %s18
    %p36 = scmp.ge.s32.totalorder %s35, 1
    %s37 = scalar_select %p36, 0, %s35
    %s38 = smul.u32 %s19, 2
    %s39 = sadd.s32 %s38, %s20
    %s40 = smul.u32 %s33, 2
    %s41 = sadd.s32 %s40, %s29
    %s42 = ssub.s32 %s39, %s41
    %s43 = ssub.s32 %s18, %s37
    %s44 = sor.u32 %s42, %s43
    %p45 = scmp.eq.s32.totalorder %s44, 0
    %s47 = sadd.s32 %s46, 1
    %s48 = scalar_select %p45, %s46, %s47
    %p51 = pneg %p45
    %p52 = scmp.eq.s32.totalorder %s11, 31
    %p53 = por %p51, %p52
    %p54 = scmp.ne.s32.totalorder %s46, %s49
    %p55 = scmp.eq.s32.totalorder %s11, 0
    %p56 = por %p54, %p55
    %p57 = scmp.ne.s32.totalorder %s46, %s49
    %p58 = scmp.eq.s32.totalorder %s16, 31
    %p59 = por %p57, %p58
    %p60 = scmp.ne.s32.totalorder %s49, %s50
    %p61 = scmp.eq.s32.totalorder %s16, 0
    %p62 = por %p60, %p61
    %p63 = scmp.ne.s32.totalorder %s49, %s50
    %p64 = scmp.eq.s32.totalorder %s17, 31
    %p65 = por %p63, %p64
    %p67 = scmp.ne.s32.totalorder %s50, %s66
    %p68 = scmp.eq.s32.totalorder %s17, 0
    %p69 = por %p67, %p68
    %s70 = ssub.s32 %s20, %s29
    %p71 = scmp.eq.s32.totalorder %s70, 0
    %s73 = sadd.s32 %s72, 1
    %s74 = scalar_select %p71, %s72, %s73
    %p77 = pneg %p71
    %p78 = scmp.eq.s32.totalorder %s11, 31
    %p79 = por %p77, %p78
    %p80 = scmp.ne.s32.totalorder %s72, %s75
    %p81 = scmp.eq.s32.totalorder %s11, 0
    %p82 = por %p80, %p81
    %p83 = scmp.ne.s32.totalorder %s72, %s75
    %p84 = scmp.eq.s32.totalorder %s16, 31
    %p85 = por %p83, %p84
    %p86 = scmp.ne.s32.totalorder %s75, %s76
    %p87 = scmp.eq.s32.totalorder %s16, 0
    %p88 = por %p86, %p87
    %p89 = scmp.ne.s32.totalorder %s75, %s76
    %p90 = scmp.eq.s32.totalorder %s17, 31
    %p91 = por %p89, %p90
    %p93 = scmp.ne.s32.totalorder %s76, %s92
    %p94 = scmp.eq.s32.totalorder %s17, 0
    %p95 = por %p93, %p94
    %s97 = sadd.s32 %s96, 1
    %p100 = scmp.eq.s32.totalorder %s11, 31
    %p101 = scmp.ne.s32.totalorder %s96, %s98
    %p102 = scmp.eq.s32.totalorder %s11, 0
    %p103 = por %p101, %p102
    %p104 = scmp.ne.s32.totalorder %s96, %s98
    %p105 = scmp.eq.s32.totalorder %s16, 31
    %p106 = por %p104, %p105
    %p107 = scmp.ne.s32.totalorder %s98, %s99
    %p108 = scmp.eq.s32.totalorder %s16, 0
    %p109 = por %p107, %p108
    %p110 = scmp.ne.s32.totalorder %s98, %s99
    %p111 = scmp.eq.s32.totalorder %s17, 31
    %p112 = por %p110, %p111
    %p114 = scmp.ne.s32.totalorder %s99, %s113
    %p115 = scmp.eq.s32.totalorder %s17, 0
    %p116 = por %p114, %p115
    %s117 = ssub.s32 %s19, %s33
    %s118 = ssub.s32 %s18, %s37
    %s119 = sor.u32 %s117, %s118
    %p120 = scmp.eq.s32.totalorder %s119, 0
    %s122 = sadd.s32 %s121, 1
    %s123 = scalar_select %p120, %s121, %s122
    %p126 = pneg %p120
    %p127 = scmp.eq.s32.totalorder %s11, 31
    %p128 = por %p126, %p127
    %p129 = scmp.ne.s32.totalorder %s121, %s124
    %p130 = scmp.eq.s32.totalorder %s11, 0
    %p131 = por %p129, %p130
    %p132 = scmp.ne.s32.totalorder %s121, %s124
    %p133 = scmp.eq.s32.totalorder %s16, 31
    %p134 = por %p132, %p133
    %p135 = scmp.ne.s32.totalorder %s124, %s125
    %p136 = scmp.eq.s32.totalorder %s16, 0
    %p137 = por %p135, %p136
    %p138 = scmp.ne.s32.totalorder %s124, %s125
    %p139 = scmp.eq.s32.totalorder %s17, 31
    %p140 = por %p138, %p139
    %p142 = scmp.ne.s32.totalorder %s125, %s141
    %p143 = scmp.eq.s32.totalorder %s17, 0
    %p144 = por %p142, %p143
    %s146 = sadd.s32 %s145, 1
    %p149 = scmp.eq.s32.totalorder %s11, 31
    %p150 = scmp.ne.s32.totalorder %s145, %s147
    %p151 = scmp.eq.s32.totalorder %s11, 0
    %p152 = por %p150, %p151
    %p153 = scmp.ne.s32.totalorder %s145, %s147
    %p154 = scmp.eq.s32.totalorder %s16, 31
    %p155 = por %p153, %p154
    %p156 = scmp.ne.s32.totalorder %s147, %s148
    %p157 = scmp.eq.s32.totalorder %s16, 0
    %p158 = por %p156, %p157
    %p159 = scmp.ne.s32.totalorder %s147, %s148
    %p160 = scmp.eq.s32.totalorder %s17, 31
    %p161 = por %p159, %p160
    %p163 = scmp.ne.s32.totalorder %s148, %s162
    %p164 = scmp.eq.s32.totalorder %s17, 0
    %p165 = por %p163, %p164
    %p166 = scmp.le.s32.totalorder 1, %s11
    %p167 = scmp.lt.s32.totalorder %s11, 33
    %p168 = pnand %p166, %p167
    %p169 = pneg %p168
    // Predicated region
    $region9: #{discriminator_forward.7} parent=5 // pred_check
      _
    $region10: #{discriminator_forward.7} parent=5 // pred_check_branch
      %171 = sbr.rel (%p168) target = $region12
    $region11: #{discriminator_forward.7} parent=5 // pred_region
      %s172 = ssub.s32 %s11, 1
      // Predicated region
      $region13: #{discriminator_forward.7} parent=11 // pred_check
        %p173 = pneg %p109
      $region14: #{discriminator_forward.7} parent=11 // pred_check_branch
        %175 = sbr.rel (%p173) target = $region16
      $region15: #{discriminator_forward.7} parent=11 // pred_region
        _
      $region16: #{discriminator_forward.7} parent=11 // pred_fallthru
        _
    $region12: #{discriminator_forward.7} parent=5 // pred_fallthru
      _
    %p176 = scmp.lt.s32.totalorder %s11, 32
    // Predicated region
    $region17: #{discriminator_forward.7} parent=5 // pred_check
      %p177 = pneg %p176
    $region18: #{discriminator_forward.7} parent=5 // pred_check_branch
      %179 = sbr.rel (%p177) target = $region20
    $region19: #{discriminator_forward.7} parent=5 // pred_region
      // Predicated region
      $region21: #{discriminator_forward.7} parent=19 // pred_check
        %p180 = pneg %p56
      $region22: #{discriminator_forward.7} parent=19 // pred_check_branch
        %182 = sbr.rel (%p180) target = $region24
      $region23: #{discriminator_forward.7} parent=19 // pred_region
        %s183 = smul.u32 %s19, 2
        %s184 = sadd.s32 %s183, %s20
        %s185 = smul.u32 2, %s18
        %p186 = scmp.lt.s32.totalorder %s184, 17
        %s187 = scalar_select %p186, %s184, 17
        %p188 = scmp.lt.s32.totalorder %s185, 1
        %s189 = scalar_select %p188, %s185, 1
        %s190 = smul.addr %s187, 2
        %s191 = sadd.s32 %s189, %s190
        %s192 = smul.addr %s191, 4
        %s193 = scalar_lea.vmem %s0, %s192
        %s194 = smul.u32 %s19, 2
        %s195 = sadd.s32 %s194, %s20
        %s196 = smul.u32 2, %s18
      $region24: #{discriminator_forward.7} parent=19 // pred_fallthru
        _
      // Predicated region
      $region25: #{discriminator_forward.7} parent=19 // pred_check
        %p197 = pneg %p82
      $region26: #{discriminator_forward.7} parent=19 // pred_check_branch
        %199 = sbr.rel (%p197) target = $region28
      $region27: #{discriminator_forward.7} parent=19 // pred_region
        %p200 = scmp.lt.s32.totalorder %s20, 3
        %s201 = scalar_select %p200, %s20, 3
        %s202 = smul.addr %s201, 16
        %s203 = smul.addr %s202, 4
        %s204 = scalar_lea.vmem %s1, %s203
      $region28: #{discriminator_forward.7} parent=19 // pred_fallthru
        _
    $region20: #{discriminator_forward.7} parent=5 // pred_fallthru
      _
    %p205 = scmp.le.s32.totalorder 1, %s11
    %p206 = scmp.lt.s32.totalorder %s11, 33
    %p207 = pnand %p205, %p206
    %p208 = pneg %p207
    // Predicated region
    $region29: #{discriminator_forward.7} parent=5 // pred_check
      _
    $region30: #{discriminator_forward.7} parent=5 // pred_check_branch
      %210 = sbr.rel (%p207) target = $region32
    $region31: #{discriminator_forward.7} parent=5 // pred_region
      %s211 = ssub.s32 %s11, 1
      %s212 = smul.u32 %s22, 2
      %s213 = sadd.s32 %s212, %s23
      %s214 = smul.u32 2, %s21
      %p215 = scmp.lt.s32.totalorder %s213, 17
      %s216 = scalar_select %p215, %s213, 17
      %p217 = scmp.lt.s32.totalorder %s214, 1
      %s218 = scalar_select %p217, %s214, 1
      %s219 = smul.addr %s216, 2
      %s220 = sadd.s32 %s218, %s219
      %s221 = smul.addr %s220, 4
      %s222 = scalar_lea.vmem %s0, %s221
      %p223 = pneg %p62
      %p224 = pneg %p59
      %p225 = scmp.lt.s32.totalorder %s23, 3
      %s226 = scalar_select %p225, %s23, 3
      %s227 = smul.addr %s226, 16
      %s228 = smul.addr %s227, 4
      %s229 = scalar_lea.vmem %s1, %s228
      %p230 = pneg %p88
      %p231 = pneg %p85
      %p232 = pneg %p109
      %p233 = pneg %p106
      %p234 = pneg %p137
      %p235 = pneg %p134
      %s236 = smul.u32 2, %s21
      %p237 = scmp.lt.s32.totalorder %s22, 7
      %s238 = scalar_select %p237, %s22, 7
      %p239 = scmp.lt.s32.totalorder %s236, 1
      %s240 = scalar_select %p239, %s236, 1
      %s241 = smul.addr %s238, 2
      %s242 = sadd.s32 %s240, %s241
      %s243 = smul.addr %s242, 8
      %s244 = scalar_lea.vmem %s3, %s243
      %p245 = pneg %p158
      %p246 = pneg %p155
      %s247 = smul.u32 %s22, 2
      %s248 = sadd.s32 %s247, %s23
      %s249 = smul.u32 2, %s21
      %p250 = scmp.lt.s32.totalorder %s248, 17
      %s251 = scalar_select %p250, %s248, 17
      %p252 = scmp.lt.s32.totalorder %s249, 1
      %s253 = scalar_select %p252, %s249, 1
      %s254 = smul.addr %s251, 2
      %s255 = sadd.s32 %s253, %s254
      %s256 = smul.addr %s255, 4
      %s257 = scalar_lea.vmem %s0, %s256
      %s258 = smul.u32 %s22, 2
      %s259 = sadd.s32 %s258, %s23
      %s260 = smul.u32 2, %s21
      %p261 = scmp.lt.s32.totalorder %s23, 3
      %s262 = scalar_select %p261, %s23, 3
      %s263 = smul.addr %s262, 16
      %s264 = smul.addr %s263, 4
      %s265 = scalar_lea.vmem %s1, %s264
      %s266 = smul.u32 2, %s21
      %p267 = scmp.lt.s32.totalorder %s22, 7
      %s268 = scalar_select %p267, %s22, 7
      %p269 = scmp.lt.s32.totalorder %s266, 1
      %s270 = scalar_select %p269, %s266, 1
      %s271 = smul.addr %s268, 2
      %s272 = sadd.s32 %s270, %s271
      %s273 = smul.addr %s272, 8
      %s274 = scalar_lea.vmem %s3, %s273
      %s275 = smul.u32 2, %s21
      %p277 = scmp.eq.s32.totalorder %s23, 0
      // Predicated region
      $region33: #{discriminator_forward.7} parent=31 // pred_check
        %p278 = pneg %p277
      $region34: #{discriminator_forward.7} parent=31 // pred_check_branch
        %280 = sbr.rel (%p278) target = $region36
      $region35: #{discriminator_forward.7} parent=31 // pred_region
        %281 = vst [vmem:[#allocation2] sm:$0xff] 0.0
        %282 = vst [vmem:[#allocation2 + $0x8] sm:$0xff] 0.0
      $region36: #{discriminator_forward.7} parent=31 // pred_fallthru
        _
      %v283 = vld [vmem:[#allocation2] sm:$0xff]
      %v284 = vld [vmem:[#allocation2 + $0x8] sm:$0xff]
      %v285 = vld [vmem:[%s257] sm:$0xf]
      %v286 = vld [vmem:[%s257 + $0x4] sm:$0xf]
      %v287 = vld [vmem:[%s265] sm:$0xf]
      %v288 = vld [vmem:[%s265 + $0x4] sm:$0xf]
      %v289 = vld [vmem:[%s265 + $0x8] sm:$0xf]
      %v290 = vld [vmem:[%s265 + $0xc] sm:$0xf]
      %v291 = vld [vmem:[%s265 + $0x10] sm:$0xf]
      %v292 = vld [vmem:[%s265 + $0x14] sm:$0xf]
      %v293 = vld [vmem:[%s265 + $0x18] sm:$0xf]
      %v294 = vld [vmem:[%s265 + $0x1c] sm:$0xf]
      %v295 = vld [vmem:[%s265 + $0x20] sm:$0xf]
      %v296 = vld [vmem:[%s265 + $0x24] sm:$0xf]
      %v297 = vld [vmem:[%s265 + $0x28] sm:$0xf]
      %v298 = vld [vmem:[%s265 + $0x2c] sm:$0xf]
      %v299 = vld [vmem:[%s265 + $0x30] sm:$0xf]
      %v300 = vld [vmem:[%s265 + $0x34] sm:$0xf]
      %v301 = vld [vmem:[%s265 + $0x38] sm:$0xf]
      %v302 = vld [vmem:[%s265 + $0x3c] sm:$0xf]
      %v305 = vunpack.c.l.b16 %v285
      %v306 = vunpack.c.l.b16 %v286
      %v307 = vpack.c.b16 %v306, %v305
      %v325 = vunpack.c.l.b16 %v287
      %v326 = vunpack.c.l.b16 %v288
      %v327 = vunpack.c.l.b16 %v289
      %v328 = vunpack.c.l.b16 %v290
      %v329 = vunpack.c.l.b16 %v291
      %v330 = vunpack.c.l.b16 %v292
      %v331 = vunpack.c.l.b16 %v293
      %v332 = vunpack.c.l.b16 %v294
      %v333 = vunpack.c.l.b16 %v295
      %v334 = vunpack.c.l.b16 %v296
      %v335 = vunpack.c.l.b16 %v297
      %v336 = vunpack.c.l.b16 %v298
      %v337 = vunpack.c.l.b16 %v299
      %v338 = vunpack.c.l.b16 %v300
      %v339 = vunpack.c.l.b16 %v301
      %v340 = vunpack.c.l.b16 %v302
      %v341 = vpack.c.b16 %v326, %v325
      %v342 = vpack.c.b16 %v328, %v327
      %v343 = vpack.c.b16 %v330, %v329
      %v344 = vpack.c.b16 %v332, %v331
      %v345 = vpack.c.b16 %v334, %v333
      %v346 = vpack.c.b16 %v336, %v335
      %v347 = vpack.c.b16 %v338, %v337
      %v348 = vpack.c.b16 %v340, %v339
      %357 = vmatprep.subr.bf16.mxu0 0
      %358 = vmatpush1.bf16.msra.mxu0 %v348
      %359 = vmatprep.subr.bf16.mxu0 0
      %360 = vmatpush1.bf16.msra.mxu0 %v347
      %361 = vmatprep.subr.bf16.mxu0 0
      %362 = vmatpush1.bf16.msra.mxu0 %v346
      %363 = vmatprep.subr.bf16.mxu0 0
      %364 = vmatpush1.bf16.msra.mxu0 %v345
      %365 = vmatprep.subr.bf16.mxu0 0
      %366 = vmatpush1.bf16.msra.mxu0 %v344
      %367 = vmatprep.subr.bf16.mxu0 0
      %368 = vmatpush1.bf16.msra.mxu0 %v343
      %369 = vmatprep.subr.bf16.mxu0 0
      %370 = vmatpush1.bf16.msra.mxu0 %v342
      %371 = vmatprep.subr.bf16.mxu0 0
      %372 = vmatpush1.bf16.msra.mxu0 %v341
      %373 = vmatprep.subr.bf16.mxu0 0
      %374 = vmatpush2.bf16.msra.mxu0 0
      %375 = vmatprep.subr.bf16.mxu0 0
      %376 = vmatpush2.bf16.msra.mxu0 0
      %377 = vmatprep.subr.bf16.mxu0 0
      %378 = vmatpush2.bf16.msra.mxu0 0
      %379 = vmatprep.subr.bf16.mxu0 0
      %380 = vmatpush2.bf16.msra.mxu0 0
      %381 = vmatprep.subr.bf16.mxu0 0
      %382 = vmatpush2.bf16.msra.mxu0 0
      %383 = vmatprep.subr.bf16.mxu0 0
      %384 = vmatpush2.bf16.msra.mxu0 0
      %385 = vmatprep.subr.bf16.mxu0 0
      %386 = vmatpush2.bf16.msra.mxu0 0
      %387 = vmatprep.subr.bf16.mxu0 0
      %388 = vmatpush2.bf16.msra.mxu0 0
      %389 = vmatprep.mubr.bf16.mxu0 0
      %390 = vmatmul.mubr.bf16.gmra.mxu0 %v307
      %v391 = vpop.f32.mrf.mxu0
      %v392 = vadd.f32 0.0, %v391
      %v393 = vpop.f32.mrf.mxu0
      %v394 = vpop.f32.mrf.mxu0
      %v395 = vadd.f32 0.0, %v394
      %v396 = vpop.f32.mrf.mxu0
      %397 = vdwg.mxu0
      %v398 = vadd.f32 %v283, %v392
      %v399 = vadd.f32 %v284, %v395
      %400 = vst [vmem:[#allocation2] sm:$0xff] %v398
      %401 = vst [vmem:[#allocation2 + $0x8] sm:$0xff] %v399
      %p402 = scmp.eq.s32.totalorder %s21, 0
      %p403 = scmp.eq.s32.totalorder %s22, 0
      %p404 = pnand %p402, %p403
      %p405 = pneg %p404
      %p406 = pnand %p405, %p277
      %p407 = pneg %p406
      // Predicated region
      $region37: #{discriminator_forward.7} parent=31 // pred_check
        _
      $region38: #{discriminator_forward.7} parent=31 // pred_check_branch
        %409 = sbr.rel (%p406) target = $region40
      $region39: #{discriminator_forward.7} parent=31 // pred_region
        %410 = vst [vmem:[%s4] sm:$0x3] 0.0
      $region40: #{discriminator_forward.7} parent=31 // pred_fallthru
        _
      %p411 = scmp.eq.s32.totalorder %s23, 3
      // Predicated region
      $region41: #{discriminator_forward.7} parent=31 // pred_check
        %p412 = pneg %p411
      $region42: #{discriminator_forward.7} parent=31 // pred_check_branch
        %414 = sbr.rel (%p412) target = $region44
      $region43: #{discriminator_forward.7} parent=31 // pred_region
        %v415 = vld [vmem:[#allocation2] sm:$0xff]
        %v416 = vld [vmem:[#allocation2 + $0x8] sm:$0xff]
        %417 = vst [vmem:[%s274] sm:$0xff] %v415
        %418 = vst [vmem:[%s274 + $0x8] sm:$0xff] %v416
        %v419 = vadd.f32 %v415, %v416
        %v420 = vrot.slane %v419, 4
        %v421 = vadd.f32 %v419, %v420
        %v422 = vrot.slane %v421, 2
        %v423 = vadd.f32 %v421, %v422
        %v424 = vrot.slane %v423, 1
        %v425 = vadd.f32 %v423, %v424
        %v426 = vmul.f32 %v415, %v415
        %v427 = vmul.f32 %v416, %v416
        %v428 = vadd.f32 %v426, %v427
        %v429 = vrot.slane %v428, 4
        %v430 = vadd.f32 %v428, %v429
        %v431 = vrot.slane %v430, 2
        %v432 = vadd.f32 %v430, %v431
        %v433 = vrot.slane %v432, 1
        %v434 = vadd.f32 %v432, %v433
        %v435 = vld [vmem:[%s4] sm:$0x3]
        %vm436 = vcmask 1040384
        %v437 = vsel %vm436, %v425, %v434
        %v438 = vadd.f32 %v435, %v437
        %439 = vst [vmem:[%s4] sm:$0x3] %v438
      $region44: #{discriminator_forward.7} parent=31 // pred_fallthru
        _
      %s440 = smul.u32 2, %s21
      %p441 = scmp.lt.s32.totalorder %s22, 7
      %s442 = scalar_select %p441, %s22, 7
      %p443 = scmp.lt.s32.totalorder %s440, 1
      %s444 = scalar_select %p443, %s440, 1
      %s445 = smul.addr %s442, 2
      %s446 = sadd.s32 %s444, %s445
      %s447 = smul.addr %s446, 8
      %s448 = scalar_lea.vmem %s3, %s447
      // Predicated region
      $region45: #{discriminator_forward.7} parent=31 // pred_check
        %p449 = pneg %p134
      $region46: #{discriminator_forward.7} parent=31 // pred_check_branch
        %451 = sbr.rel (%p449) target = $region48
      $region47: #{discriminator_forward.7} parent=31 // pred_region
        %s452 = smul.u32 2, %s21
      $region48: #{discriminator_forward.7} parent=31 // pred_fallthru
        _
      // Predicated region
      $region49: #{discriminator_forward.7} parent=31 // pred_check
        %p453 = pneg %p155
      $region50: #{discriminator_forward.7} parent=31 // pred_check_branch
        %455 = sbr.rel (%p453) target = $region52
      $region51: #{discriminator_forward.7} parent=31 // pred_region
        _
      $region52: #{discriminator_forward.7} parent=31 // pred_fallthru
        _
      // Predicated region
      $region53: #{discriminator_forward.7} parent=31 // pred_check
        %p456 = pneg %p155
      $region54: #{discriminator_forward.7} parent=31 // pred_check_branch
        %458 = sbr.rel (%p456) target = $region56
      $region55: #{discriminator_forward.7} parent=31 // pred_region
        _
      $region56: #{discriminator_forward.7} parent=31 // pred_fallthru
        _
    $region32: #{discriminator_forward.7} parent=5 // pred_fallthru
      _
    %p459 = scmp.le.s32.totalorder 2, %s11
    // Predicated region
    $region57: #{discriminator_forward.7} parent=5 // pred_check
      %p460 = pneg %p459
    $region58: #{discriminator_forward.7} parent=5 // pred_check_branch
      %462 = sbr.rel (%p460) target = $region60
    $region59: #{discriminator_forward.7} parent=5 // pred_region
      %s463 = ssub.s32 %s11, 2
      // Predicated region
      $region61: #{discriminator_forward.7} parent=59 // pred_check
        %p464 = pneg %p140
      $region62: #{discriminator_forward.7} parent=59 // pred_check_branch
        %466 = sbr.rel (%p464) target = $region64
      $region63: #{discriminator_forward.7} parent=59 // pred_region
        %s467 = smul.u32 2, %s24
        %p468 = scmp.lt.s32.totalorder %s25, 7
        %s469 = scalar_select %p468, %s25, 7
        %p470 = scmp.lt.s32.totalorder %s467, 1
        %s471 = scalar_select %p470, %s467, 1
        %s472 = smul.addr %s469, 2
        %s473 = sadd.s32 %s471, %s472
        %s474 = smul.addr %s473, 8
        %s475 = scalar_lea.vmem %s3, %s474
      $region64: #{discriminator_forward.7} parent=59 // pred_fallthru
        _
    $region60: #{discriminator_forward.7} parent=5 // pred_fallthru
      _
  $region6: #{discriminator_forward.7} parent=0 // loop_footer
    %s15 = sadd.s32 1, %s11
  $region7: #{discriminator_forward.7} parent=0 // loop_footer_branch
    %10 = sbr.rel target = $region3
  $region8: #{discriminator_forward.7} parent=0 // loop_exit
    _

// kernel: discriminator_forward.8
$region0: #{discriminator_forward.8}
  #allocation0 [shape = 'u32[]', space=smem, size = 0x4, offset = 0x4, fixed_abs, tag = 'smem constant byte address 0x4 - core index']
  #allocation1 [shape = 'u32[144,128]{1,0:T(1,128)}', space=vmem, size = 0x12000, scoped, tag = 'internal scratch']
  %s0 = inlined_call_operand.vmem [shape: f32[8,16,128], index: 0, kind: input, shape index: {}]
  %s1 = inlined_call_operand.vmem [shape: f32[2,128], index: 1, kind: input, shape index: {}]
  %s2 = inlined_call_operand.vmem [shape: f32[1,128], index: 2, kind: input, shape index: {}]
  %s3 = inlined_call_operand.vmem [shape: f32[1,128], index: 3, kind: input, shape index: {}]
  %s4 = inlined_call_operand.vmem [shape: bf16[8,16,128], index: 4, kind: output, shape index: {}]
  %s5 = sld [smem:[#allocation0]]
  $region49: #{discriminator_forward.8} parent=0
    _
  %s7 = ssub.s32 1, %s5
  %s8 = scalar_select 0, %s7, %s5
  loop: start=0, step=1, limit=10
  $region2: #{discriminator_forward.8} parent=0 // loop_pre_header
    _
  $region3: #{discriminator_forward.8} parent=0 // loop_header
    %s10 = sphi 0, %s14
    %p11 = scmp.ge.s32.totalorder %s10, 10
    %s17 = sphi 0, %s29
    %s18 = sphi 0, %s25
    %s19 = sphi 0, %s17
    %s20 = sphi 0, %s18
    %s21 = sphi 0, %s19
    %s22 = sphi 0, %s20
    %s34 = sphi 0, %s36
    %s37 = sphi 0, %s34
    %s38 = sphi 0, %s37
    %s54 = sphi 0, %s38
    %s58 = sphi 0, %s58
    %s60 = sphi 0, %s58
    %s61 = sphi 0, %s60
    %s75 = sphi 0, %s61
    %s79 = sphi 0, %s79
    %s81 = sphi 0, %s79
    %s82 = sphi 0, %s81
    %s96 = sphi 0, %s82
    %s100 = sphi 0, %s100
    %s102 = sphi 0, %s100
    %s103 = sphi 0, %s102
    %s117 = sphi 0, %s103
    %s125 = sphi 0, %s127
    %s128 = sphi 0, %s125
    %s129 = sphi 0, %s128
    %s145 = sphi 0, %s129
  $region4: #{discriminator_forward.8} parent=0 // loop_header_branch
    %13 = sbr.rel (%p11) target = $region8
  $region5: #{discriminator_forward.8} parent=0 // loop_body
    %s15 = ssub.s32 %s10, 1
    %s16 = ssub.s32 %s10, 2
    %s23 = sadd.s32 1, %s18
    %p24 = scmp.ge.s32.totalorder %s23, 1
    %s25 = scalar_select %p24, 0, %s23
    %s26 = sadd.s32 1, %s17
    %s27 = scalar_select %p24, %s26, %s17
    %p28 = scmp.ge.s32.totalorder %s27, 8
    %s29 = scalar_select %p28, 0, %s27
    %s30 = ssub.s32 %s17, %s29
    %s31 = ssub.s32 %s18, %s25
    %s32 = sor.u32 %s30, %s31
    %p33 = scmp.eq.s32.totalorder %s32, 0
    %s35 = sadd.s32 %s34, 1
    %s36 = scalar_select %p33, %s34, %s35
    %p39 = pneg %p33
    %p40 = scmp.eq.s32.totalorder %s10, 7
    %p41 = por %p39, %p40
    %p42 = scmp.ne.s32.totalorder %s34, %s37
    %p43 = scmp.eq.s32.totalorder %s10, 0
    %p44 = por %p42, %p43
    %p45 = scmp.ne.s32.totalorder %s34, %s37
    %p46 = scmp.eq.s32.totalorder %s15, 7
    %p47 = por %p45, %p46
    %p48 = scmp.ne.s32.totalorder %s37, %s38
    %p49 = scmp.eq.s32.totalorder %s15, 0
    %p50 = por %p48, %p49
    %p51 = scmp.ne.s32.totalorder %s37, %s38
    %p52 = scmp.eq.s32.totalorder %s16, 7
    %p53 = por %p51, %p52
    %p55 = scmp.ne.s32.totalorder %s38, %s54
    %p56 = scmp.eq.s32.totalorder %s16, 0
    %p57 = por %p55, %p56
    %s59 = sadd.s32 %s58, 1
    %p62 = scmp.eq.s32.totalorder %s10, 7
    %p63 = scmp.ne.s32.totalorder %s58, %s60
    %p64 = scmp.eq.s32.totalorder %s10, 0
    %p65 = por %p63, %p64
    %p66 = scmp.ne.s32.totalorder %s58, %s60
    %p67 = scmp.eq.s32.totalorder %s15, 7
    %p68 = por %p66, %p67
    %p69 = scmp.ne.s32.totalorder %s60, %s61
    %p70 = scmp.eq.s32.totalorder %s15, 0
    %p71 = por %p69, %p70
    %p72 = scmp.ne.s32.totalorder %s60, %s61
    %p73 = scmp.eq.s32.totalorder %s16, 7
    %p74 = por %p72, %p73
    %p76 = scmp.ne.s32.totalorder %s61, %s75
    %p77 = scmp.eq.s32.totalorder %s16, 0
    %p78 = por %p76, %p77
    %s80 = sadd.s32 %s79, 1
    %p83 = scmp.eq.s32.totalorder %s10, 7
    %p84 = scmp.ne.s32.totalorder %s79, %s81
    %p85 = scmp.eq.s32.totalorder %s10, 0
    %p86 = por %p84, %p85
    %p87 = scmp.ne.s32.totalorder %s79, %s81
    %p88 = scmp.eq.s32.totalorder %s15, 7
    %p89 = por %p87, %p88
    %p90 = scmp.ne.s32.totalorder %s81, %s82
    %p91 = scmp.eq.s32.totalorder %s15, 0
    %p92 = por %p90, %p91
    %p93 = scmp.ne.s32.totalorder %s81, %s82
    %p94 = scmp.eq.s32.totalorder %s16, 7
    %p95 = por %p93, %p94
    %p97 = scmp.ne.s32.totalorder %s82, %s96
    %p98 = scmp.eq.s32.totalorder %s16, 0
    %p99 = por %p97, %p98
    %s101 = sadd.s32 %s100, 1
    %p104 = scmp.eq.s32.totalorder %s10, 7
    %p105 = scmp.ne.s32.totalorder %s100, %s102
    %p106 = scmp.eq.s32.totalorder %s10, 0
    %p107 = por %p105, %p106
    %p108 = scmp.ne.s32.totalorder %s100, %s102
    %p109 = scmp.eq.s32.totalorder %s15, 7
    %p110 = por %p108, %p109
    %p111 = scmp.ne.s32.totalorder %s102, %s103
    %p112 = scmp.eq.s32.totalorder %s15, 0
    %p113 = por %p111, %p112
    %p114 = scmp.ne.s32.totalorder %s102, %s103
    %p115 = scmp.eq.s32.totalorder %s16, 7
    %p116 = por %p114, %p115
    %p118 = scmp.ne.s32.totalorder %s103, %s117
    %p119 = scmp.eq.s32.totalorder %s16, 0
    %p120 = por %p118, %p119
    %s121 = ssub.s32 %s17, %s29
    %s122 = ssub.s32 %s18, %s25
    %s123 = sor.u32 %s121, %s122
    %p124 = scmp.eq.s32.totalorder %s123, 0
    %s126 = sadd.s32 %s125, 1
    %s127 = scalar_select %p124, %s125, %s126
    %p130 = pneg %p124
    %p131 = scmp.eq.s32.totalorder %s10, 7
    %p132 = por %p130, %p131
    %p133 = scmp.ne.s32.totalorder %s125, %s128
    %p134 = scmp.eq.s32.totalorder %s10, 0
    %p135 = por %p133, %p134
    %p136 = scmp.ne.s32.totalorder %s125, %s128
    %p137 = scmp.eq.s32.totalorder %s15, 7
    %p138 = por %p136, %p137
    %p139 = scmp.ne.s32.totalorder %s128, %s129
    %p140 = scmp.eq.s32.totalorder %s15, 0
    %p141 = por %p139, %p140
    %p142 = scmp.ne.s32.totalorder %s128, %s129
    %p143 = scmp.eq.s32.totalorder %s16, 7
    %p144 = por %p142, %p143
    %p146 = scmp.ne.s32.totalorder %s129, %s145
    %p147 = scmp.eq.s32.totalorder %s16, 0
    %p148 = por %p146, %p147
    %p149 = scmp.le.s32.totalorder 1, %s10
    %p150 = scmp.lt.s32.totalorder %s10, 9
    %p151 = pnand %p149, %p150
    %p152 = pneg %p151
    // Predicated region
    $region9: #{discriminator_forward.8} parent=5 // pred_check
      _
    $region10: #{discriminator_forward.8} parent=5 // pred_check_branch
      %154 = sbr.rel (%p151) target = $region12
    $region11: #{discriminator_forward.8} parent=5 // pred_region
      %s155 = ssub.s32 %s10, 1
      // Predicated region
      $region13: #{discriminator_forward.8} parent=11 // pred_check
        %p156 = pneg %p71
      $region14: #{discriminator_forward.8} parent=11 // pred_check_branch
        %158 = sbr.rel (%p156) target = $region16
      $region15: #{discriminator_forward.8} parent=11 // pred_region
        _
      $region16: #{discriminator_forward.8} parent=11 // pred_fallthru
        _
      // Predicated region
      $region17: #{discriminator_forward.8} parent=11 // pred_check
        %p159 = pneg %p92
      $region18: #{discriminator_forward.8} parent=11 // pred_check_branch
        %161 = sbr.rel (%p159) target = $region20
      $region19: #{discriminator_forward.8} parent=11 // pred_region
        _
      $region20: #{discriminator_forward.8} parent=11 // pred_fallthru
        _
      // Predicated region
      $region21: #{discriminator_forward.8} parent=11 // pred_check
        %p162 = pneg %p113
      $region22: #{discriminator_forward.8} parent=11 // pred_check_branch
        %164 = sbr.rel (%p162) target = $region24
      $region23: #{discriminator_forward.8} parent=11 // pred_region
        _
      $region24: #{discriminator_forward.8} parent=11 // pred_fallthru
        _
    $region12: #{discriminator_forward.8} parent=5 // pred_fallthru
      _
    %p165 = scmp.lt.s32.totalorder %s10, 8
    // Predicated region
    $region25: #{discriminator_forward.8} parent=5 // pred_check
      %p166 = pneg %p165
    $region26: #{discriminator_forward.8} parent=5 // pred_check_branch
      %168 = sbr.rel (%p166) target = $region28
    $region27: #{discriminator_forward.8} parent=5 // pred_region
      // Predicated region
      $region29: #{discriminator_forward.8} parent=27 // pred_check
        %p169 = pneg %p44
      $region30: #{discriminator_forward.8} parent=27 // pred_check_branch
        %171 = sbr.rel (%p169) target = $region32
      $region31: #{discriminator_forward.8} parent=27 // pred_region
        %s172 = smul.u32 2, %s18
        %p173 = scmp.lt.s32.totalorder %s17, 7
        %s174 = scalar_select %p173, %s17, 7
        %p175 = scmp.lt.s32.totalorder %s172, 1
        %s176 = scalar_select %p175, %s172, 1
        %s177 = smul.addr %s174, 2
        %s178 = sadd.s32 %s176, %s177
        %s179 = smul.addr %s178, 8
        %s180 = scalar_lea.vmem %s0, %s179
        %s181 = smul.u32 2, %s18
      $region32: #{discriminator_forward.8} parent=27 // pred_fallthru
        _
    $region28: #{discriminator_forward.8} parent=5 // pred_fallthru
      _
    %p182 = scmp.le.s32.totalorder 1, %s10
    %p183 = scmp.lt.s32.totalorder %s10, 9
    %p184 = pnand %p182, %p183
    %p185 = pneg %p184
    // Predicated region
    $region33: #{discriminator_forward.8} parent=5 // pred_check
      _
    $region34: #{discriminator_forward.8} parent=5 // pred_check_branch
      %187 = sbr.rel (%p184) target = $region36
    $region35: #{discriminator_forward.8} parent=5 // pred_region
      %s188 = ssub.s32 %s10, 1
      %s189 = smul.u32 2, %s20
      %p190 = scmp.lt.s32.totalorder %s19, 7
      %s191 = scalar_select %p190, %s19, 7
      %p192 = scmp.lt.s32.totalorder %s189, 1
      %s193 = scalar_select %p192, %s189, 1
      %s194 = smul.addr %s191, 2
      %s195 = sadd.s32 %s193, %s194
      %s196 = smul.addr %s195, 8
      %s197 = scalar_lea.vmem %s0, %s196
      %p198 = pneg %p50
      %p199 = pneg %p47
      %p200 = pneg %p71
      %p201 = pneg %p68
      %p202 = pneg %p92
      %p203 = pneg %p89
      %p204 = pneg %p113
      %p205 = pneg %p110
      %p206 = pneg %p141
      %p207 = pneg %p138
      %s208 = smul.u32 2, %s20
      %p209 = scmp.lt.s32.totalorder %s19, 7
      %s210 = scalar_select %p209, %s19, 7
      %p211 = scmp.lt.s32.totalorder %s208, 1
      %s212 = scalar_select %p211, %s208, 1
      %s213 = smul.addr %s210, 2
      %s214 = sadd.s32 %s212, %s213
      %s215 = smul.addr %s214, 4
      %s216 = scalar_lea.vmem %s4, %s215
      %s217 = smul.u32 2, %s20
      %p218 = scmp.lt.s32.totalorder %s19, 7
      %s219 = scalar_select %p218, %s19, 7
      %p220 = scmp.lt.s32.totalorder %s217, 1
      %s221 = scalar_select %p220, %s217, 1
      %s222 = smul.addr %s219, 2
      %s223 = sadd.s32 %s221, %s222
      %s224 = smul.addr %s223, 8
      %s225 = scalar_lea.vmem %s0, %s224
      %s226 = smul.u32 2, %s20
      %s227 = smul.u32 2, %s20
      %p228 = scmp.lt.s32.totalorder %s19, 7
      %s229 = scalar_select %p228, %s19, 7
      %p230 = scmp.lt.s32.totalorder %s227, 1
      %s231 = scalar_select %p230, %s227, 1
      %s232 = smul.addr %s229, 2
      %s233 = sadd.s32 %s231, %s232
      %s234 = smul.addr %s233, 4
      %s235 = scalar_lea.vmem %s4, %s234
      %s236 = smul.u32 2, %s20
      %v237 = vld [vmem:[%s1] sm:$0x1]
      %v238 = vmul.f32 %v237, 0.0078125
      %v239 = vld [vmem:[%s1 + $0x1] sm:$0x1]
      %v240 = vmul.f32 %v239, 0.0078125
      %v241 = vmul.f32 %v238, %v238
      %v242 = vsub.f32 %v240, %v241
      %v243 = vmax.f32 %v242, 0.0
      %v244 = vld [vmem:[%s2] sm:$0x1]
      %v245 = vadd.f32 %v243, 1e-05
      %v246 = vrsqrt.pop %v245
      %v247 = vmul.f32 %v244, %v246
      %v248 = vld [vmem:[%s3] sm:$0x1]
      %v249 = vmul.f32 %v238, %v247
      %v250 = vsub.f32 %v248, %v249
      %v251 = vld [vmem:[%s225] sm:$0xff]
      %v252 = vld [vmem:[%s225 + $0x8] sm:$0xff]
      %v254 = vlaneseq
      %v255 = vshrl.u32 %v254, 7
      %v256 = vsub.s32 0, %v255
      %v257 = vrot.slane %v247, %v256
      %v259 = vmul.f32 %v251, %v257
      %v260 = vmul.f32 %v252, %v257
      %v262 = vlaneseq
      %v263 = vshrl.u32 %v262, 7
      %v264 = vsub.s32 0, %v263
      %v265 = vrot.slane %v250, %v264
      %v267 = vadd.f32 %v259, %v265
      %v268 = vadd.f32 %v260, %v265
      %vm269 = vcmp.gt.f32.partialorder %v267, 0.0
      %vm270 = vcmp.gt.f32.partialorder %v268, 0.0
      %v271 = vmul.f32 %v267, 0.2
      %v272 = vmul.f32 %v268, 0.2
      %v273 = vsel %vm269, %v267, %v271
      %v274 = vsel %vm270, %v268, %v272
      %v275 = vpack.c.bf16 %v274, %v273
      %v277 = vunpack.c.l.b16 %v275
      %v278 = vunpack.c.h.b16 %v275
      %v279 = vpack.c.b16 %v277, %v277
      %v280 = vpack.c.b16 %v278, %v278
      %283 = vst [vmem:[%s235] sm:$0xf] %v279
      %284 = vst [vmem:[%s235 + $0x4] sm:$0xf] %v280
      %s285 = smul.u32 2, %s20
      %p286 = scmp.lt.s32.totalorder %s19, 7
      %s287 = scalar_select %p286, %s19, 7
      %p288 = scmp.lt.s32.totalorder %s285, 1
      %s289 = scalar_select %p288, %s285, 1
      %s290 = smul.addr %s287, 2
      %s291 = sadd.s32 %s289, %s290
      %s292 = smul.addr %s291, 4
      %s293 = scalar_lea.vmem %s4, %s292
      // Predicated region
      $region37: #{discriminator_forward.8} parent=35 // pred_check
        %p294 = pneg %p138
      $region38: #{discriminator_forward.8} parent=35 // pred_check_branch
        %296 = sbr.rel (%p294) target = $region40
      $region39: #{discriminator_forward.8} parent=35 // pred_region
        %s297 = smul.u32 2, %s20
      $region40: #{discriminator_forward.8} parent=35 // pred_fallthru
        _
    $region36: #{discriminator_forward.8} parent=5 // pred_fallthru
      _
    %p298 = scmp.le.s32.totalorder 2, %s10
    // Predicated region
    $region41: #{discriminator_forward.8} parent=5 // pred_check
      %p299 = pneg %p298
    $region42: #{discriminator_forward.8} parent=5 // pred_check_branch
      %301 = sbr.rel (%p299) target = $region44
    $region43: #{discriminator_forward.8} parent=5 // pred_region
      %s302 = ssub.s32 %s10, 2
      // Predicated region
      $region45: #{discriminator_forward.8} parent=43 // pred_check
        %p303 = pneg %p144
      $region46: #{discriminator_forward.8} parent=43 // pred_check_branch
        %305 = sbr.rel (%p303) target = $region48
      $region47: #{discriminator_forward.8} parent=43 // pred_region
        %s306 = smul.u32 2, %s22
        %p307 = scmp.lt.s32.totalorder %s21, 7
        %s308 = scalar_select %p307, %s21, 7
        %p309 = scmp.lt.s32.totalorder %s306, 1
        %s310 = scalar_select %p309, %s306, 1
        %s311 = smul.addr %s308, 2
        %s312 = sadd.s32 %s310, %s311
        %s313 = smul.addr %s312, 4
        %s314 = scalar_lea.vmem %s4, %s313
      $region48: #{discriminator_forward.8} parent=43 // pred_fallthru
        _
    $region44: #{discriminator_forward.8} parent=5 // pred_fallthru
      _
  $region6: #{discriminator_forward.8} parent=0 // loop_footer
    %s14 = sadd.s32 1, %s10
  $region7: #{discriminator_forward.8} parent=0 // loop_footer_branch
    %9 = sbr.rel target = $region3
  $region8: #{discriminator_forward.8} parent=0 // loop_exit
    _

// kernel: discriminator_forward.9
$region0: #{discriminator_forward.9}
  #allocation0 [shape = 'u32[]', space=smem, size = 0x4, offset = 0x4, fixed_abs, tag = 'smem constant byte address 0x4 - core index']
  #allocation1 [shape = 'u32[144,128]{1,0:T(1,128)}', space=vmem, size = 0x12000, scoped, tag = 'internal scratch']
  #allocation2 [shape = 'f32[8,128]{1,0:T(8,128)}', space=vmem, size = 0x1000, scoped, tag = 'scratch operand']
  %s0 = inlined_call_operand.vmem [shape: bf16[10,8,256], index: 0, kind: input, shape index: {}]
  %s1 = inlined_call_operand.vmem [shape: bf16[4,256,128], index: 1, kind: input, shape index: {}]
  %s2 = inlined_call_operand.vmem [shape: f32[1,128], index: 2, kind: input, shape index: {}]
  %s3 = inlined_call_operand.vmem [shape: f32[4,8,128], index: 3, kind: output, shape index: {0}]
  %s4 = inlined_call_operand.vmem [shape: f32[2,128], index: 4, kind: output, shape index: {1}]
  %5 = xla_tuple %s3, %s4
  %s6 = sld [smem:[#allocation0]]
  $region65: #{discriminator_forward.9} parent=0
    _
  %s8 = ssub.s32 1, %s6
  %s9 = scalar_select 0, %s8, %s6
  loop: start=0, step=1, limit=18
  $region2: #{discriminator_forward.9} parent=0 // loop_pre_header
    _
  $region3: #{discriminator_forward.9} parent=0 // loop_header
    %s11 = sphi 0, %s15
    %p12 = scmp.ge.s32.totalorder %s11, 18
    %s18 = sphi 0, %s37
    %s19 = sphi 0, %s33
    %s20 = sphi 0, %s29
    %s21 = sphi 0, %s18
    %s22 = sphi 0, %s19
    %s23 = sphi 0, %s20
    %s24 = sphi 0, %s21
    %s25 = sphi 0, %s22
    %s26 = sphi 0, %s23
    %s46 = sphi 0, %s48
    %s49 = sphi 0, %s46
    %s50 = sphi 0, %s49
    %s66 = sphi 0, %s50
    %s72 = sphi 0, %s74
    %s75 = sphi 0, %s72
    %s76 = sphi 0, %s75
    %s92 = sphi 0, %s76
    %s96 = sphi 0, %s96
    %s98 = sphi 0, %s96
    %s99 = sphi 0, %s98
    %s113 = sphi 0, %s99
    %s121 = sphi 0, %s123
    %s124 = sphi 0, %s121
    %s125 = sphi 0, %s124
    %s141 = sphi 0, %s125
    %s145 = sphi 0, %s145
    %s147 = sphi 0, %s145
    %s148 = sphi 0, %s147
    %s162 = sphi 0, %s148
  $region4: #{discriminator_forward.9} parent=0 // loop_header_branch
    %14 = sbr.rel (%p12) target = $region8
  $region5: #{discriminator_forward.9} parent=0 // loop_body
    %s16 = ssub.s32 %s11, 1
    %s17 = ssub.s32 %s11, 2
    %s27 = sadd.s32 1, %s20
    %p28 = scmp.ge.s32.totalorder %s27, 4
    %s29 = scalar_select %p28, 0, %s27
    %s30 = sadd.s32 1, %s19
    %s31 = scalar_select %p28, %s30, %s19
    %p32 = scmp.ge.s32.totalorder %s31, 4
    %s33 = scalar_select %p32, 0, %s31
    %s34 = sadd.s32 1, %s18
    %s35 = scalar_select %p32, %s34, %s18
    %p36 = scmp.ge.s32.totalorder %s35, 1
    %s37 = scalar_select %p36, 0, %s35
    %s38 = smul.u32 %s19, 2
    %s39 = sadd.s32 %s38, %s20
    %s40 = smul.u32 %s33, 2
    %s41 = sadd.s32 %s40, %s29
    %s42 = ssub.s32 %s39, %s41
    %s43 = ssub.s32 %s18, %s37
    %s44 = sor.u32 %s42, %s43
    %p45 = scmp.eq.s32.totalorder %s44, 0
    %s47 = sadd.s32 %s46, 1
    %s48 = scalar_select %p45, %s46, %s47
    %p51 = pneg %p45
    %p52 = scmp.eq.s32.totalorder %s11, 15
    %p53 = por %p51, %p52
    %p54 = scmp.ne.s32.totalorder %s46, %s49
    %p55 = scmp.eq.s32.totalorder %s11, 0
    %p56 = por %p54, %p55
    %p57 = scmp.ne.s32.totalorder %s46, %s49
    %p58 = scmp.eq.s32.totalorder %s16, 15
    %p59 = por %p57, %p58
    %p60 = scmp.ne.s32.totalorder %s49, %s50
    %p61 = scmp.eq.s32.totalorder %s16, 0
    %p62 = por %p60, %p61
    %p63 = scmp.ne.s32.totalorder %s49, %s50
    %p64 = scmp.eq.s32.totalorder %s17, 15
    %p65 = por %p63, %p64
    %p67 = scmp.ne.s32.totalorder %s50, %s66
    %p68 = scmp.eq.s32.totalorder %s17, 0
    %p69 = por %p67, %p68
    %s70 = ssub.s32 %s20, %s29
    %p71 = scmp.eq.s32.totalorder %s70, 0
    %s73 = sadd.s32 %s72, 1
    %s74 = scalar_select %p71, %s72, %s73
    %p77 = pneg %p71
    %p78 = scmp.eq.s32.totalorder %s11, 15
    %p79 = por %p77, %p78
    %p80 = scmp.ne.s32.totalorder %s72, %s75
    %p81 = scmp.eq.s32.totalorder %s11, 0
    %p82 = por %p80, %p81
    %p83 = scmp.ne.s32.totalorder %s72, %s75
    %p84 = scmp.eq.s32.totalorder %s16, 15
    %p85 = por %p83, %p84
    %p86 = scmp.ne.s32.totalorder %s75, %s76
    %p87 = scmp.eq.s32.totalorder %s16, 0
    %p88 = por %p86, %p87
    %p89 = scmp.ne.s32.totalorder %s75, %s76
    %p90 = scmp.eq.s32.totalorder %s17, 15
    %p91 = por %p89, %p90
    %p93 = scmp.ne.s32.totalorder %s76, %s92
    %p94 = scmp.eq.s32.totalorder %s17, 0
    %p95 = por %p93, %p94
    %s97 = sadd.s32 %s96, 1
    %p100 = scmp.eq.s32.totalorder %s11, 15
    %p101 = scmp.ne.s32.totalorder %s96, %s98
    %p102 = scmp.eq.s32.totalorder %s11, 0
    %p103 = por %p101, %p102
    %p104 = scmp.ne.s32.totalorder %s96, %s98
    %p105 = scmp.eq.s32.totalorder %s16, 15
    %p106 = por %p104, %p105
    %p107 = scmp.ne.s32.totalorder %s98, %s99
    %p108 = scmp.eq.s32.totalorder %s16, 0
    %p109 = por %p107, %p108
    %p110 = scmp.ne.s32.totalorder %s98, %s99
    %p111 = scmp.eq.s32.totalorder %s17, 15
    %p112 = por %p110, %p111
    %p114 = scmp.ne.s32.totalorder %s99, %s113
    %p115 = scmp.eq.s32.totalorder %s17, 0
    %p116 = por %p114, %p115
    %s117 = ssub.s32 %s19, %s33
    %s118 = ssub.s32 %s18, %s37
    %s119 = sor.u32 %s117, %s118
    %p120 = scmp.eq.s32.totalorder %s119, 0
    %s122 = sadd.s32 %s121, 1
    %s123 = scalar_select %p120, %s121, %s122
    %p126 = pneg %p120
    %p127 = scmp.eq.s32.totalorder %s11, 15
    %p128 = por %p126, %p127
    %p129 = scmp.ne.s32.totalorder %s121, %s124
    %p130 = scmp.eq.s32.totalorder %s11, 0
    %p131 = por %p129, %p130
    %p132 = scmp.ne.s32.totalorder %s121, %s124
    %p133 = scmp.eq.s32.totalorder %s16, 15
    %p134 = por %p132, %p133
    %p135 = scmp.ne.s32.totalorder %s124, %s125
    %p136 = scmp.eq.s32.totalorder %s16, 0
    %p137 = por %p135, %p136
    %p138 = scmp.ne.s32.totalorder %s124, %s125
    %p139 = scmp.eq.s32.totalorder %s17, 15
    %p140 = por %p138, %p139
    %p142 = scmp.ne.s32.totalorder %s125, %s141
    %p143 = scmp.eq.s32.totalorder %s17, 0
    %p144 = por %p142, %p143
    %s146 = sadd.s32 %s145, 1
    %p149 = scmp.eq.s32.totalorder %s11, 15
    %p150 = scmp.ne.s32.totalorder %s145, %s147
    %p151 = scmp.eq.s32.totalorder %s11, 0
    %p152 = por %p150, %p151
    %p153 = scmp.ne.s32.totalorder %s145, %s147
    %p154 = scmp.eq.s32.totalorder %s16, 15
    %p155 = por %p153, %p154
    %p156 = scmp.ne.s32.totalorder %s147, %s148
    %p157 = scmp.eq.s32.totalorder %s16, 0
    %p158 = por %p156, %p157
    %p159 = scmp.ne.s32.totalorder %s147, %s148
    %p160 = scmp.eq.s32.totalorder %s17, 15
    %p161 = por %p159, %p160
    %p163 = scmp.ne.s32.totalorder %s148, %s162
    %p164 = scmp.eq.s32.totalorder %s17, 0
    %p165 = por %p163, %p164
    %p166 = scmp.le.s32.totalorder 1, %s11
    %p167 = scmp.lt.s32.totalorder %s11, 17
    %p168 = pnand %p166, %p167
    %p169 = pneg %p168
    // Predicated region
    $region9: #{discriminator_forward.9} parent=5 // pred_check
      _
    $region10: #{discriminator_forward.9} parent=5 // pred_check_branch
      %171 = sbr.rel (%p168) target = $region12
    $region11: #{discriminator_forward.9} parent=5 // pred_region
      %s172 = ssub.s32 %s11, 1
      // Predicated region
      $region13: #{discriminator_forward.9} parent=11 // pred_check
        %p173 = pneg %p109
      $region14: #{discriminator_forward.9} parent=11 // pred_check_branch
        %175 = sbr.rel (%p173) target = $region16
      $region15: #{discriminator_forward.9} parent=11 // pred_region
        _
      $region16: #{discriminator_forward.9} parent=11 // pred_fallthru
        _
    $region12: #{discriminator_forward.9} parent=5 // pred_fallthru
      _
    %p176 = scmp.lt.s32.totalorder %s11, 16
    // Predicated region
    $region17: #{discriminator_forward.9} parent=5 // pred_check
      %p177 = pneg %p176
    $region18: #{discriminator_forward.9} parent=5 // pred_check_branch
      %179 = sbr.rel (%p177) target = $region20
    $region19: #{discriminator_forward.9} parent=5 // pred_region
      // Predicated region
      $region21: #{discriminator_forward.9} parent=19 // pred_check
        %p180 = pneg %p56
      $region22: #{discriminator_forward.9} parent=19 // pred_check_branch
        %182 = sbr.rel (%p180) target = $region24
      $region23: #{discriminator_forward.9} parent=19 // pred_region
        %s183 = smul.u32 %s19, 2
        %s184 = sadd.s32 %s183, %s20
        %p185 = scmp.lt.s32.totalorder %s184, 9
        %s186 = scalar_select %p185, %s184, 9
        %p187 = scmp.lt.s32.totalorder %s18, 0
        %s188 = scalar_select %p187, %s18, 0
        %s189 = smul.addr %s188, 2
        %s190 = smul.addr %s186, 2
        %s191 = sadd.s32 %s189, %s190
        %s192 = smul.addr %s191, 4
        %s193 = scalar_lea.vmem %s0, %s192
        %s194 = smul.u32 %s19, 2
        %s195 = sadd.s32 %s194, %s20
      $region24: #{discriminator_forward.9} parent=19 // pred_fallthru
        _
      // Predicated region
      $region25: #{discriminator_forward.9} parent=19 // pred_check
        %p196 = pneg %p82
      $region26: #{discriminator_forward.9} parent=19 // pred_check_branch
        %198 = sbr.rel (%p196) target = $region28
      $region27: #{discriminator_forward.9} parent=19 // pred_region
        %p199 = scmp.lt.s32.totalorder %s20, 3
        %s200 = scalar_select %p199, %s20, 3
        %s201 = smul.addr %s200, 32
        %s202 = smul.addr %s201, 4
        %s203 = scalar_lea.vmem %s1, %s202
      $region28: #{discriminator_forward.9} parent=19 // pred_fallthru
        _
    $region20: #{discriminator_forward.9} parent=5 // pred_fallthru
      _
    %p204 = scmp.le.s32.totalorder 1, %s11
    %p205 = scmp.lt.s32.totalorder %s11, 17
    %p206 = pnand %p204, %p205
    %p207 = pneg %p206
    // Predicated region
    $region29: #{discriminator_forward.9} parent=5 // pred_check
      _
    $region30: #{discriminator_forward.9} parent=5 // pred_check_branch
      %209 = sbr.rel (%p206) target = $region32
    $region31: #{discriminator_forward.9} parent=5 // pred_region
      %s210 = ssub.s32 %s11, 1
      %s211 = smul.u32 %s22, 2
      %s212 = sadd.s32 %s211, %s23
      %p213 = scmp.lt.s32.totalorder %s212, 9
      %s214 = scalar_select %p213, %s212, 9
      %p215 = scmp.lt.s32.totalorder %s21, 0
      %s216 = scalar_select %p215, %s21, 0
      %s217 = smul.addr %s216, 2
      %s218 = smul.addr %s214, 2
      %s219 = sadd.s32 %s217, %s218
      %s220 = smul.addr %s219, 4
      %s221 = scalar_lea.vmem %s0, %s220
      %p222 = pneg %p62
      %p223 = pneg %p59
      %p224 = scmp.lt.s32.totalorder %s23, 3
      %s225 = scalar_select %p224, %s23, 3
      %s226 = smul.addr %s225, 32
      %s227 = smul.addr %s226, 4
      %s228 = scalar_lea.vmem %s1, %s227
      %p229 = pneg %p88
      %p230 = pneg %p85
      %p231 = pneg %p109
      %p232 = pneg %p106
      %p233 = pneg %p137
      %p234 = pneg %p134
      %p235 = scmp.lt.s32.totalorder %s22, 3
      %s236 = scalar_select %p235, %s22, 3
      %p237 = scmp.lt.s32.totalorder %s21, 0
      %s238 = scalar_select %p237, %s21, 0
      %s239 = sadd.s32 %s238, %s236
      %s240 = smul.addr %s239, 8
      %s241 = scalar_lea.vmem %s3, %s240
      %p242 = pneg %p158
      %p243 = pneg %p155
      %s244 = smul.u32 %s22, 2
      %s245 = sadd.s32 %s244, %s23
      %p246 = scmp.lt.s32.totalorder %s245, 9
      %s247 = scalar_select %p246, %s245, 9
      %p248 = scmp.lt.s32.totalorder %s21, 0
      %s249 = scalar_select %p248, %s21, 0
      %s250 = smul.addr %s249, 2
      %s251 = smul.addr %s247, 2
      %s252 = sadd.s32 %s250, %s251
      %s253 = smul.addr %s252, 4
      %s254 = scalar_lea.vmem %s0, %s253
      %s255 = smul.u32 %s22, 2
      %s256 = sadd.s32 %s255, %s23
      %p257 = scmp.lt.s32.totalorder %s23, 3
      %s258 = scalar_select %p257, %s23, 3
      %s259 = smul.addr %s258, 32
      %s260 = smul.addr %s259, 4
      %s261 = scalar_lea.vmem %s1, %s260
      %p262 = scmp.lt.s32.totalorder %s22, 3
      %s263 = scalar_select %p262, %s22, 3
      %p264 = scmp.lt.s32.totalorder %s21, 0
      %s265 = scalar_select %p264, %s21, 0
      %s266 = sadd.s32 %s265, %s263
      %s267 = smul.addr %s266, 8
      %s268 = scalar_lea.vmem %s3, %s267
      %p270 = scmp.eq.s32.totalorder %s23, 0
      // Predicated region
      $region33: #{discriminator_forward.9} parent=31 // pred_check
        %p271 = pneg %p270
      $region34: #{discriminator_forward.9} parent=31 // pred_check_branch
        %273 = sbr.rel (%p271) target = $region36
      $region35: #{discriminator_forward.9} parent=31 // pred_region
        %274 = vst [vmem:[#allocation2] sm:$0xff] 0.0
      $region36: #{discriminator_forward.9} parent=31 // pred_fallthru
        _
      %v275 = vld [vmem:[#allocation2] sm:$0xff]
      %v276 = vld [vmem:[%s254] sm:$0xff]
      %v277 = vld [vmem:[%s261] sm:$0xf]
      %v278 = vld [vmem:[%s261 + $0x4] sm:$0xf]
      %v279 = vld [vmem:[%s261 + $0x8] sm:$0xf]
      %v280 = vld [vmem:[%s261 + $0xc] sm:$0xf]
      %v281 = vld [vmem:[%s261 + $0x10] sm:$0xf]
      %v282 = vld [vmem:[%s261 + $0x14] sm:$0xf]
      %v283 = vld [vmem:[%s261 + $0x18] sm:$0xf]
      %v284 = vld [vmem:[%s261 + $0x1c] sm:$0xf]
      %v285 = vld [vmem:[%s261 + $0x20] sm:$0xf]
      %v286 = vld [vmem:[%s261 + $0x24] sm:$0xf]
      %v287 = vld [vmem:[%s261 + $0x28] sm:$0xf]
      %v288 = vld [vmem:[%s261 + $0x2c] sm:$0xf]
      %v289 = vld [vmem:[%s261 + $0x30] sm:$0xf]
      %v290 = vld [vmem:[%s261 + $0x34] sm:$0xf]
      %v291 = vld [vmem:[%s261 + $0x38] sm:$0xf]
      %v292 = vld [vmem:[%s261 + $0x3c] sm:$0xf]
      %v293 = vld [vmem:[%s261 + $0x40] sm:$0xf]
      %v294 = vld [vmem:[%s261 + $0x44] sm:$0xf]
      %v295 = vld [vmem:[%s261 + $0x48] sm:$0xf]
      %v296 = vld [vmem:[%s261 + $0x4c] sm:$0xf]
      %v297 = vld [vmem:[%s261 + $0x50] sm:$0xf]
      %v298 = vld [vmem:[%s261 + $0x54] sm:$0xf]
      %v299 = vld [vmem:[%s261 + $0x58] sm:$0xf]
      %v300 = vld [vmem:[%s261 + $0x5c] sm:$0xf]
      %v301 = vld [vmem:[%s261 + $0x60] sm:$0xf]
      %v302 = vld [vmem:[%s261 + $0x64] sm:$0xf]
      %v303 = vld [vmem:[%s261 + $0x68] sm:$0xf]
      %v304 = vld [vmem:[%s261 + $0x6c] sm:$0xf]
      %v305 = vld [vmem:[%s261 + $0x70] sm:$0xf]
      %v306 = vld [vmem:[%s261 + $0x74] sm:$0xf]
      %v307 = vld [vmem:[%s261 + $0x78] sm:$0xf]
      %v308 = vld [vmem:[%s261 + $0x7c] sm:$0xf]
      %v310 = vunpack.c.l.b16 %v276
      %v311 = vunpack.c.h.b16 %v276
      %v312 = vpack.c.b16 %v310, %v310
      %v313 = vpack.c.b16 %v311, %v311
      %v348 = vunpack.c.l.b16 %v277
      %v349 = vunpack.c.l.b16 %v278
      %v350 = vunpack.c.l.b16 %v279
      %v351 = vunpack.c.l.b16 %v280
      %v352 = vunpack.c.l.b16 %v281
      %v353 = vunpack.c.l.b16 %v282
      %v354 = vunpack.c.l.b16 %v283
      %v355 = vunpack.c.l.b16 %v284
      %v356 = vunpack.c.l.b16 %v285
      %v357 = vunpack.c.l.b16 %v286
      %v358 = vunpack.c.l.b16 %v287
      %v359 = vunpack.c.l.b16 %v288
      %v360 = vunpack.c.l.b16 %v289
      %v361 = vunpack.c.l.b16 %v290
      %v362 = vunpack.c.l.b16 %v291
      %v363 = vunpack.c.l.b16 %v292
      %v364 = vunpack.c.l.b16 %v293
      %v365 = vunpack.c.l.b16 %v294
      %v366 = vunpack.c.l.b16 %v295
      %v367 = vunpack.c.l.b16 %v296
      %v368 = vunpack.c.l.b16 %v297
      %v369 = vunpack.c.l.b16 %v298
      %v370 = vunpack.c.l.b16 %v299
      %v371 = vunpack.c.l.b16 %v300
      %v372 = vunpack.c.l.b16 %v301
      %v373 = vunpack.c.l.b16 %v302
      %v374 = vunpack.c.l.b16 %v303
      %v375 = vunpack.c.l.b16 %v304
      %v376 = vunpack.c.l.b16 %v305
      %v377 = vunpack.c.l.b16 %v306
      %v378 = vunpack.c.l.b16 %v307
      %v379 = vunpack.c.l.b16 %v308
      %v380 = vpack.c.b16 %v349, %v348
      %v381 = vpack.c.b16 %v351, %v350
      %v382 = vpack.c.b16 %v353, %v352
      %v383 = vpack.c.b16 %v355, %v354
      %v384 = vpack.c.b16 %v357, %v356
      %v385 = vpack.c.b16 %v359, %v358
      %v386 = vpack.c.b16 %v361, %v360
      %v387 = vpack.c.b16 %v363, %v362
      %v388 = vpack.c.b16 %v365, %v364
      %v389 = vpack.c.b16 %v367, %v366
      %v390 = vpack.c.b16 %v369, %v368
      %v391 = vpack.c.b16 %v371, %v370
      %v392 = vpack.c.b16 %v373, %v372
      %v393 = vpack.c.b16 %v375, %v374
      %v394 = vpack.c.b16 %v377, %v376
      %v395 = vpack.c.b16 %v379, %v378
      %412 = vmatprep.subr.bf16.mxu0 0
      %413 = vmatpush1.bf16.msra.mxu0 %v387
      %414 = vmatprep.subr.bf16.mxu0 0
      %415 = vmatpush1.bf16.msra.mxu0 %v386
      %416 = vmatprep.subr.bf16.mxu0 0
      %417 = vmatpush1.bf16.msra.mxu0 %v385
      %418 = vmatprep.subr.bf16.mxu0 0
      %419 = vmatpush1.bf16.msra.mxu0 %v384
      %420 = vmatprep.subr.bf16.mxu0 0
      %421 = vmatpush1.bf16.msra.mxu0 %v383
      %422 = vmatprep.subr.bf16.mxu0 0
      %423 = vmatpush1.bf16.msra.mxu0 %v382
      %424 = vmatprep.subr.bf16.mxu0 0
      %425 = vmatpush1.bf16.msra.mxu0 %v381
      %426 = vmatprep.subr.bf16.mxu0 0
      %427 = vmatpush1.bf16.msra.mxu0 %v380
      %428 = vmatprep.subr.bf16.mxu0 0
      %429 = vmatpush2.bf16.msra.mxu0 %v395
      %430 = vmatprep.subr.bf16.mxu0 0
      %431 = vmatpush2.bf16.msra.mxu0 %v394
      %432 = vmatprep.subr.bf16.mxu0 0
      %433 = vmatpush2.bf16.msra.mxu0 %v393
      %434 = vmatprep.subr.bf16.mxu0 0
      %435 = vmatpush2.bf16.msra.mxu0 %v392
      %436 = vmatprep.subr.bf16.mxu0 0
      %437 = vmatpush2.bf16.msra.mxu0 %v391
      %438 = vmatprep.subr.bf16.mxu0 0
      %439 = vmatpush2.bf16.msra.mxu0 %v390
      %440 = vmatprep.subr.bf16.mxu0 0
      %441 = vmatpush2.bf16.msra.mxu0 %v389
      %442 = vmatprep.subr.bf16.mxu0 0
      %443 = vmatpush2.bf16.msra.mxu0 %v388
      %444 = vmatprep.mubr.bf16.mxu0 %v313
      %445 = vmatmul.mubr.bf16.gmra.mxu0 %v312
      %v446 = vpop.f32.mrf.mxu0
      %v447 = vadd.f32 0.0, %v446
      %v448 = vpop.f32.mrf.mxu0
      %v449 = vpop.f32.mrf.mxu0
      %v450 = vpop.f32.mrf.mxu0
      %451 = vdwg.mxu0
      %v452 = vadd.f32 %v275, %v447
      %453 = vst [vmem:[#allocation2] sm:$0xff] %v452
      %p454 = scmp.eq.s32.totalorder %s21, 0
      %p455 = scmp.eq.s32.totalorder %s22, 0
      %p456 = pnand %p454, %p455
      %p457 = pneg %p456
      %p458 = pnand %p457, %p270
      %p459 = pneg %p458
      // Predicated region
      $region37: #{discriminator_forward.9} parent=31 // pred_check
        _
      $region38: #{discriminator_forward.9} parent=31 // pred_check_branch
        %461 = sbr.rel (%p458) target = $region40
      $region39: #{discriminator_forward.9} parent=31 // pred_region
        %462 = vst [vmem:[%s4] sm:$0x3] 0.0
      $region40: #{discriminator_forward.9} parent=31 // pred_fallthru
        _
      %p463 = scmp.eq.s32.totalorder %s23, 3
      // Predicated region
      $region41: #{discriminator_forward.9} parent=31 // pred_check
        %p464 = pneg %p463
      $region42: #{discriminator_forward.9} parent=31 // pred_check_branch
        %466 = sbr.rel (%p464) target = $region44
      $region43: #{discriminator_forward.9} parent=31 // pred_region
        %v467 = vld [vmem:[#allocation2] sm:$0xff]
        %468 = vst [vmem:[%s268] sm:$0xff] %v467
        %v469 = vrot.slane %v467, 4
        %v470 = vadd.f32 %v467, %v469
        %v471 = vrot.slane %v470, 2
        %v472 = vadd.f32 %v470, %v471
        %v473 = vrot.slane %v472, 1
        %v474 = vadd.f32 %v472, %v473
        %v475 = vmul.f32 %v467, %v467
        %v476 = vrot.slane %v475, 4
        %v477 = vadd.f32 %v475, %v476
        %v478 = vrot.slane %v477, 2
        %v479 = vadd.f32 %v477, %v478
        %v480 = vrot.slane %v479, 1
        %v481 = vadd.f32 %v479, %v480
        %v482 = vld [vmem:[%s4] sm:$0x3]
        %vm483 = vcmask 1040384
        %v484 = vsel %vm483, %v474, %v481
        %v485 = vadd.f32 %v482, %v484
        %486 = vst [vmem:[%s4] sm:$0x3] %v485
      $region44: #{discriminator_forward.9} parent=31 // pred_fallthru
        _
      %p487 = scmp.lt.s32.totalorder %s22, 3
      %s488 = scalar_select %p487, %s22, 3
      %p489 = scmp.lt.s32.totalorder %s21, 0
      %s490 = scalar_select %p489, %s21, 0
      %s491 = sadd.s32 %s490, %s488
      %s492 = smul.addr %s491, 8
      %s493 = scalar_lea.vmem %s3, %s492
      // Predicated region
      $region45: #{discriminator_forward.9} parent=31 // pred_check
        %p494 = pneg %p134
      $region46: #{discriminator_forward.9} parent=31 // pred_check_branch
        %496 = sbr.rel (%p494) target = $region48
      $region47: #{discriminator_forward.9} parent=31 // pred_region
        _
      $region48: #{discriminator_forward.9} parent=31 // pred_fallthru
        _
      // Predicated region
      $region49: #{discriminator_forward.9} parent=31 // pred_check
        %p497 = pneg %p155
      $region50: #{discriminator_forward.9} parent=31 // pred_check_branch
        %499 = sbr.rel (%p497) target = $region52
      $region51: #{discriminator_forward.9} parent=31 // pred_region
        _
      $region52: #{discriminator_forward.9} parent=31 // pred_fallthru
        _
      // Predicated region
      $region53: #{discriminator_forward.9} parent=31 // pred_check
        %p500 = pneg %p155
      $region54: #{discriminator_forward.9} parent=31 // pred_check_branch
        %502 = sbr.rel (%p500) target = $region56
      $region55: #{discriminator_forward.9} parent=31 // pred_region
        _
      $region56: #{discriminator_forward.9} parent=31 // pred_fallthru
        _
    $region32: #{discriminator_forward.9} parent=5 // pred_fallthru
      _
    %p503 = scmp.le.s32.totalorder 2, %s11
    // Predicated region
    $region57: #{discriminator_forward.9} parent=5 // pred_check
      %p504 = pneg %p503
    $region58: #{discriminator_forward.9} parent=5 // pred_check_branch
      %506 = sbr.rel (%p504) target = $region60
    $region59: #{discriminator_forward.9} parent=5 // pred_region
      %s507 = ssub.s32 %s11, 2
      // Predicated region
      $region61: #{discriminator_forward.9} parent=59 // pred_check
        %p508 = pneg %p140
      $region62: #{discriminator_forward.9} parent=59 // pred_check_branch
        %510 = sbr.rel (%p508) target = $region64
      $region63: #{discriminator_forward.9} parent=59 // pred_region
        %p511 = scmp.lt.s32.totalorder %s25, 3
        %s512 = scalar_select %p511, %s25, 3
        %p513 = scmp.lt.s32.totalorder %s24, 0
        %s514 = scalar_select %p513, %s24, 0
        %s515 = sadd.s32 %s514, %s512
        %s516 = smul.addr %s515, 8
        %s517 = scalar_lea.vmem %s3, %s516
      $region64: #{discriminator_forward.9} parent=59 // pred_fallthru
        _
    $region60: #{discriminator_forward.9} parent=5 // pred_fallthru
      _
  $region6: #{discriminator_forward.9} parent=0 // loop_footer
    %s15 = sadd.s32 1, %s11
  $region7: #{discriminator_forward.9} parent=0 // loop_footer_branch
    %10 = sbr.rel target = $region3
  $region8: #{discriminator_forward.9} parent=0 // loop_exit
    _

// kernel: discriminator_forward.10
$region0: #{discriminator_forward.10}
  #allocation0 [shape = 'u32[]', space=smem, size = 0x4, offset = 0x4, fixed_abs, tag = 'smem constant byte address 0x4 - core index']
  #allocation1 [shape = 'u32[144,128]{1,0:T(1,128)}', space=vmem, size = 0x12000, scoped, tag = 'internal scratch']
  %s0 = inlined_call_operand.vmem [shape: f32[4,8,128], index: 0, kind: input, shape index: {}]
  %s1 = inlined_call_operand.vmem [shape: f32[2,128], index: 1, kind: input, shape index: {}]
  %s2 = inlined_call_operand.vmem [shape: f32[1,128], index: 2, kind: input, shape index: {}]
  %s3 = inlined_call_operand.vmem [shape: f32[1,128], index: 3, kind: input, shape index: {}]
  %s4 = inlined_call_operand.vmem [shape: bf16[4,8,128], index: 4, kind: output, shape index: {}]
  %s5 = sld [smem:[#allocation0]]
  $region49: #{discriminator_forward.10} parent=0
    _
  %s7 = ssub.s32 1, %s5
  %s8 = scalar_select 0, %s7, %s5
  loop: start=0, step=1, limit=6
  $region2: #{discriminator_forward.10} parent=0 // loop_pre_header
    _
  $region3: #{discriminator_forward.10} parent=0 // loop_header
    %s10 = sphi 0, %s14
    %p11 = scmp.ge.s32.totalorder %s10, 6
    %s17 = sphi 0, %s29
    %s18 = sphi 0, %s25
    %s19 = sphi 0, %s17
    %s20 = sphi 0, %s18
    %s21 = sphi 0, %s19
    %s22 = sphi 0, %s20
    %s34 = sphi 0, %s36
    %s37 = sphi 0, %s34
    %s38 = sphi 0, %s37
    %s54 = sphi 0, %s38
    %s58 = sphi 0, %s58
    %s60 = sphi 0, %s58
    %s61 = sphi 0, %s60
    %s75 = sphi 0, %s61
    %s79 = sphi 0, %s79
    %s81 = sphi 0, %s79
    %s82 = sphi 0, %s81
    %s96 = sphi 0, %s82
    %s100 = sphi 0, %s100
    %s102 = sphi 0, %s100
    %s103 = sphi 0, %s102
    %s117 = sphi 0, %s103
    %s125 = sphi 0, %s127
    %s128 = sphi 0, %s125
    %s129 = sphi 0, %s128
    %s145 = sphi 0, %s129
  $region4: #{discriminator_forward.10} parent=0 // loop_header_branch
    %13 = sbr.rel (%p11) target = $region8
  $region5: #{discriminator_forward.10} parent=0 // loop_body
    %s15 = ssub.s32 %s10, 1
    %s16 = ssub.s32 %s10, 2
    %s23 = sadd.s32 1, %s18
    %p24 = scmp.ge.s32.totalorder %s23, 1
    %s25 = scalar_select %p24, 0, %s23
    %s26 = sadd.s32 1, %s17
    %s27 = scalar_select %p24, %s26, %s17
    %p28 = scmp.ge.s32.totalorder %s27, 4
    %s29 = scalar_select %p28, 0, %s27
    %s30 = ssub.s32 %s17, %s29
    %s31 = ssub.s32 %s18, %s25
    %s32 = sor.u32 %s30, %s31
    %p33 = scmp.eq.s32.totalorder %s32, 0
    %s35 = sadd.s32 %s34, 1
    %s36 = scalar_select %p33, %s34, %s35
    %p39 = pneg %p33
    %p40 = scmp.eq.s32.totalorder %s10, 3
    %p41 = por %p39, %p40
    %p42 = scmp.ne.s32.totalorder %s34, %s37
    %p43 = scmp.eq.s32.totalorder %s10, 0
    %p44 = por %p42, %p43
    %p45 = scmp.ne.s32.totalorder %s34, %s37
    %p46 = scmp.eq.s32.totalorder %s15, 3
    %p47 = por %p45, %p46
    %p48 = scmp.ne.s32.totalorder %s37, %s38
    %p49 = scmp.eq.s32.totalorder %s15, 0
    %p50 = por %p48, %p49
    %p51 = scmp.ne.s32.totalorder %s37, %s38
    %p52 = scmp.eq.s32.totalorder %s16, 3
    %p53 = por %p51, %p52
    %p55 = scmp.ne.s32.totalorder %s38, %s54
    %p56 = scmp.eq.s32.totalorder %s16, 0
    %p57 = por %p55, %p56
    %s59 = sadd.s32 %s58, 1
    %p62 = scmp.eq.s32.totalorder %s10, 3
    %p63 = scmp.ne.s32.totalorder %s58, %s60
    %p64 = scmp.eq.s32.totalorder %s10, 0
    %p65 = por %p63, %p64
    %p66 = scmp.ne.s32.totalorder %s58, %s60
    %p67 = scmp.eq.s32.totalorder %s15, 3
    %p68 = por %p66, %p67
    %p69 = scmp.ne.s32.totalorder %s60, %s61
    %p70 = scmp.eq.s32.totalorder %s15, 0
    %p71 = por %p69, %p70
    %p72 = scmp.ne.s32.totalorder %s60, %s61
    %p73 = scmp.eq.s32.totalorder %s16, 3
    %p74 = por %p72, %p73
    %p76 = scmp.ne.s32.totalorder %s61, %s75
    %p77 = scmp.eq.s32.totalorder %s16, 0
    %p78 = por %p76, %p77
    %s80 = sadd.s32 %s79, 1
    %p83 = scmp.eq.s32.totalorder %s10, 3
    %p84 = scmp.ne.s32.totalorder %s79, %s81
    %p85 = scmp.eq.s32.totalorder %s10, 0
    %p86 = por %p84, %p85
    %p87 = scmp.ne.s32.totalorder %s79, %s81
    %p88 = scmp.eq.s32.totalorder %s15, 3
    %p89 = por %p87, %p88
    %p90 = scmp.ne.s32.totalorder %s81, %s82
    %p91 = scmp.eq.s32.totalorder %s15, 0
    %p92 = por %p90, %p91
    %p93 = scmp.ne.s32.totalorder %s81, %s82
    %p94 = scmp.eq.s32.totalorder %s16, 3
    %p95 = por %p93, %p94
    %p97 = scmp.ne.s32.totalorder %s82, %s96
    %p98 = scmp.eq.s32.totalorder %s16, 0
    %p99 = por %p97, %p98
    %s101 = sadd.s32 %s100, 1
    %p104 = scmp.eq.s32.totalorder %s10, 3
    %p105 = scmp.ne.s32.totalorder %s100, %s102
    %p106 = scmp.eq.s32.totalorder %s10, 0
    %p107 = por %p105, %p106
    %p108 = scmp.ne.s32.totalorder %s100, %s102
    %p109 = scmp.eq.s32.totalorder %s15, 3
    %p110 = por %p108, %p109
    %p111 = scmp.ne.s32.totalorder %s102, %s103
    %p112 = scmp.eq.s32.totalorder %s15, 0
    %p113 = por %p111, %p112
    %p114 = scmp.ne.s32.totalorder %s102, %s103
    %p115 = scmp.eq.s32.totalorder %s16, 3
    %p116 = por %p114, %p115
    %p118 = scmp.ne.s32.totalorder %s103, %s117
    %p119 = scmp.eq.s32.totalorder %s16, 0
    %p120 = por %p118, %p119
    %s121 = ssub.s32 %s17, %s29
    %s122 = ssub.s32 %s18, %s25
    %s123 = sor.u32 %s121, %s122
    %p124 = scmp.eq.s32.totalorder %s123, 0
    %s126 = sadd.s32 %s125, 1
    %s127 = scalar_select %p124, %s125, %s126
    %p130 = pneg %p124
    %p131 = scmp.eq.s32.totalorder %s10, 3
    %p132 = por %p130, %p131
    %p133 = scmp.ne.s32.totalorder %s125, %s128
    %p134 = scmp.eq.s32.totalorder %s10, 0
    %p135 = por %p133, %p134
    %p136 = scmp.ne.s32.totalorder %s125, %s128
    %p137 = scmp.eq.s32.totalorder %s15, 3
    %p138 = por %p136, %p137
    %p139 = scmp.ne.s32.totalorder %s128, %s129
    %p140 = scmp.eq.s32.totalorder %s15, 0
    %p141 = por %p139, %p140
    %p142 = scmp.ne.s32.totalorder %s128, %s129
    %p143 = scmp.eq.s32.totalorder %s16, 3
    %p144 = por %p142, %p143
    %p146 = scmp.ne.s32.totalorder %s129, %s145
    %p147 = scmp.eq.s32.totalorder %s16, 0
    %p148 = por %p146, %p147
    %p149 = scmp.le.s32.totalorder 1, %s10
    %p150 = scmp.lt.s32.totalorder %s10, 5
    %p151 = pnand %p149, %p150
    %p152 = pneg %p151
    // Predicated region
    $region9: #{discriminator_forward.10} parent=5 // pred_check
      _
    $region10: #{discriminator_forward.10} parent=5 // pred_check_branch
      %154 = sbr.rel (%p151) target = $region12
    $region11: #{discriminator_forward.10} parent=5 // pred_region
      %s155 = ssub.s32 %s10, 1
      // Predicated region
      $region13: #{discriminator_forward.10} parent=11 // pred_check
        %p156 = pneg %p71
      $region14: #{discriminator_forward.10} parent=11 // pred_check_branch
        %158 = sbr.rel (%p156) target = $region16
      $region15: #{discriminator_forward.10} parent=11 // pred_region
        _
      $region16: #{discriminator_forward.10} parent=11 // pred_fallthru
        _
      // Predicated region
      $region17: #{discriminator_forward.10} parent=11 // pred_check
        %p159 = pneg %p92
      $region18: #{discriminator_forward.10} parent=11 // pred_check_branch
        %161 = sbr.rel (%p159) target = $region20
      $region19: #{discriminator_forward.10} parent=11 // pred_region
        _
      $region20: #{discriminator_forward.10} parent=11 // pred_fallthru
        _
      // Predicated region
      $region21: #{discriminator_forward.10} parent=11 // pred_check
        %p162 = pneg %p113
      $region22: #{discriminator_forward.10} parent=11 // pred_check_branch
        %164 = sbr.rel (%p162) target = $region24
      $region23: #{discriminator_forward.10} parent=11 // pred_region
        _
      $region24: #{discriminator_forward.10} parent=11 // pred_fallthru
        _
    $region12: #{discriminator_forward.10} parent=5 // pred_fallthru
      _
    %p165 = scmp.lt.s32.totalorder %s10, 4
    // Predicated region
    $region25: #{discriminator_forward.10} parent=5 // pred_check
      %p166 = pneg %p165
    $region26: #{discriminator_forward.10} parent=5 // pred_check_branch
      %168 = sbr.rel (%p166) target = $region28
    $region27: #{discriminator_forward.10} parent=5 // pred_region
      // Predicated region
      $region29: #{discriminator_forward.10} parent=27 // pred_check
        %p169 = pneg %p44
      $region30: #{discriminator_forward.10} parent=27 // pred_check_branch
        %171 = sbr.rel (%p169) target = $region32
      $region31: #{discriminator_forward.10} parent=27 // pred_region
        %p172 = scmp.lt.s32.totalorder %s17, 3
        %s173 = scalar_select %p172, %s17, 3
        %p174 = scmp.lt.s32.totalorder %s18, 0
        %s175 = scalar_select %p174, %s18, 0
        %s176 = sadd.s32 %s175, %s173
        %s177 = smul.addr %s176, 8
        %s178 = scalar_lea.vmem %s0, %s177
      $region32: #{discriminator_forward.10} parent=27 // pred_fallthru
        _
    $region28: #{discriminator_forward.10} parent=5 // pred_fallthru
      _
    %p179 = scmp.le.s32.totalorder 1, %s10
    %p180 = scmp.lt.s32.totalorder %s10, 5
    %p181 = pnand %p179, %p180
    %p182 = pneg %p181
    // Predicated region
    $region33: #{discriminator_forward.10} parent=5 // pred_check
      _
    $region34: #{discriminator_forward.10} parent=5 // pred_check_branch
      %184 = sbr.rel (%p181) target = $region36
    $region35: #{discriminator_forward.10} parent=5 // pred_region
      %s185 = ssub.s32 %s10, 1
      %p186 = scmp.lt.s32.totalorder %s19, 3
      %s187 = scalar_select %p186, %s19, 3
      %p188 = scmp.lt.s32.totalorder %s20, 0
      %s189 = scalar_select %p188, %s20, 0
      %s190 = sadd.s32 %s189, %s187
      %s191 = smul.addr %s190, 8
      %s192 = scalar_lea.vmem %s0, %s191
      %p193 = pneg %p50
      %p194 = pneg %p47
      %p195 = pneg %p71
      %p196 = pneg %p68
      %p197 = pneg %p92
      %p198 = pneg %p89
      %p199 = pneg %p113
      %p200 = pneg %p110
      %p201 = pneg %p141
      %p202 = pneg %p138
      %p203 = scmp.lt.s32.totalorder %s19, 3
      %s204 = scalar_select %p203, %s19, 3
      %p205 = scmp.lt.s32.totalorder %s20, 0
      %s206 = scalar_select %p205, %s20, 0
      %s207 = sadd.s32 %s206, %s204
      %s208 = smul.addr %s207, 4
      %s209 = scalar_lea.vmem %s4, %s208
      %p210 = scmp.lt.s32.totalorder %s19, 3
      %s211 = scalar_select %p210, %s19, 3
      %p212 = scmp.lt.s32.totalorder %s20, 0
      %s213 = scalar_select %p212, %s20, 0
      %s214 = sadd.s32 %s213, %s211
      %s215 = smul.addr %s214, 8
      %s216 = scalar_lea.vmem %s0, %s215
      %p217 = scmp.lt.s32.totalorder %s19, 3
      %s218 = scalar_select %p217, %s19, 3
      %p219 = scmp.lt.s32.totalorder %s20, 0
      %s220 = scalar_select %p219, %s20, 0
      %s221 = sadd.s32 %s220, %s218
      %s222 = smul.addr %s221, 4
      %s223 = scalar_lea.vmem %s4, %s222
      %v224 = vld [vmem:[%s1] sm:$0x1]
      %v225 = vmul.f32 %v224, 0.03125
      %v226 = vld [vmem:[%s1 + $0x1] sm:$0x1]
      %v227 = vmul.f32 %v226, 0.03125
      %v228 = vmul.f32 %v225, %v225
      %v229 = vsub.f32 %v227, %v228
      %v230 = vmax.f32 %v229, 0.0
      %v231 = vld [vmem:[%s2] sm:$0x1]
      %v232 = vadd.f32 %v230, 1e-05
      %v233 = vrsqrt.pop %v232
      %v234 = vmul.f32 %v231, %v233
      %v235 = vld [vmem:[%s3] sm:$0x1]
      %v236 = vmul.f32 %v225, %v234
      %v237 = vsub.f32 %v235, %v236
      %v238 = vld [vmem:[%s216] sm:$0xff]
      %v240 = vlaneseq
      %v241 = vshrl.u32 %v240, 7
      %v242 = vsub.s32 0, %v241
      %v243 = vrot.slane %v234, %v242
      %v245 = vmul.f32 %v238, %v243
      %v247 = vlaneseq
      %v248 = vshrl.u32 %v247, 7
      %v249 = vsub.s32 0, %v248
      %v250 = vrot.slane %v237, %v249
      %v252 = vadd.f32 %v245, %v250
      %vm253 = vcmp.gt.f32.partialorder %v252, 0.0
      %v254 = vmul.f32 %v252, 0.2
      %v255 = vsel %vm253, %v252, %v254
      %v256 = vpack.c.bf16 %v255, %v255
      %257 = vst [vmem:[%s223] sm:$0xf] %v256
      %p258 = scmp.lt.s32.totalorder %s19, 3
      %s259 = scalar_select %p258, %s19, 3
      %p260 = scmp.lt.s32.totalorder %s20, 0
      %s261 = scalar_select %p260, %s20, 0
      %s262 = sadd.s32 %s261, %s259
      %s263 = smul.addr %s262, 4
      %s264 = scalar_lea.vmem %s4, %s263
      // Predicated region
      $region37: #{discriminator_forward.10} parent=35 // pred_check
        %p265 = pneg %p138
      $region38: #{discriminator_forward.10} parent=35 // pred_check_branch
        %267 = sbr.rel (%p265) target = $region40
      $region39: #{discriminator_forward.10} parent=35 // pred_region
        _
      $region40: #{discriminator_forward.10} parent=35 // pred_fallthru
        _
    $region36: #{discriminator_forward.10} parent=5 // pred_fallthru
      _
    %p268 = scmp.le.s32.totalorder 2, %s10
    // Predicated region
    $region41: #{discriminator_forward.10} parent=5 // pred_check
      %p269 = pneg %p268
    $region42: #{discriminator_forward.10} parent=5 // pred_check_branch
      %271 = sbr.rel (%p269) target = $region44
    $region43: #{discriminator_forward.10} parent=5 // pred_region
      %s272 = ssub.s32 %s10, 2
      // Predicated region
      $region45: #{discriminator_forward.10} parent=43 // pred_check
        %p273 = pneg %p144
      $region46: #{discriminator_forward.10} parent=43 // pred_check_branch
        %275 = sbr.rel (%p273) target = $region48
      $region47: #{discriminator_forward.10} parent=43 // pred_region
        %p276 = scmp.lt.s32.totalorder %s21, 3
        %s277 = scalar_select %p276, %s21, 3
        %p278 = scmp.lt.s32.totalorder %s22, 0
        %s279 = scalar_select %p278, %s22, 0
        %s280 = sadd.s32 %s279, %s277
        %s281 = smul.addr %s280, 4
        %s282 = scalar_lea.vmem %s4, %s281
      $region48: #{discriminator_forward.10} parent=43 // pred_fallthru
        _
    $region44: #{discriminator_forward.10} parent=5 // pred_fallthru
      _
  $region6: #{discriminator_forward.10} parent=0 // loop_footer
    %s14 = sadd.s32 1, %s10
  $region7: #{discriminator_forward.10} parent=0 // loop_footer_branch
    %9 = sbr.rel target = $region3
  $region8: #{discriminator_forward.10} parent=0 // loop_exit
    _

// kernel: discriminator_forward.11
$region0: #{discriminator_forward.11}
  #allocation0 [shape = 'u32[]', space=smem, size = 0x4, offset = 0x4, fixed_abs, tag = 'smem constant byte address 0x4 - core index']
  #allocation1 [shape = 'u32[144,128]{1,0:T(1,128)}', space=vmem, size = 0x12000, scoped, tag = 'internal scratch']
  #allocation2 [shape = 'f32[2,128]{1,0:T(2,128)}', space=vmem, size = 0x400, scoped, tag = 'scratch operand']
  %s0 = inlined_call_operand.vmem [shape: bf16[4,2,512], index: 0, kind: input, shape index: {}]
  %s1 = inlined_call_operand.vmem [shape: bf16[4,512,128], index: 1, kind: input, shape index: {}]
  %s2 = inlined_call_operand.vmem [shape: f32[1,128], index: 2, kind: input, shape index: {}]
  %s3 = inlined_call_operand.vmem [shape: f32[1,2,128], index: 3, kind: output, shape index: {}]
  %s4 = sld [smem:[#allocation0]]
  $region53: #{discriminator_forward.11} parent=0
    _
  %s6 = ssub.s32 1, %s4
  %s7 = scalar_select 0, %s6, %s4
  loop: start=0, step=1, limit=6
  $region2: #{discriminator_forward.11} parent=0 // loop_pre_header
    _
  $region3: #{discriminator_forward.11} parent=0 // loop_header
    %s9 = sphi 0, %s13
    %p10 = scmp.ge.s32.totalorder %s9, 6
    %s16 = sphi 0, %s35
    %s17 = sphi 0, %s31
    %s18 = sphi 0, %s27
    %s19 = sphi 0, %s16
    %s20 = sphi 0, %s17
    %s21 = sphi 0, %s18
    %s22 = sphi 0, %s19
    %s23 = sphi 0, %s20
    %s24 = sphi 0, %s21
    %s42 = sphi 0, %s44
    %s45 = sphi 0, %s42
    %s46 = sphi 0, %s45
    %s62 = sphi 0, %s46
    %s68 = sphi 0, %s70
    %s71 = sphi 0, %s68
    %s72 = sphi 0, %s71
    %s88 = sphi 0, %s72
    %s92 = sphi 0, %s92
    %s94 = sphi 0, %s92
    %s95 = sphi 0, %s94
    %s109 = sphi 0, %s95
    %s117 = sphi 0, %s119
    %s120 = sphi 0, %s117
    %s121 = sphi 0, %s120
    %s137 = sphi 0, %s121
  $region4: #{discriminator_forward.11} parent=0 // loop_header_branch
    %12 = sbr.rel (%p10) target = $region8
  $region5: #{discriminator_forward.11} parent=0 // loop_body
    %s14 = ssub.s32 %s9, 1
    %s15 = ssub.s32 %s9, 2
    %s25 = sadd.s32 1, %s18
    %p26 = scmp.ge.s32.totalorder %s25, 4
    %s27 = scalar_select %p26, 0, %s25
    %s28 = sadd.s32 1, %s17
    %s29 = scalar_select %p26, %s28, %s17
    %p30 = scmp.ge.s32.totalorder %s29, 1
    %s31 = scalar_select %p30, 0, %s29
    %s32 = sadd.s32 1, %s16
    %s33 = scalar_select %p30, %s32, %s16
    %p34 = scmp.ge.s32.totalorder %s33, 1
    %s35 = scalar_select %p34, 0, %s33
    %s36 = sadd.s32 %s17, %s18
    %s37 = sadd.s32 %s31, %s27
    %s38 = ssub.s32 %s36, %s37
    %s39 = ssub.s32 %s16, %s35
    %s40 = sor.u32 %s38, %s39
    %p41 = scmp.eq.s32.totalorder %s40, 0
    %s43 = sadd.s32 %s42, 1
    %s44 = scalar_select %p41, %s42, %s43
    %p47 = pneg %p41
    %p48 = scmp.eq.s32.totalorder %s9, 3
    %p49 = por %p47, %p48
    %p50 = scmp.ne.s32.totalorder %s42, %s45
    %p51 = scmp.eq.s32.totalorder %s9, 0
    %p52 = por %p50, %p51
    %p53 = scmp.ne.s32.totalorder %s42, %s45
    %p54 = scmp.eq.s32.totalorder %s14, 3
    %p55 = por %p53, %p54
    %p56 = scmp.ne.s32.totalorder %s45, %s46
    %p57 = scmp.eq.s32.totalorder %s14, 0
    %p58 = por %p56, %p57
    %p59 = scmp.ne.s32.totalorder %s45, %s46
    %p60 = scmp.eq.s32.totalorder %s15, 3
    %p61 = por %p59, %p60
    %p63 = scmp.ne.s32.totalorder %s46, %s62
    %p64 = scmp.eq.s32.totalorder %s15, 0
    %p65 = por %p63, %p64
    %s66 = ssub.s32 %s18, %s27
    %p67 = scmp.eq.s32.totalorder %s66, 0
    %s69 = sadd.s32 %s68, 1
    %s70 = scalar_select %p67, %s68, %s69
    %p73 = pneg %p67
    %p74 = scmp.eq.s32.totalorder %s9, 3
    %p75 = por %p73, %p74
    %p76 = scmp.ne.s32.totalorder %s68, %s71
    %p77 = scmp.eq.s32.totalorder %s9, 0
    %p78 = por %p76, %p77
    %p79 = scmp.ne.s32.totalorder %s68, %s71
    %p80 = scmp.eq.s32.totalorder %s14, 3
    %p81 = por %p79, %p80
    %p82 = scmp.ne.s32.totalorder %s71, %s72
    %p83 = scmp.eq.s32.totalorder %s14, 0
    %p84 = por %p82, %p83
    %p85 = scmp.ne.s32.totalorder %s71, %s72
    %p86 = scmp.eq.s32.totalorder %s15, 3
    %p87 = por %p85, %p86
    %p89 = scmp.ne.s32.totalorder %s72, %s88
    %p90 = scmp.eq.s32.totalorder %s15, 0
    %p91 = por %p89, %p90
    %s93 = sadd.s32 %s92, 1
    %p96 = scmp.eq.s32.totalorder %s9, 3
    %p97 = scmp.ne.s32.totalorder %s92, %s94
    %p98 = scmp.eq.s32.totalorder %s9, 0
    %p99 = por %p97, %p98
    %p100 = scmp.ne.s32.totalorder %s92, %s94
    %p101 = scmp.eq.s32.totalorder %s14, 3
    %p102 = por %p100, %p101
    %p103 = scmp.ne.s32.totalorder %s94, %s95
    %p104 = scmp.eq.s32.totalorder %s14, 0
    %p105 = por %p103, %p104
    %p106 = scmp.ne.s32.totalorder %s94, %s95
    %p107 = scmp.eq.s32.totalorder %s15, 3
    %p108 = por %p106, %p107
    %p110 = scmp.ne.s32.totalorder %s95, %s109
    %p111 = scmp.eq.s32.totalorder %s15, 0
    %p112 = por %p110, %p111
    %s113 = ssub.s32 %s17, %s31
    %s114 = ssub.s32 %s16, %s35
    %s115 = sor.u32 %s113, %s114
    %p116 = scmp.eq.s32.totalorder %s115, 0
    %s118 = sadd.s32 %s117, 1
    %s119 = scalar_select %p116, %s117, %s118
    %p122 = pneg %p116
    %p123 = scmp.eq.s32.totalorder %s9, 3
    %p124 = por %p122, %p123
    %p125 = scmp.ne.s32.totalorder %s117, %s120
    %p126 = scmp.eq.s32.totalorder %s9, 0
    %p127 = por %p125, %p126
    %p128 = scmp.ne.s32.totalorder %s117, %s120
    %p129 = scmp.eq.s32.totalorder %s14, 3
    %p130 = por %p128, %p129
    %p131 = scmp.ne.s32.totalorder %s120, %s121
    %p132 = scmp.eq.s32.totalorder %s14, 0
    %p133 = por %p131, %p132
    %p134 = scmp.ne.s32.totalorder %s120, %s121
    %p135 = scmp.eq.s32.totalorder %s15, 3
    %p136 = por %p134, %p135
    %p138 = scmp.ne.s32.totalorder %s121, %s137
    %p139 = scmp.eq.s32.totalorder %s15, 0
    %p140 = por %p138, %p139
    %p141 = scmp.le.s32.totalorder 1, %s9
    %p142 = scmp.lt.s32.totalorder %s9, 5
    %p143 = pnand %p141, %p142
    %p144 = pneg %p143
    // Predicated region
    $region9: #{discriminator_forward.11} parent=5 // pred_check
      _
    $region10: #{discriminator_forward.11} parent=5 // pred_check_branch
      %146 = sbr.rel (%p143) target = $region12
    $region11: #{discriminator_forward.11} parent=5 // pred_region
      %s147 = ssub.s32 %s9, 1
      // Predicated region
      $region13: #{discriminator_forward.11} parent=11 // pred_check
        %p148 = pneg %p105
      $region14: #{discriminator_forward.11} parent=11 // pred_check_branch
        %150 = sbr.rel (%p148) target = $region16
      $region15: #{discriminator_forward.11} parent=11 // pred_region
        _
      $region16: #{discriminator_forward.11} parent=11 // pred_fallthru
        _
    $region12: #{discriminator_forward.11} parent=5 // pred_fallthru
      _
    %p151 = scmp.lt.s32.totalorder %s9, 4
    // Predicated region
    $region17: #{discriminator_forward.11} parent=5 // pred_check
      %p152 = pneg %p151
    $region18: #{discriminator_forward.11} parent=5 // pred_check_branch
      %154 = sbr.rel (%p152) target = $region20
    $region19: #{discriminator_forward.11} parent=5 // pred_region
      // Predicated region
      $region21: #{discriminator_forward.11} parent=19 // pred_check
        %p155 = pneg %p52
      $region22: #{discriminator_forward.11} parent=19 // pred_check_branch
        %157 = sbr.rel (%p155) target = $region24
      $region23: #{discriminator_forward.11} parent=19 // pred_region
        %s158 = sadd.s32 %s17, %s18
        %p159 = scmp.lt.s32.totalorder %s158, 3
        %s160 = scalar_select %p159, %s158, 3
        %p161 = scmp.lt.s32.totalorder %s16, 0
        %s162 = scalar_select %p161, %s16, 0
        %s163 = smul.addr %s162, 4
        %s164 = smul.addr %s160, 4
        %s165 = sadd.s32 %s163, %s164
        %s166 = scalar_lea.vmem %s0, %s165
        %s167 = sadd.s32 %s17, %s18
      $region24: #{discriminator_forward.11} parent=19 // pred_fallthru
        _
      // Predicated region
      $region25: #{discriminator_forward.11} parent=19 // pred_check
        %p168 = pneg %p78
      $region26: #{discriminator_forward.11} parent=19 // pred_check_branch
        %170 = sbr.rel (%p168) target = $region28
      $region27: #{discriminator_forward.11} parent=19 // pred_region
        %p171 = scmp.lt.s32.totalorder %s18, 3
        %s172 = scalar_select %p171, %s18, 3
        %s173 = smul.addr %s172, 64
        %s174 = smul.addr %s173, 4
        %s175 = scalar_lea.vmem %s1, %s174
      $region28: #{discriminator_forward.11} parent=19 // pred_fallthru
        _
    $region20: #{discriminator_forward.11} parent=5 // pred_fallthru
      _
    %p176 = scmp.le.s32.totalorder 1, %s9
    %p177 = scmp.lt.s32.totalorder %s9, 5
    %p178 = pnand %p176, %p177
    %p179 = pneg %p178
    // Predicated region
    $region29: #{discriminator_forward.11} parent=5 // pred_check
      _
    $region30: #{discriminator_forward.11} parent=5 // pred_check_branch
      %181 = sbr.rel (%p178) target = $region32
    $region31: #{discriminator_forward.11} parent=5 // pred_region
      %s182 = ssub.s32 %s9, 1
      %s183 = sadd.s32 %s20, %s21
      %p184 = scmp.lt.s32.totalorder %s183, 3
      %s185 = scalar_select %p184, %s183, 3
      %p186 = scmp.lt.s32.totalorder %s19, 0
      %s187 = scalar_select %p186, %s19, 0
      %s188 = smul.addr %s187, 4
      %s189 = smul.addr %s185, 4
      %s190 = sadd.s32 %s188, %s189
      %s191 = scalar_lea.vmem %s0, %s190
      %p192 = pneg %p58
      %p193 = pneg %p55
      %p194 = scmp.lt.s32.totalorder %s21, 3
      %s195 = scalar_select %p194, %s21, 3
      %s196 = smul.addr %s195, 64
      %s197 = smul.addr %s196, 4
      %s198 = scalar_lea.vmem %s1, %s197
      %p199 = pneg %p84
      %p200 = pneg %p81
      %p201 = pneg %p105
      %p202 = pneg %p102
      %p203 = pneg %p133
      %p204 = pneg %p130
      %p205 = scmp.lt.s32.totalorder %s20, 0
      %s206 = scalar_select %p205, %s20, 0
      %p207 = scmp.lt.s32.totalorder %s19, 0
      %s208 = scalar_select %p207, %s19, 0
      %s209 = sadd.s32 %s208, %s206
      %s210 = smul.addr %s209, 2
      %s211 = scalar_lea.vmem %s3, %s210
      %s212 = sadd.s32 %s20, %s21
      %p213 = scmp.lt.s32.totalorder %s212, 3
      %s214 = scalar_select %p213, %s212, 3
      %p215 = scmp.lt.s32.totalorder %s19, 0
      %s216 = scalar_select %p215, %s19, 0
      %s217 = smul.addr %s216, 4
      %s218 = smul.addr %s214, 4
      %s219 = sadd.s32 %s217, %s218
      %s220 = scalar_lea.vmem %s0, %s219
      %s221 = sadd.s32 %s20, %s21
      %p222 = scmp.lt.s32.totalorder %s21, 3
      %s223 = scalar_select %p222, %s21, 3
      %s224 = smul.addr %s223, 64
      %s225 = smul.addr %s224, 4
      %s226 = scalar_lea.vmem %s1, %s225
      %p227 = scmp.lt.s32.totalorder %s20, 0
      %s228 = scalar_select %p227, %s20, 0
      %p229 = scmp.lt.s32.totalorder %s19, 0
      %s230 = scalar_select %p229, %s19, 0
      %s231 = sadd.s32 %s230, %s228
      %s232 = smul.addr %s231, 2
      %s233 = scalar_lea.vmem %s3, %s232
      %p235 = scmp.eq.s32.totalorder %s21, 0
      // Predicated region
      $region33: #{discriminator_forward.11} parent=31 // pred_check
        %p236 = pneg %p235
      $region34: #{discriminator_forward.11} parent=31 // pred_check_branch
        %238 = sbr.rel (%p236) target = $region36
      $region35: #{discriminator_forward.11} parent=31 // pred_region
        %239 = vst [vmem:[#allocation2] sm:$0x3] 0.0
      $region36: #{discriminator_forward.11} parent=31 // pred_fallthru
        _
      %v240 = vld [vmem:[#allocation2] sm:$0x3]
      %v241 = vld [vmem:[%s220] sm:$0xf]
      %v242 = vld [vmem:[%s226] sm:$0xf]
      %v243 = vld [vmem:[%s226 + $0x4] sm:$0xf]
      %v244 = vld [vmem:[%s226 + $0x8] sm:$0xf]
      %v245 = vld [vmem:[%s226 + $0xc] sm:$0xf]
      %v246 = vld [vmem:[%s226 + $0x10] sm:$0xf]
      %v247 = vld [vmem:[%s226 + $0x14] sm:$0xf]
      %v248 = vld [vmem:[%s226 + $0x18] sm:$0xf]
      %v249 = vld [vmem:[%s226 + $0x1c] sm:$0xf]
      %v250 = vld [vmem:[%s226 + $0x20] sm:$0xf]
      %v251 = vld [vmem:[%s226 + $0x24] sm:$0xf]
      %v252 = vld [vmem:[%s226 + $0x28] sm:$0xf]
      %v253 = vld [vmem:[%s226 + $0x2c] sm:$0xf]
      %v254 = vld [vmem:[%s226 + $0x30] sm:$0xf]
      %v255 = vld [vmem:[%s226 + $0x34] sm:$0xf]
      %v256 = vld [vmem:[%s226 + $0x38] sm:$0xf]
      %v257 = vld [vmem:[%s226 + $0x3c] sm:$0xf]
      %v258 = vld [vmem:[%s226 + $0x40] sm:$0xf]
      %v259 = vld [vmem:[%s226 + $0x44] sm:$0xf]
      %v260 = vld [vmem:[%s226 + $0x48] sm:$0xf]
      %v261 = vld [vmem:[%s226 + $0x4c] sm:$0xf]
      %v262 = vld [vmem:[%s226 + $0x50] sm:$0xf]
      %v263 = vld [vmem:[%s226 + $0x54] sm:$0xf]
      %v264 = vld [vmem:[%s226 + $0x58] sm:$0xf]
      %v265 = vld [vmem:[%s226 + $0x5c] sm:$0xf]
      %v266 = vld [vmem:[%s226 + $0x60] sm:$0xf]
      %v267 = vld [vmem:[%s226 + $0x64] sm:$0xf]
      %v268 = vld [vmem:[%s226 + $0x68] sm:$0xf]
      %v269 = vld [vmem:[%s226 + $0x6c] sm:$0xf]
      %v270 = vld [vmem:[%s226 + $0x70] sm:$0xf]
      %v271 = vld [vmem:[%s226 + $0x74] sm:$0xf]
      %v272 = vld [vmem:[%s226 + $0x78] sm:$0xf]
      %v273 = vld [vmem:[%s226 + $0x7c] sm:$0xf]
      %v274 = vld [vmem:[%s226 + $0x80] sm:$0xf]
      %v275 = vld [vmem:[%s226 + $0x84] sm:$0xf]
      %v276 = vld [vmem:[%s226 + $0x88] sm:$0xf]
      %v277 = vld [vmem:[%s226 + $0x8c] sm:$0xf]
      %v278 = vld [vmem:[%s226 + $0x90] sm:$0xf]
      %v279 = vld [vmem:[%s226 + $0x94] sm:$0xf]
      %v280 = vld [vmem:[%s226 + $0x98] sm:$0xf]
      %v281 = vld [vmem:[%s226 + $0x9c] sm:$0xf]
      %v282 = vld [vmem:[%s226 + $0xa0] sm:$0xf]
      %v283 = vld [vmem:[%s226 + $0xa4] sm:$0xf]
      %v284 = vld [vmem:[%s226 + $0xa8] sm:$0xf]
      %v285 = vld [vmem:[%s226 + $0xac] sm:$0xf]
      %v286 = vld [vmem:[%s226 + $0xb0] sm:$0xf]
      %v287 = vld [vmem:[%s226 + $0xb4] sm:$0xf]
      %v288 = vld [vmem:[%s226 + $0xb8] sm:$0xf]
      %v289 = vld [vmem:[%s226 + $0xbc] sm:$0xf]
      %v290 = vld [vmem:[%s226 + $0xc0] sm:$0xf]
      %v291 = vld [vmem:[%s226 + $0xc4] sm:$0xf]
      %v292 = vld [vmem:[%s226 + $0xc8] sm:$0xf]
      %v293 = vld [vmem:[%s226 + $0xcc] sm:$0xf]
      %v294 = vld [vmem:[%s226 + $0xd0] sm:$0xf]
      %v295 = vld [vmem:[%s226 + $0xd4] sm:$0xf]
      %v296 = vld [vmem:[%s226 + $0xd8] sm:$0xf]
      %v297 = vld [vmem:[%s226 + $0xdc] sm:$0xf]
      %v298 = vld [vmem:[%s226 + $0xe0] sm:$0xf]
      %v299 = vld [vmem:[%s226 + $0xe4] sm:$0xf]
      %v300 = vld [vmem:[%s226 + $0xe8] sm:$0xf]
      %v301 = vld [vmem:[%s226 + $0xec] sm:$0xf]
      %v302 = vld [vmem:[%s226 + $0xf0] sm:$0xf]
      %v303 = vld [vmem:[%s226 + $0xf4] sm:$0xf]
      %v304 = vld [vmem:[%s226 + $0xf8] sm:$0xf]
      %v305 = vld [vmem:[%s226 + $0xfc] sm:$0xf]
      %v308 = vunpack.c.l.s4 1966171168
      %v309 = vunpack.c.0.s8 %v308
      %v310 = vlaneseq
      %v311 = vshrl.u32 %v310, 7
      %v312 = vsub.s32 %v309, %v311
      %v313 = vrot.slane %v241, %v312
      %v314 = vcombine.high %v313, %v313
      %v316 = vunpack.c.l.s4 1966171168
      %v317 = vunpack.c.0.s8 %v316
      %v318 = vlaneseq
      %v319 = vshrl.u32 %v318, 7
      %v320 = vsub.s32 %v317, %v319
      %v321 = vrot.slane %v313, %v320
      %v323 = vunpack.c.l.s4 1966171168
      %v324 = vunpack.c.0.s8 %v323
      %v325 = vlaneseq
      %v326 = vshrl.u32 %v325, 7
      %v327 = vsub.s32 %v324, %v326
      %v328 = vrot.slane %v314, %v327
      %v329 = vcombine.high %v321, %v321
      %v330 = vcombine.high %v328, %v328
      %v399 = vunpack.c.l.b16 %v242
      %v400 = vunpack.c.l.b16 %v243
      %v401 = vunpack.c.l.b16 %v244
      %v402 = vunpack.c.l.b16 %v245
      %v403 = vunpack.c.l.b16 %v246
      %v404 = vunpack.c.l.b16 %v247
      %v405 = vunpack.c.l.b16 %v248
      %v406 = vunpack.c.l.b16 %v249
      %v407 = vunpack.c.l.b16 %v250
      %v408 = vunpack.c.l.b16 %v251
      %v409 = vunpack.c.l.b16 %v252
      %v410 = vunpack.c.l.b16 %v253
      %v411 = vunpack.c.l.b16 %v254
      %v412 = vunpack.c.l.b16 %v255
      %v413 = vunpack.c.l.b16 %v256
      %v414 = vunpack.c.l.b16 %v257
      %v415 = vunpack.c.l.b16 %v258
      %v416 = vunpack.c.l.b16 %v259
      %v417 = vunpack.c.l.b16 %v260
      %v418 = vunpack.c.l.b16 %v261
      %v419 = vunpack.c.l.b16 %v262
      %v420 = vunpack.c.l.b16 %v263
      %v421 = vunpack.c.l.b16 %v264
      %v422 = vunpack.c.l.b16 %v265
      %v423 = vunpack.c.l.b16 %v266
      %v424 = vunpack.c.l.b16 %v267
      %v425 = vunpack.c.l.b16 %v268
      %v426 = vunpack.c.l.b16 %v269
      %v427 = vunpack.c.l.b16 %v270
      %v428 = vunpack.c.l.b16 %v271
      %v429 = vunpack.c.l.b16 %v272
      %v430 = vunpack.c.l.b16 %v273
      %v431 = vunpack.c.l.b16 %v274
      %v432 = vunpack.c.l.b16 %v275
      %v433 = vunpack.c.l.b16 %v276
      %v434 = vunpack.c.l.b16 %v277
      %v435 = vunpack.c.l.b16 %v278
      %v436 = vunpack.c.l.b16 %v279
      %v437 = vunpack.c.l.b16 %v280
      %v438 = vunpack.c.l.b16 %v281
      %v439 = vunpack.c.l.b16 %v282
      %v440 = vunpack.c.l.b16 %v283
      %v441 = vunpack.c.l.b16 %v284
      %v442 = vunpack.c.l.b16 %v285
      %v443 = vunpack.c.l.b16 %v286
      %v444 = vunpack.c.l.b16 %v287
      %v445 = vunpack.c.l.b16 %v288
      %v446 = vunpack.c.l.b16 %v289
      %v447 = vunpack.c.l.b16 %v290
      %v448 = vunpack.c.l.b16 %v291
      %v449 = vunpack.c.l.b16 %v292
      %v450 = vunpack.c.l.b16 %v293
      %v451 = vunpack.c.l.b16 %v294
      %v452 = vunpack.c.l.b16 %v295
      %v453 = vunpack.c.l.b16 %v296
      %v454 = vunpack.c.l.b16 %v297
      %v455 = vunpack.c.l.b16 %v298
      %v456 = vunpack.c.l.b16 %v299
      %v457 = vunpack.c.l.b16 %v300
      %v458 = vunpack.c.l.b16 %v301
      %v459 = vunpack.c.l.b16 %v302
      %v460 = vunpack.c.l.b16 %v303
      %v461 = vunpack.c.l.b16 %v304
      %v462 = vunpack.c.l.b16 %v305
      %v463 = vpack.c.b16 %v400, %v399
      %v464 = vpack.c.b16 %v402, %v401
      %v465 = vpack.c.b16 %v404, %v403
      %v466 = vpack.c.b16 %v406, %v405
      %v467 = vpack.c.b16 %v408, %v407
      %v468 = vpack.c.b16 %v410, %v409
      %v469 = vpack.c.b16 %v412, %v411
      %v470 = vpack.c.b16 %v414, %v413
      %v471 = vpack.c.b16 %v416, %v415
      %v472 = vpack.c.b16 %v418, %v417
      %v473 = vpack.c.b16 %v420, %v419
      %v474 = vpack.c.b16 %v422, %v421
      %v475 = vpack.c.b16 %v424, %v423
      %v476 = vpack.c.b16 %v426, %v425
      %v477 = vpack.c.b16 %v428, %v427
      %v478 = vpack.c.b16 %v430, %v429
      %v479 = vpack.c.b16 %v432, %v431
      %v480 = vpack.c.b16 %v434, %v433
      %v481 = vpack.c.b16 %v436, %v435
      %v482 = vpack.c.b16 %v438, %v437
      %v483 = vpack.c.b16 %v440, %v439
      %v484 = vpack.c.b16 %v442, %v441
      %v485 = vpack.c.b16 %v444, %v443
      %v486 = vpack.c.b16 %v446, %v445
      %v487 = vpack.c.b16 %v448, %v447
      %v488 = vpack.c.b16 %v450, %v449
      %v489 = vpack.c.b16 %v452, %v451
      %v490 = vpack.c.b16 %v454, %v453
      %v491 = vpack.c.b16 %v456, %v455
      %v492 = vpack.c.b16 %v458, %v457
      %v493 = vpack.c.b16 %v460, %v459
      %v494 = vpack.c.b16 %v462, %v461
      %527 = vmatprep.subr.bf16.mxu0 0
      %528 = vmatpush1.bf16.msra.mxu0 %v470
      %529 = vmatprep.subr.bf16.mxu0 0
      %530 = vmatpush1.bf16.msra.mxu0 %v469
      %531 = vmatprep.subr.bf16.mxu0 0
      %532 = vmatpush1.bf16.msra.mxu0 %v468
      %533 = vmatprep.subr.bf16.mxu0 0
      %534 = vmatpush1.bf16.msra.mxu0 %v467
      %535 = vmatprep.subr.bf16.mxu0 0
      %536 = vmatpush1.bf16.msra.mxu0 %v466
      %537 = vmatprep.subr.bf16.mxu0 0
      %538 = vmatpush1.bf16.msra.mxu0 %v465
      %539 = vmatprep.subr.bf16.mxu0 0
      %540 = vmatpush1.bf16.msra.mxu0 %v464
      %541 = vmatprep.subr.bf16.mxu0 0
      %542 = vmatpush1.bf16.msra.mxu0 %v463
      %543 = vmatprep.subr.bf16.mxu0 0
      %544 = vmatpush2.bf16.msra.mxu0 %v478
      %545 = vmatprep.subr.bf16.mxu0 0
      %546 = vmatpush2.bf16.msra.mxu0 %v477
      %547 = vmatprep.subr.bf16.mxu0 0
      %548 = vmatpush2.bf16.msra.mxu0 %v476
      %549 = vmatprep.subr.bf16.mxu0 0
      %550 = vmatpush2.bf16.msra.mxu0 %v475
      %551 = vmatprep.subr.bf16.mxu0 0
      %552 = vmatpush2.bf16.msra.mxu0 %v474
      %553 = vmatprep.subr.bf16.mxu0 0
      %554 = vmatpush2.bf16.msra.mxu0 %v473
      %555 = vmatprep.subr.bf16.mxu0 0
      %556 = vmatpush2.bf16.msra.mxu0 %v472
      %557 = vmatprep.subr.bf16.mxu0 0
      %558 = vmatpush2.bf16.msra.mxu0 %v471
      %559 = vmatprep.mubr.bf16.mxu0 %v328
      %560 = vmatmul.mubr.bf16.gmra.mxu0 %v321
      %v561 = vpop.f32.mrf.mxu0
      %v562 = vadd.f32 0.0, %v561
      %v563 = vpop.f32.mrf.mxu0
      %v564 = vpop.f32.mrf.mxu0
      %v565 = vpop.f32.mrf.mxu0
      %566 = vdwg.mxu0
      %567 = vmatprep.subr.bf16.mxu0 0
      %568 = vmatpush1.bf16.msra.mxu0 %v486
      %569 = vmatprep.subr.bf16.mxu0 0
      %570 = vmatpush1.bf16.msra.mxu0 %v485
      %571 = vmatprep.subr.bf16.mxu0 0
      %572 = vmatpush1.bf16.msra.mxu0 %v484
      %573 = vmatprep.subr.bf16.mxu0 0
      %574 = vmatpush1.bf16.msra.mxu0 %v483
      %575 = vmatprep.subr.bf16.mxu0 0
      %576 = vmatpush1.bf16.msra.mxu0 %v482
      %577 = vmatprep.subr.bf16.mxu0 0
      %578 = vmatpush1.bf16.msra.mxu0 %v481
      %579 = vmatprep.subr.bf16.mxu0 0
      %580 = vmatpush1.bf16.msra.mxu0 %v480
      %581 = vmatprep.subr.bf16.mxu0 0
      %582 = vmatpush1.bf16.msra.mxu0 %v479
      %583 = vmatprep.subr.bf16.mxu0 0
      %584 = vmatpush2.bf16.msra.mxu0 %v494
      %585 = vmatprep.subr.bf16.mxu0 0
      %586 = vmatpush2.bf16.msra.mxu0 %v493
      %587 = vmatprep.subr.bf16.mxu0 0
      %588 = vmatpush2.bf16.msra.mxu0 %v492
      %589 = vmatprep.subr.bf16.mxu0 0
      %590 = vmatpush2.bf16.msra.mxu0 %v491
      %591 = vmatprep.subr.bf16.mxu0 0
      %592 = vmatpush2.bf16.msra.mxu0 %v490
      %593 = vmatprep.subr.bf16.mxu0 0
      %594 = vmatpush2.bf16.msra.mxu0 %v489
      %595 = vmatprep.subr.bf16.mxu0 0
      %596 = vmatpush2.bf16.msra.mxu0 %v488
      %597 = vmatprep.subr.bf16.mxu0 0
      %598 = vmatpush2.bf16.msra.mxu0 %v487
      %599 = vmatprep.mubr.bf16.mxu0 %v330
      %600 = vmatmul.mubr.bf16.gmra.mxu0 %v329
      %v601 = vpop.f32.mrf.mxu0
      %v602 = vadd.f32 %v562, %v601
      %v603 = vpop.f32.mrf.mxu0
      %v604 = vpop.f32.mrf.mxu0
      %v605 = vpop.f32.mrf.mxu0
      %606 = vdwg.mxu0
      %v607 = vadd.f32 %v240, %v602
      %608 = vst [vmem:[#allocation2] sm:$0x3] %v607
      %p609 = scmp.eq.s32.totalorder %s21, 3
      // Predicated region
      $region37: #{discriminator_forward.11} parent=31 // pred_check
        %p610 = pneg %p609
      $region38: #{discriminator_forward.11} parent=31 // pred_check_branch
        %612 = sbr.rel (%p610) target = $region40
      $region39: #{discriminator_forward.11} parent=31 // pred_region
        %v613 = vld [vmem:[#allocation2] sm:$0x3]
        %v614 = vld [vmem:[%s2] sm:$0x1]
        %v616 = vlaneseq
        %v617 = vshrl.u32 %v616, 7
        %v618 = vsub.s32 0, %v617
        %v619 = vrot.slane %v614, %v618
        %v621 = vadd.f32 %v613, %v619
        %v622 = vsub.f32 0.0, %v621
        %v623 = vmul.f32 %v622, 1.442695
        %v624 = vpow.pop %v623
        %v625 = vadd.f32 %v624, 1.0
        %v626 = vrcp.pop %v625
        %v627 = vmul.f32 1.0, %v626
        %628 = vst [vmem:[%s233] sm:$0x3] %v627
      $region40: #{discriminator_forward.11} parent=31 // pred_fallthru
        _
      %p629 = scmp.lt.s32.totalorder %s20, 0
      %s630 = scalar_select %p629, %s20, 0
      %p631 = scmp.lt.s32.totalorder %s19, 0
      %s632 = scalar_select %p631, %s19, 0
      %s633 = sadd.s32 %s632, %s630
      %s634 = smul.addr %s633, 2
      %s635 = scalar_lea.vmem %s3, %s634
      // Predicated region
      $region41: #{discriminator_forward.11} parent=31 // pred_check
        %p636 = pneg %p130
      $region42: #{discriminator_forward.11} parent=31 // pred_check_branch
        %638 = sbr.rel (%p636) target = $region44
      $region43: #{discriminator_forward.11} parent=31 // pred_region
        _
      $region44: #{discriminator_forward.11} parent=31 // pred_fallthru
        _
      // Predicated region
      $region45: #{discriminator_forward.11} parent=31 // pred_check
        %p639 = pneg %p130
      $region46: #{discriminator_forward.11} parent=31 // pred_check_branch
        %641 = sbr.rel (%p639) target = $region48
      $region47: #{discriminator_forward.11} parent=31 // pred_region
        %p642 = scmp.lt.s32.totalorder %s20, 0
        %s643 = scalar_select %p642, %s20, 0
        %p644 = scmp.lt.s32.totalorder %s19, 0
        %s645 = scalar_select %p644, %s19, 0
        %s646 = sadd.s32 %s645, %s643
        %s647 = smul.addr %s646, 2
        %s648 = scalar_lea.vmem %s3, %s647
      $region48: #{discriminator_forward.11} parent=31 // pred_fallthru
        _
    $region32: #{discriminator_forward.11} parent=5 // pred_fallthru
      _
    %p649 = scmp.le.s32.totalorder 2, %s9
    // Predicated region
    $region49: #{discriminator_forward.11} parent=5 // pred_check
      %p650 = pneg %p649
    $region50: #{discriminator_forward.11} parent=5 // pred_check_branch
      %652 = sbr.rel (%p650) target = $region52
    $region51: #{discriminator_forward.11} parent=5 // pred_region
      %s653 = ssub.s32 %s9, 2
    $region52: #{discriminator_forward.11} parent=5 // pred_fallthru
      _
  $region6: #{discriminator_forward.11} parent=0 // loop_footer
    %s13 = sadd.s32 1, %s9
  $region7: #{discriminator_forward.11} parent=0 // loop_footer_branch
    %8 = sbr.rel target = $region3
  $region8: #{discriminator_forward.11} parent=0 // loop_exit
    _

</llo_original>
